<compile_context>
chip_gen: v7x
topology: tpu7x:2x2x1
jax: 0.10.0
libtpu: 0.0.40
codegen_flags: <defaults>
</compile_context>

<pallas_src>
import functools

import jax
import jax.numpy as jnp
from jax import lax
from jax.experimental import pallas as pl
from jax.experimental.pallas import tpu as pltpu


def _attention_essential_kernel(w_ref, u_ref, ids_ref, k_ref,
                                out_ids_ref, out_mask_ref, *, mask_id):
    w = w_ref[...]              # (T, S) f32 sampling weights
    u = u_ref[...]              # (T, S) f32 uniforms in (0, 1)
    ids = ids_ref[...]          # (T, S) i32 token ids
    k_raw = k_ref[...]          # (T, 1) i32 requested num_to_mask per row

    nonzero = w > 0.0

    # Efraimidis-Spirakis keys: log(u) / w  (larger key = earlier in the
    # weighted permutation).  Single transcendental per element.
    logu = jnp.log(jnp.clip(u, 1e-7, 1.0 - 1e-7))
    keys = logu / jnp.maximum(w, jnp.float32(1e-30))

    # Order-preserving int32 image of the float keys (IEEE-754 trick):
    #   f >= 0 : bits unchanged;  f < 0 : flip the non-sign bits.
    bits = lax.bitcast_convert_type(keys, jnp.int32)
    sortable = jnp.where(bits >= 0, bits, bits ^ jnp.int32(0x7FFFFFFF))
    int_min = jnp.int32(-2147483647 - 1)
    sortable = jnp.where(nonzero, sortable, int_min)      # sentinel for w == 0

    nvalid = jnp.sum(nonzero.astype(jnp.int32), axis=-1, keepdims=True)  # (T,1)
    k = jnp.clip(k_raw, 0, nvalid)                                       # (T,1)

    def count_ge(t):  # t: (T, 1) int32 -> per-row count of keys >= t
        return jnp.sum((sortable >= t).astype(jnp.int32), axis=-1, keepdims=True)

    # Bit-wise maximum-feasible-threshold construction (exact k-th largest):
    # threshold = max{ t : count(sortable >= t) >= k }.
    zero = jnp.zeros_like(k)
    prefix = jnp.where(count_ge(zero) >= k, zero, jnp.full_like(k, int_min))
    for b in range(30, -1, -1):                        # static unroll, 31 steps
        cand = prefix | jnp.int32(1 << b)
        prefix = jnp.where(count_ge(cand) >= k, cand, prefix)

    # "rank < k" (strict-greater ranking, ties included) == "key >= k-th largest"
    masked = (sortable >= prefix) & nonzero & (k > 0)

    out_ids_ref[...] = jnp.where(masked, jnp.int32(mask_id), ids)
    out_mask_ref[...] = masked.astype(jnp.int8)


def attention_essential(my_attention_mask, attention_mask, input_ids, *,
                        mu_p, mask_id, key):
    """JAX/Pallas equivalent of AttentionEssential.forward."""
    B, J, S2 = my_attention_mask.shape
    S = S2 // 2
    assert attention_mask.shape == (B, J, S)
    assert input_ids.shape == (B, J, S)
    R = B * J
    sigma = min(0.05, float(mu_p) / 4.0)

    ku, kz = jax.random.split(key)

    # ---- per-row num_to_mask = int(sum(tokenizer_mask) * N(mu_p, sigma)) ----
    tok_sum = jnp.sum(attention_mask.reshape(R, S).astype(jnp.float32), axis=-1)
    frac = jnp.float32(mu_p) + jnp.float32(sigma) * jax.random.normal(
        kz, (R,), dtype=jnp.float32)
    num_to_mask = (tok_sum * frac).astype(jnp.int32)     # trunc toward 0 = int()

    # ---- pad to lane/sublane-friendly tiles ---------------------------------
    S_pad = max(128, ((S + 127) // 128) * 128)
    TILE_R = min(128, ((R + 31) // 32) * 32)             # multiple of 32 (int8 tile)
    R_pad = ((R + TILE_R - 1) // TILE_R) * TILE_R

    w = my_attention_mask[:, :, :S].astype(jnp.float32).reshape(R, S)
    ids = input_ids.astype(jnp.int32).reshape(R, S)

    def pad2(x):
        return jnp.pad(x, ((0, R_pad - R), (0, S_pad - S)))

    w_p = pad2(w)                                        # padded rows/lanes: w=0
    ids_p = pad2(ids)
    k_p = jnp.pad(num_to_mask, (0, R_pad - R)).reshape(R_pad, 1)
    u_p = jax.random.uniform(ku, (R_pad, S_pad), dtype=jnp.float32,
                             minval=1e-7, maxval=1.0)

    row_spec = pl.BlockSpec((TILE_R, S_pad), lambda i: (i, 0))
    k_spec = pl.BlockSpec((TILE_R, 1), lambda i: (i, 0))

    out_ids_p, out_mask_p = pl.pallas_call(
        functools.partial(_attention_essential_kernel, mask_id=int(mask_id)),
        out_shape=(
            jax.ShapeDtypeStruct((R_pad, S_pad), jnp.int32),
            jax.ShapeDtypeStruct((R_pad, S_pad), jnp.int8),
        ),
        grid=(R_pad // TILE_R,),
        in_specs=[row_spec, row_spec, row_spec, k_spec],
        out_specs=(row_spec, row_spec),
        compiler_params=pltpu.CompilerParams(
            dimension_semantics=("parallel",)),
    )(w_p, u_p, ids_p, k_p)

    out_ids = out_ids_p[:R, :S].reshape(B, J, S)
    mask = out_mask_p[:R, :S].astype(jnp.int32).reshape(B, J, S)

    return {
        'my_attention_mask': mask,
        'attention_mask': attention_mask,
        'input_ids': out_ids,
        'discriminator_labels': -mask,                   # fused for free in XLA
    }


if __name__ == "__main__":
    B, J, S = 2, 4, 16
    mu_p, mask_id = 0.15, 103

    key = jax.random.PRNGKey(0)
    k1, k2, k3, k4, k5 = jax.random.split(key, 5)

    # synthetic deterministic inputs consistent with the module's forward
    weight_vals = jax.random.uniform(k1, (B, J, S), dtype=jnp.float32)
    weight_on = (jax.random.uniform(k2, (B, J, S)) > 0.3).astype(jnp.float32)
    shared_tokens = jax.random.randint(k3, (B, J, S), 0, 2).astype(jnp.float32)
    my_attention_mask = jnp.concatenate(
        [weight_vals * weight_on, shared_tokens], axis=-1)   # (B, J, 2*S)
    attention_mask = jnp.ones((B, J, S), dtype=jnp.int32)    # (B, J, S)
    input_ids = jax.random.randint(k4, (B, J, S), 5, 30000).astype(jnp.int32)

    out = attention_essential(my_attention_mask, attention_mask, input_ids,
                              mu_p=mu_p, mask_id=mask_id, key=k5)
    jax.block_until_ready(out)

    # light sanity checks
    assert out['input_ids'].shape == (B, J, S)
    assert out['my_attention_mask'].shape == (B, J, S)
    assert bool(jnp.all(out['discriminator_labels'] == -out['my_attention_mask']))
    assert bool(jnp.all(
        jnp.where(out['my_attention_mask'] == 1,
                  out['input_ids'] == mask_id,
                  out['input_ids'] == input_ids)))
    # masked positions must have nonzero sampling weight
    w_half = my_attention_mask[:, :, :S]
    assert bool(jnp.all(jnp.where(out['my_attention_mask'] == 1, w_half > 0, True)))
    print("KERNEL_OK")
</pallas_src>

<mosaic_0001>
module attributes {stable_mosaic.version = 11 : i64} {
  func.func @_attention_essential_kernel(%arg0: i32, %arg1: memref<32x128xf32, #tpu.memory_space<vmem>>, %arg2: memref<32x128xf32, #tpu.memory_space<vmem>>, %arg3: memref<32x128xi32, #tpu.memory_space<vmem>>, %arg4: memref<32x1xi32, #tpu.memory_space<vmem>>, %arg5: memref<32x128xi32, #tpu.memory_space<vmem>>, %arg6: memref<32x128xi8, #tpu.memory_space<vmem>>) attributes {dimension_semantics = [#tpu.dimension_semantics<parallel>], iteration_bounds = array<i64: 1>, scalar_prefetch = 0 : i64, scratch_operands = 0 : i64, tpu.core_type = #tpu.core_type<tc>, window_params = [{transform_indices = @transform_0, window_bounds = array<i64: 32, 128>}, {transform_indices = @transform_1, window_bounds = array<i64: 32, 128>}, {transform_indices = @transform_2, window_bounds = array<i64: 32, 128>}, {transform_indices = @transform_3, window_bounds = array<i64: 32, 1>}, {transform_indices = @transform_4, window_bounds = array<i64: 32, 128>}, {transform_indices = @transform_5, window_bounds = array<i64: 32, 128>}]} {
    %c0 = arith.constant 0 : index
    %c0_0 = arith.constant 0 : index
    %0 = vector.load %arg1[%c0, %c0_0] : memref<32x128xf32, #tpu.memory_space<vmem>>, vector<32x128xf32>
    %c0_1 = arith.constant 0 : index
    %c0_2 = arith.constant 0 : index
    %1 = vector.load %arg2[%c0_1, %c0_2] : memref<32x128xf32, #tpu.memory_space<vmem>>, vector<32x128xf32>
    %c0_3 = arith.constant 0 : index
    %c0_4 = arith.constant 0 : index
    %2 = vector.load %arg3[%c0_3, %c0_4] : memref<32x128xi32, #tpu.memory_space<vmem>>, vector<32x128xi32>
    %c0_5 = arith.constant 0 : index
    %c0_6 = arith.constant 0 : index
    %3 = vector.load %arg4[%c0_5, %c0_6] : memref<32x1xi32, #tpu.memory_space<vmem>>, vector<32x1xi32>
    %cst = arith.constant 0.000000e+00 : f32
    %4 = vector.broadcast %cst : f32 to vector<32x128xf32>
    %5 = arith.cmpf ogt, %0, %4 : vector<32x128xf32>
    %cst_7 = arith.constant 1.000000e-07 : f32
    %cst_8 = arith.constant 0.99999988 : f32
    %6 = vector.broadcast %cst_7 : f32 to vector<32x128xf32>
    %7 = arith.maximumf %6, %1 : vector<32x128xf32>
    %8 = vector.broadcast %cst_8 : f32 to vector<32x128xf32>
    %9 = arith.minimumf %8, %7 : vector<32x128xf32>
    %10 = math.log %9 : vector<32x128xf32>
    %cst_9 = arith.constant 1.000000e-30 : f32
    %11 = vector.broadcast %cst_9 : f32 to vector<32x128xf32>
    %12 = arith.maximumf %0, %11 : vector<32x128xf32>
    %13 = arith.divf %10, %12 : vector<32x128xf32>
    %14 = tpu.bitcast %13 : vector<32x128xf32> -> vector<32x128xi32>
    %c0_i32 = arith.constant 0 : i32
    %15 = vector.broadcast %c0_i32 : i32 to vector<32x128xi32>
    %16 = arith.cmpi sge, %14, %15 : vector<32x128xi32>
    %c2147483647_i32 = arith.constant 2147483647 : i32
    %17 = vector.broadcast %c2147483647_i32 : i32 to vector<32x128xi32>
    %18 = arith.xori %14, %17 : vector<32x128xi32>
    %19 = arith.select %16, %14, %18 : vector<32x128xi1>, vector<32x128xi32>
    %c-2147483648_i32 = arith.constant -2147483648 : i32
    %20 = vector.broadcast %c-2147483648_i32 : i32 to vector<32x128xi32>
    %21 = arith.select %5, %19, %20 : vector<32x128xi1>, vector<32x128xi32>
    %22 = arith.extui %5 : vector<32x128xi1> to vector<32x128xi32>
    %cst_10 = arith.constant dense<0> : vector<32xi32>
    %23 = vector.multi_reduction <add>, %22, %cst_10 [1] : vector<32x128xi32> to vector<32xi32>
    %24 = vector.shape_cast %23 : vector<32xi32> to vector<32x1xi32>
    %c0_i32_11 = arith.constant 0 : i32
    %25 = vector.broadcast %c0_i32_11 : i32 to vector<32x1xi32>
    %26 = arith.maxsi %25, %3 : vector<32x1xi32>
    %27 = arith.minsi %24, %26 : vector<32x1xi32>
    %c0_i32_12 = arith.constant 0 : i32
    %28 = vector.broadcast %c0_i32_12 : i32 to vector<32x1xi32>
    %29 = vector.broadcast %28 : vector<32x1xi32> to vector<32x128xi32>
    %30 = arith.cmpi sge, %21, %29 : vector<32x128xi32>
    %31 = arith.extui %30 : vector<32x128xi1> to vector<32x128xi32>
    %cst_13 = arith.constant dense<0> : vector<32xi32>
    %32 = vector.multi_reduction <add>, %31, %cst_13 [1] : vector<32x128xi32> to vector<32xi32>
    %33 = vector.shape_cast %32 : vector<32xi32> to vector<32x1xi32>
    %34 = arith.cmpi sge, %33, %27 : vector<32x1xi32>
    %c-2147483648_i32_14 = arith.constant -2147483648 : i32
    %35 = vector.broadcast %c-2147483648_i32_14 : i32 to vector<32x1xi32>
    %36 = arith.select %34, %28, %35 : vector<32x1xi1>, vector<32x1xi32>
    %c1073741824_i32 = arith.constant 1073741824 : i32
    %37 = vector.broadcast %c1073741824_i32 : i32 to vector<32x1xi32>
    %38 = arith.ori %36, %37 : vector<32x1xi32>
    %39 = vector.broadcast %38 : vector<32x1xi32> to vector<32x128xi32>
    %40 = arith.cmpi sge, %21, %39 : vector<32x128xi32>
    %41 = arith.extui %40 : vector<32x128xi1> to vector<32x128xi32>
    %cst_15 = arith.constant dense<0> : vector<32xi32>
    %42 = vector.multi_reduction <add>, %41, %cst_15 [1] : vector<32x128xi32> to vector<32xi32>
    %43 = vector.shape_cast %42 : vector<32xi32> to vector<32x1xi32>
    %44 = arith.cmpi sge, %43, %27 : vector<32x1xi32>
    %45 = arith.select %44, %38, %36 : vector<32x1xi1>, vector<32x1xi32>
    %c536870912_i32 = arith.constant 536870912 : i32
    %46 = vector.broadcast %c536870912_i32 : i32 to vector<32x1xi32>
    %47 = arith.ori %45, %46 : vector<32x1xi32>
    %48 = vector.broadcast %47 : vector<32x1xi32> to vector<32x128xi32>
    %49 = arith.cmpi sge, %21, %48 : vector<32x128xi32>
    %50 = arith.extui %49 : vector<32x128xi1> to vector<32x128xi32>
    %cst_16 = arith.constant dense<0> : vector<32xi32>
    %51 = vector.multi_reduction <add>, %50, %cst_16 [1] : vector<32x128xi32> to vector<32xi32>
    %52 = vector.shape_cast %51 : vector<32xi32> to vector<32x1xi32>
    %53 = arith.cmpi sge, %52, %27 : vector<32x1xi32>
    %54 = arith.select %53, %47, %45 : vector<32x1xi1>, vector<32x1xi32>
    %c268435456_i32 = arith.constant 268435456 : i32
    %55 = vector.broadcast %c268435456_i32 : i32 to vector<32x1xi32>
    %56 = arith.ori %54, %55 : vector<32x1xi32>
    %57 = vector.broadcast %56 : vector<32x1xi32> to vector<32x128xi32>
    %58 = arith.cmpi sge, %21, %57 : vector<32x128xi32>
    %59 = arith.extui %58 : vector<32x128xi1> to vector<32x128xi32>
    %cst_17 = arith.constant dense<0> : vector<32xi32>
    %60 = vector.multi_reduction <add>, %59, %cst_17 [1] : vector<32x128xi32> to vector<32xi32>
    %61 = vector.shape_cast %60 : vector<32xi32> to vector<32x1xi32>
    %62 = arith.cmpi sge, %61, %27 : vector<32x1xi32>
    %63 = arith.select %62, %56, %54 : vector<32x1xi1>, vector<32x1xi32>
    %c134217728_i32 = arith.constant 134217728 : i32
    %64 = vector.broadcast %c134217728_i32 : i32 to vector<32x1xi32>
    %65 = arith.ori %63, %64 : vector<32x1xi32>
    %66 = vector.broadcast %65 : vector<32x1xi32> to vector<32x128xi32>
    %67 = arith.cmpi sge, %21, %66 : vector<32x128xi32>
    %68 = arith.extui %67 : vector<32x128xi1> to vector<32x128xi32>
    %cst_18 = arith.constant dense<0> : vector<32xi32>
    %69 = vector.multi_reduction <add>, %68, %cst_18 [1] : vector<32x128xi32> to vector<32xi32>
    %70 = vector.shape_cast %69 : vector<32xi32> to vector<32x1xi32>
    %71 = arith.cmpi sge, %70, %27 : vector<32x1xi32>
    %72 = arith.select %71, %65, %63 : vector<32x1xi1>, vector<32x1xi32>
    %c67108864_i32 = arith.constant 67108864 : i32
    %73 = vector.broadcast %c67108864_i32 : i32 to vector<32x1xi32>
    %74 = arith.ori %72, %73 : vector<32x1xi32>
    %75 = vector.broadcast %74 : vector<32x1xi32> to vector<32x128xi32>
    %76 = arith.cmpi sge, %21, %75 : vector<32x128xi32>
    %77 = arith.extui %76 : vector<32x128xi1> to vector<32x128xi32>
    %cst_19 = arith.constant dense<0> : vector<32xi32>
    %78 = vector.multi_reduction <add>, %77, %cst_19 [1] : vector<32x128xi32> to vector<32xi32>
    %79 = vector.shape_cast %78 : vector<32xi32> to vector<32x1xi32>
    %80 = arith.cmpi sge, %79, %27 : vector<32x1xi32>
    %81 = arith.select %80, %74, %72 : vector<32x1xi1>, vector<32x1xi32>
    %c33554432_i32 = arith.constant 33554432 : i32
    %82 = vector.broadcast %c33554432_i32 : i32 to vector<32x1xi32>
    %83 = arith.ori %81, %82 : vector<32x1xi32>
    %84 = vector.broadcast %83 : vector<32x1xi32> to vector<32x128xi32>
    %85 = arith.cmpi sge, %21, %84 : vector<32x128xi32>
    %86 = arith.extui %85 : vector<32x128xi1> to vector<32x128xi32>
    %cst_20 = arith.constant dense<0> : vector<32xi32>
    %87 = vector.multi_reduction <add>, %86, %cst_20 [1] : vector<32x128xi32> to vector<32xi32>
    %88 = vector.shape_cast %87 : vector<32xi32> to vector<32x1xi32>
    %89 = arith.cmpi sge, %88, %27 : vector<32x1xi32>
    %90 = arith.select %89, %83, %81 : vector<32x1xi1>, vector<32x1xi32>
    %c16777216_i32 = arith.constant 16777216 : i32
    %91 = vector.broadcast %c16777216_i32 : i32 to vector<32x1xi32>
    %92 = arith.ori %90, %91 : vector<32x1xi32>
    %93 = vector.broadcast %92 : vector<32x1xi32> to vector<32x128xi32>
    %94 = arith.cmpi sge, %21, %93 : vector<32x128xi32>
    %95 = arith.extui %94 : vector<32x128xi1> to vector<32x128xi32>
    %cst_21 = arith.constant dense<0> : vector<32xi32>
    %96 = vector.multi_reduction <add>, %95, %cst_21 [1] : vector<32x128xi32> to vector<32xi32>
    %97 = vector.shape_cast %96 : vector<32xi32> to vector<32x1xi32>
    %98 = arith.cmpi sge, %97, %27 : vector<32x1xi32>
    %99 = arith.select %98, %92, %90 : vector<32x1xi1>, vector<32x1xi32>
    %c8388608_i32 = arith.constant 8388608 : i32
    %100 = vector.broadcast %c8388608_i32 : i32 to vector<32x1xi32>
    %101 = arith.ori %99, %100 : vector<32x1xi32>
    %102 = vector.broadcast %101 : vector<32x1xi32> to vector<32x128xi32>
    %103 = arith.cmpi sge, %21, %102 : vector<32x128xi32>
    %104 = arith.extui %103 : vector<32x128xi1> to vector<32x128xi32>
    %cst_22 = arith.constant dense<0> : vector<32xi32>
    %105 = vector.multi_reduction <add>, %104, %cst_22 [1] : vector<32x128xi32> to vector<32xi32>
    %106 = vector.shape_cast %105 : vector<32xi32> to vector<32x1xi32>
    %107 = arith.cmpi sge, %106, %27 : vector<32x1xi32>
    %108 = arith.select %107, %101, %99 : vector<32x1xi1>, vector<32x1xi32>
    %c4194304_i32 = arith.constant 4194304 : i32
    %109 = vector.broadcast %c4194304_i32 : i32 to vector<32x1xi32>
    %110 = arith.ori %108, %109 : vector<32x1xi32>
    %111 = vector.broadcast %110 : vector<32x1xi32> to vector<32x128xi32>
    %112 = arith.cmpi sge, %21, %111 : vector<32x128xi32>
    %113 = arith.extui %112 : vector<32x128xi1> to vector<32x128xi32>
    %cst_23 = arith.constant dense<0> : vector<32xi32>
    %114 = vector.multi_reduction <add>, %113, %cst_23 [1] : vector<32x128xi32> to vector<32xi32>
    %115 = vector.shape_cast %114 : vector<32xi32> to vector<32x1xi32>
    %116 = arith.cmpi sge, %115, %27 : vector<32x1xi32>
    %117 = arith.select %116, %110, %108 : vector<32x1xi1>, vector<32x1xi32>
    %c2097152_i32 = arith.constant 2097152 : i32
    %118 = vector.broadcast %c2097152_i32 : i32 to vector<32x1xi32>
    %119 = arith.ori %117, %118 : vector<32x1xi32>
    %120 = vector.broadcast %119 : vector<32x1xi32> to vector<32x128xi32>
    %121 = arith.cmpi sge, %21, %120 : vector<32x128xi32>
    %122 = arith.extui %121 : vector<32x128xi1> to vector<32x128xi32>
    %cst_24 = arith.constant dense<0> : vector<32xi32>
    %123 = vector.multi_reduction <add>, %122, %cst_24 [1] : vector<32x128xi32> to vector<32xi32>
    %124 = vector.shape_cast %123 : vector<32xi32> to vector<32x1xi32>
    %125 = arith.cmpi sge, %124, %27 : vector<32x1xi32>
    %126 = arith.select %125, %119, %117 : vector<32x1xi1>, vector<32x1xi32>
    %c1048576_i32 = arith.constant 1048576 : i32
    %127 = vector.broadcast %c1048576_i32 : i32 to vector<32x1xi32>
    %128 = arith.ori %126, %127 : vector<32x1xi32>
    %129 = vector.broadcast %128 : vector<32x1xi32> to vector<32x128xi32>
    %130 = arith.cmpi sge, %21, %129 : vector<32x128xi32>
    %131 = arith.extui %130 : vector<32x128xi1> to vector<32x128xi32>
    %cst_25 = arith.constant dense<0> : vector<32xi32>
    %132 = vector.multi_reduction <add>, %131, %cst_25 [1] : vector<32x128xi32> to vector<32xi32>
    %133 = vector.shape_cast %132 : vector<32xi32> to vector<32x1xi32>
    %134 = arith.cmpi sge, %133, %27 : vector<32x1xi32>
    %135 = arith.select %134, %128, %126 : vector<32x1xi1>, vector<32x1xi32>
    %c524288_i32 = arith.constant 524288 : i32
    %136 = vector.broadcast %c524288_i32 : i32 to vector<32x1xi32>
    %137 = arith.ori %135, %136 : vector<32x1xi32>
    %138 = vector.broadcast %137 : vector<32x1xi32> to vector<32x128xi32>
    %139 = arith.cmpi sge, %21, %138 : vector<32x128xi32>
    %140 = arith.extui %139 : vector<32x128xi1> to vector<32x128xi32>
    %cst_26 = arith.constant dense<0> : vector<32xi32>
    %141 = vector.multi_reduction <add>, %140, %cst_26 [1] : vector<32x128xi32> to vector<32xi32>
    %142 = vector.shape_cast %141 : vector<32xi32> to vector<32x1xi32>
    %143 = arith.cmpi sge, %142, %27 : vector<32x1xi32>
    %144 = arith.select %143, %137, %135 : vector<32x1xi1>, vector<32x1xi32>
    %c262144_i32 = arith.constant 262144 : i32
    %145 = vector.broadcast %c262144_i32 : i32 to vector<32x1xi32>
    %146 = arith.ori %144, %145 : vector<32x1xi32>
    %147 = vector.broadcast %146 : vector<32x1xi32> to vector<32x128xi32>
    %148 = arith.cmpi sge, %21, %147 : vector<32x128xi32>
    %149 = arith.extui %148 : vector<32x128xi1> to vector<32x128xi32>
    %cst_27 = arith.constant dense<0> : vector<32xi32>
    %150 = vector.multi_reduction <add>, %149, %cst_27 [1] : vector<32x128xi32> to vector<32xi32>
    %151 = vector.shape_cast %150 : vector<32xi32> to vector<32x1xi32>
    %152 = arith.cmpi sge, %151, %27 : vector<32x1xi32>
    %153 = arith.select %152, %146, %144 : vector<32x1xi1>, vector<32x1xi32>
    %c131072_i32 = arith.constant 131072 : i32
    %154 = vector.broadcast %c131072_i32 : i32 to vector<32x1xi32>
    %155 = arith.ori %153, %154 : vector<32x1xi32>
    %156 = vector.broadcast %155 : vector<32x1xi32> to vector<32x128xi32>
    %157 = arith.cmpi sge, %21, %156 : vector<32x128xi32>
    %158 = arith.extui %157 : vector<32x128xi1> to vector<32x128xi32>
    %cst_28 = arith.constant dense<0> : vector<32xi32>
    %159 = vector.multi_reduction <add>, %158, %cst_28 [1] : vector<32x128xi32> to vector<32xi32>
    %160 = vector.shape_cast %159 : vector<32xi32> to vector<32x1xi32>
    %161 = arith.cmpi sge, %160, %27 : vector<32x1xi32>
    %162 = arith.select %161, %155, %153 : vector<32x1xi1>, vector<32x1xi32>
    %c65536_i32 = arith.constant 65536 : i32
    %163 = vector.broadcast %c65536_i32 : i32 to vector<32x1xi32>
    %164 = arith.ori %162, %163 : vector<32x1xi32>
    %165 = vector.broadcast %164 : vector<32x1xi32> to vector<32x128xi32>
    %166 = arith.cmpi sge, %21, %165 : vector<32x128xi32>
    %167 = arith.extui %166 : vector<32x128xi1> to vector<32x128xi32>
    %cst_29 = arith.constant dense<0> : vector<32xi32>
    %168 = vector.multi_reduction <add>, %167, %cst_29 [1] : vector<32x128xi32> to vector<32xi32>
    %169 = vector.shape_cast %168 : vector<32xi32> to vector<32x1xi32>
    %170 = arith.cmpi sge, %169, %27 : vector<32x1xi32>
    %171 = arith.select %170, %164, %162 : vector<32x1xi1>, vector<32x1xi32>
    %c32768_i32 = arith.constant 32768 : i32
    %172 = vector.broadcast %c32768_i32 : i32 to vector<32x1xi32>
    %173 = arith.ori %171, %172 : vector<32x1xi32>
    %174 = vector.broadcast %173 : vector<32x1xi32> to vector<32x128xi32>
    %175 = arith.cmpi sge, %21, %174 : vector<32x128xi32>
    %176 = arith.extui %175 : vector<32x128xi1> to vector<32x128xi32>
    %cst_30 = arith.constant dense<0> : vector<32xi32>
    %177 = vector.multi_reduction <add>, %176, %cst_30 [1] : vector<32x128xi32> to vector<32xi32>
    %178 = vector.shape_cast %177 : vector<32xi32> to vector<32x1xi32>
    %179 = arith.cmpi sge, %178, %27 : vector<32x1xi32>
    %180 = arith.select %179, %173, %171 : vector<32x1xi1>, vector<32x1xi32>
    %c16384_i32 = arith.constant 16384 : i32
    %181 = vector.broadcast %c16384_i32 : i32 to vector<32x1xi32>
    %182 = arith.ori %180, %181 : vector<32x1xi32>
    %183 = vector.broadcast %182 : vector<32x1xi32> to vector<32x128xi32>
    %184 = arith.cmpi sge, %21, %183 : vector<32x128xi32>
    %185 = arith.extui %184 : vector<32x128xi1> to vector<32x128xi32>
    %cst_31 = arith.constant dense<0> : vector<32xi32>
    %186 = vector.multi_reduction <add>, %185, %cst_31 [1] : vector<32x128xi32> to vector<32xi32>
    %187 = vector.shape_cast %186 : vector<32xi32> to vector<32x1xi32>
    %188 = arith.cmpi sge, %187, %27 : vector<32x1xi32>
    %189 = arith.select %188, %182, %180 : vector<32x1xi1>, vector<32x1xi32>
    %c8192_i32 = arith.constant 8192 : i32
    %190 = vector.broadcast %c8192_i32 : i32 to vector<32x1xi32>
    %191 = arith.ori %189, %190 : vector<32x1xi32>
    %192 = vector.broadcast %191 : vector<32x1xi32> to vector<32x128xi32>
    %193 = arith.cmpi sge, %21, %192 : vector<32x128xi32>
    %194 = arith.extui %193 : vector<32x128xi1> to vector<32x128xi32>
    %cst_32 = arith.constant dense<0> : vector<32xi32>
    %195 = vector.multi_reduction <add>, %194, %cst_32 [1] : vector<32x128xi32> to vector<32xi32>
    %196 = vector.shape_cast %195 : vector<32xi32> to vector<32x1xi32>
    %197 = arith.cmpi sge, %196, %27 : vector<32x1xi32>
    %198 = arith.select %197, %191, %189 : vector<32x1xi1>, vector<32x1xi32>
    %c4096_i32 = arith.constant 4096 : i32
    %199 = vector.broadcast %c4096_i32 : i32 to vector<32x1xi32>
    %200 = arith.ori %198, %199 : vector<32x1xi32>
    %201 = vector.broadcast %200 : vector<32x1xi32> to vector<32x128xi32>
    %202 = arith.cmpi sge, %21, %201 : vector<32x128xi32>
    %203 = arith.extui %202 : vector<32x128xi1> to vector<32x128xi32>
    %cst_33 = arith.constant dense<0> : vector<32xi32>
    %204 = vector.multi_reduction <add>, %203, %cst_33 [1] : vector<32x128xi32> to vector<32xi32>
    %205 = vector.shape_cast %204 : vector<32xi32> to vector<32x1xi32>
    %206 = arith.cmpi sge, %205, %27 : vector<32x1xi32>
    %207 = arith.select %206, %200, %198 : vector<32x1xi1>, vector<32x1xi32>
    %c2048_i32 = arith.constant 2048 : i32
    %208 = vector.broadcast %c2048_i32 : i32 to vector<32x1xi32>
    %209 = arith.ori %207, %208 : vector<32x1xi32>
    %210 = vector.broadcast %209 : vector<32x1xi32> to vector<32x128xi32>
    %211 = arith.cmpi sge, %21, %210 : vector<32x128xi32>
    %212 = arith.extui %211 : vector<32x128xi1> to vector<32x128xi32>
    %cst_34 = arith.constant dense<0> : vector<32xi32>
    %213 = vector.multi_reduction <add>, %212, %cst_34 [1] : vector<32x128xi32> to vector<32xi32>
    %214 = vector.shape_cast %213 : vector<32xi32> to vector<32x1xi32>
    %215 = arith.cmpi sge, %214, %27 : vector<32x1xi32>
    %216 = arith.select %215, %209, %207 : vector<32x1xi1>, vector<32x1xi32>
    %c1024_i32 = arith.constant 1024 : i32
    %217 = vector.broadcast %c1024_i32 : i32 to vector<32x1xi32>
    %218 = arith.ori %216, %217 : vector<32x1xi32>
    %219 = vector.broadcast %218 : vector<32x1xi32> to vector<32x128xi32>
    %220 = arith.cmpi sge, %21, %219 : vector<32x128xi32>
    %221 = arith.extui %220 : vector<32x128xi1> to vector<32x128xi32>
    %cst_35 = arith.constant dense<0> : vector<32xi32>
    %222 = vector.multi_reduction <add>, %221, %cst_35 [1] : vector<32x128xi32> to vector<32xi32>
    %223 = vector.shape_cast %222 : vector<32xi32> to vector<32x1xi32>
    %224 = arith.cmpi sge, %223, %27 : vector<32x1xi32>
    %225 = arith.select %224, %218, %216 : vector<32x1xi1>, vector<32x1xi32>
    %c512_i32 = arith.constant 512 : i32
    %226 = vector.broadcast %c512_i32 : i32 to vector<32x1xi32>
    %227 = arith.ori %225, %226 : vector<32x1xi32>
    %228 = vector.broadcast %227 : vector<32x1xi32> to vector<32x128xi32>
    %229 = arith.cmpi sge, %21, %228 : vector<32x128xi32>
    %230 = arith.extui %229 : vector<32x128xi1> to vector<32x128xi32>
    %cst_36 = arith.constant dense<0> : vector<32xi32>
    %231 = vector.multi_reduction <add>, %230, %cst_36 [1] : vector<32x128xi32> to vector<32xi32>
    %232 = vector.shape_cast %231 : vector<32xi32> to vector<32x1xi32>
    %233 = arith.cmpi sge, %232, %27 : vector<32x1xi32>
    %234 = arith.select %233, %227, %225 : vector<32x1xi1>, vector<32x1xi32>
    %c256_i32 = arith.constant 256 : i32
    %235 = vector.broadcast %c256_i32 : i32 to vector<32x1xi32>
    %236 = arith.ori %234, %235 : vector<32x1xi32>
    %237 = vector.broadcast %236 : vector<32x1xi32> to vector<32x128xi32>
    %238 = arith.cmpi sge, %21, %237 : vector<32x128xi32>
    %239 = arith.extui %238 : vector<32x128xi1> to vector<32x128xi32>
    %cst_37 = arith.constant dense<0> : vector<32xi32>
    %240 = vector.multi_reduction <add>, %239, %cst_37 [1] : vector<32x128xi32> to vector<32xi32>
    %241 = vector.shape_cast %240 : vector<32xi32> to vector<32x1xi32>
    %242 = arith.cmpi sge, %241, %27 : vector<32x1xi32>
    %243 = arith.select %242, %236, %234 : vector<32x1xi1>, vector<32x1xi32>
    %c128_i32 = arith.constant 128 : i32
    %244 = vector.broadcast %c128_i32 : i32 to vector<32x1xi32>
    %245 = arith.ori %243, %244 : vector<32x1xi32>
    %246 = vector.broadcast %245 : vector<32x1xi32> to vector<32x128xi32>
    %247 = arith.cmpi sge, %21, %246 : vector<32x128xi32>
    %248 = arith.extui %247 : vector<32x128xi1> to vector<32x128xi32>
    %cst_38 = arith.constant dense<0> : vector<32xi32>
    %249 = vector.multi_reduction <add>, %248, %cst_38 [1] : vector<32x128xi32> to vector<32xi32>
    %250 = vector.shape_cast %249 : vector<32xi32> to vector<32x1xi32>
    %251 = arith.cmpi sge, %250, %27 : vector<32x1xi32>
    %252 = arith.select %251, %245, %243 : vector<32x1xi1>, vector<32x1xi32>
    %c64_i32 = arith.constant 64 : i32
    %253 = vector.broadcast %c64_i32 : i32 to vector<32x1xi32>
    %254 = arith.ori %252, %253 : vector<32x1xi32>
    %255 = vector.broadcast %254 : vector<32x1xi32> to vector<32x128xi32>
    %256 = arith.cmpi sge, %21, %255 : vector<32x128xi32>
    %257 = arith.extui %256 : vector<32x128xi1> to vector<32x128xi32>
    %cst_39 = arith.constant dense<0> : vector<32xi32>
    %258 = vector.multi_reduction <add>, %257, %cst_39 [1] : vector<32x128xi32> to vector<32xi32>
    %259 = vector.shape_cast %258 : vector<32xi32> to vector<32x1xi32>
    %260 = arith.cmpi sge, %259, %27 : vector<32x1xi32>
    %261 = arith.select %260, %254, %252 : vector<32x1xi1>, vector<32x1xi32>
    %c32_i32 = arith.constant 32 : i32
    %262 = vector.broadcast %c32_i32 : i32 to vector<32x1xi32>
    %263 = arith.ori %261, %262 : vector<32x1xi32>
    %264 = vector.broadcast %263 : vector<32x1xi32> to vector<32x128xi32>
    %265 = arith.cmpi sge, %21, %264 : vector<32x128xi32>
    %266 = arith.extui %265 : vector<32x128xi1> to vector<32x128xi32>
    %cst_40 = arith.constant dense<0> : vector<32xi32>
    %267 = vector.multi_reduction <add>, %266, %cst_40 [1] : vector<32x128xi32> to vector<32xi32>
    %268 = vector.shape_cast %267 : vector<32xi32> to vector<32x1xi32>
    %269 = arith.cmpi sge, %268, %27 : vector<32x1xi32>
    %270 = arith.select %269, %263, %261 : vector<32x1xi1>, vector<32x1xi32>
    %c16_i32 = arith.constant 16 : i32
    %271 = vector.broadcast %c16_i32 : i32 to vector<32x1xi32>
    %272 = arith.ori %270, %271 : vector<32x1xi32>
    %273 = vector.broadcast %272 : vector<32x1xi32> to vector<32x128xi32>
    %274 = arith.cmpi sge, %21, %273 : vector<32x128xi32>
    %275 = arith.extui %274 : vector<32x128xi1> to vector<32x128xi32>
    %cst_41 = arith.constant dense<0> : vector<32xi32>
    %276 = vector.multi_reduction <add>, %275, %cst_41 [1] : vector<32x128xi32> to vector<32xi32>
    %277 = vector.shape_cast %276 : vector<32xi32> to vector<32x1xi32>
    %278 = arith.cmpi sge, %277, %27 : vector<32x1xi32>
    %279 = arith.select %278, %272, %270 : vector<32x1xi1>, vector<32x1xi32>
    %c8_i32 = arith.constant 8 : i32
    %280 = vector.broadcast %c8_i32 : i32 to vector<32x1xi32>
    %281 = arith.ori %279, %280 : vector<32x1xi32>
    %282 = vector.broadcast %281 : vector<32x1xi32> to vector<32x128xi32>
    %283 = arith.cmpi sge, %21, %282 : vector<32x128xi32>
    %284 = arith.extui %283 : vector<32x128xi1> to vector<32x128xi32>
    %cst_42 = arith.constant dense<0> : vector<32xi32>
    %285 = vector.multi_reduction <add>, %284, %cst_42 [1] : vector<32x128xi32> to vector<32xi32>
    %286 = vector.shape_cast %285 : vector<32xi32> to vector<32x1xi32>
    %287 = arith.cmpi sge, %286, %27 : vector<32x1xi32>
    %288 = arith.select %287, %281, %279 : vector<32x1xi1>, vector<32x1xi32>
    %c4_i32 = arith.constant 4 : i32
    %289 = vector.broadcast %c4_i32 : i32 to vector<32x1xi32>
    %290 = arith.ori %288, %289 : vector<32x1xi32>
    %291 = vector.broadcast %290 : vector<32x1xi32> to vector<32x128xi32>
    %292 = arith.cmpi sge, %21, %291 : vector<32x128xi32>
    %293 = arith.extui %292 : vector<32x128xi1> to vector<32x128xi32>
    %cst_43 = arith.constant dense<0> : vector<32xi32>
    %294 = vector.multi_reduction <add>, %293, %cst_43 [1] : vector<32x128xi32> to vector<32xi32>
    %295 = vector.shape_cast %294 : vector<32xi32> to vector<32x1xi32>
    %296 = arith.cmpi sge, %295, %27 : vector<32x1xi32>
    %297 = arith.select %296, %290, %288 : vector<32x1xi1>, vector<32x1xi32>
    %c2_i32 = arith.constant 2 : i32
    %298 = vector.broadcast %c2_i32 : i32 to vector<32x1xi32>
    %299 = arith.ori %297, %298 : vector<32x1xi32>
    %300 = vector.broadcast %299 : vector<32x1xi32> to vector<32x128xi32>
    %301 = arith.cmpi sge, %21, %300 : vector<32x128xi32>
    %302 = arith.extui %301 : vector<32x128xi1> to vector<32x128xi32>
    %cst_44 = arith.constant dense<0> : vector<32xi32>
    %303 = vector.multi_reduction <add>, %302, %cst_44 [1] : vector<32x128xi32> to vector<32xi32>
    %304 = vector.shape_cast %303 : vector<32xi32> to vector<32x1xi32>
    %305 = arith.cmpi sge, %304, %27 : vector<32x1xi32>
    %306 = arith.select %305, %299, %297 : vector<32x1xi1>, vector<32x1xi32>
    %c1_i32 = arith.constant 1 : i32
    %307 = vector.broadcast %c1_i32 : i32 to vector<32x1xi32>
    %308 = arith.ori %306, %307 : vector<32x1xi32>
    %309 = vector.broadcast %308 : vector<32x1xi32> to vector<32x128xi32>
    %310 = arith.cmpi sge, %21, %309 : vector<32x128xi32>
    %311 = arith.extui %310 : vector<32x128xi1> to vector<32x128xi32>
    %cst_45 = arith.constant dense<0> : vector<32xi32>
    %312 = vector.multi_reduction <add>, %311, %cst_45 [1] : vector<32x128xi32> to vector<32xi32>
    %313 = vector.shape_cast %312 : vector<32xi32> to vector<32x1xi32>
    %314 = arith.cmpi sge, %313, %27 : vector<32x1xi32>
    %315 = arith.select %314, %308, %306 : vector<32x1xi1>, vector<32x1xi32>
    %316 = vector.broadcast %315 : vector<32x1xi32> to vector<32x128xi32>
    %317 = arith.cmpi sge, %21, %316 : vector<32x128xi32>
    %318 = arith.andi %317, %5 : vector<32x128xi1>
    %c0_i32_46 = arith.constant 0 : i32
    %319 = vector.broadcast %c0_i32_46 : i32 to vector<32x1xi32>
    %320 = arith.cmpi sgt, %27, %319 : vector<32x1xi32>
    %321 = vector.broadcast %320 : vector<32x1xi1> to vector<32x128xi1>
    %322 = arith.andi %318, %321 : vector<32x128xi1>
    %c103_i32 = arith.constant 103 : i32
    %323 = vector.broadcast %c103_i32 : i32 to vector<32x128xi32>
    %324 = arith.select %322, %323, %2 : vector<32x128xi1>, vector<32x128xi32>
    %c0_47 = arith.constant 0 : index
    %c0_48 = arith.constant 0 : index
    %325 = vector.load %arg5[%c0_47, %c0_48] : memref<32x128xi32, #tpu.memory_space<vmem>>, vector<32x128xi32>
    tpu.vector_store %arg5[%c0_47, %c0_48], %324 {strides = array<i32>} : memref<32x128xi32, #tpu.memory_space<vmem>>, vector<32x128xi32>,
    %326 = arith.extui %322 : vector<32x128xi1> to vector<32x128xi8>
    %c0_49 = arith.constant 0 : index
    %c0_50 = arith.constant 0 : index
    %327 = vector.load %arg6[%c0_49, %c0_50] : memref<32x128xi8, #tpu.memory_space<vmem>>, vector<32x128xi8>
    tpu.vector_store %arg6[%c0_49, %c0_50], %326 {strides = array<i32>} : memref<32x128xi8, #tpu.memory_space<vmem>>, vector<32x128xi8>,
    return
  }
  func.func @transform_0(%arg0: i32) -> (i32, i32) {
    %c0_i32 = arith.constant 0 : i32
    %c0_i32_0 = arith.constant 0 : i32
    return %arg0, %c0_i32 : i32, i32
  }
  func.func @transform_1(%arg0: i32) -> (i32, i32) {
    %c0_i32 = arith.constant 0 : i32
    %c0_i32_0 = arith.constant 0 : i32
    return %arg0, %c0_i32 : i32, i32
  }
  func.func @transform_2(%arg0: i32) -> (i32, i32) {
    %c0_i32 = arith.constant 0 : i32
    %c0_i32_0 = arith.constant 0 : i32
    return %arg0, %c0_i32 : i32, i32
  }
  func.func @transform_3(%arg0: i32) -> (i32, i32) {
    %c0_i32 = arith.constant 0 : i32
    %c0_i32_0 = arith.constant 0 : i32
    return %arg0, %c0_i32 : i32, i32
  }
  func.func @transform_4(%arg0: i32) -> (i32, i32) {
    %c0_i32 = arith.constant 0 : i32
    %c0_i32_0 = arith.constant 0 : i32
    return %arg0, %c0_i32 : i32, i32
  }
  func.func @transform_5(%arg0: i32) -> (i32, i32) {
    %c0_i32 = arith.constant 0 : i32
    %c0_i32_0 = arith.constant 0 : i32
    return %arg0, %c0_i32 : i32, i32
  }
}

</mosaic_0001>

<llo_original>
// kernel: tpu_custom_call.1
$region0: #{tpu_custom_call.1}
  #allocation0 [shape = 'u32[]', space=smem, size = 0x4, offset = 0x4, fixed_abs, tag = 'smem constant byte address 0x4 - core index']
  #allocation1 [shape = 'u32[144,128]{1,0:T(1,128)}', space=vmem, size = 0x12000, scoped, tag = 'internal scratch']
  %s0 = inlined_call_operand.vmem [shape: f32[32,128], index: 0, kind: input, shape index: {}]
  %s1 = inlined_call_operand.hbm [shape: f32[32,128], index: 1, kind: input, shape index: {}]
  %s2 = inlined_call_operand.hbm [shape: s32[32,128], index: 2, kind: input, shape index: {}]
  %s3 = inlined_call_operand.vmem [shape: s32[32,1], index: 3, kind: input, shape index: {}]
  %s4 = inlined_call_operand.hbm [shape: s32[32,128], index: 4, kind: output, shape index: {0}]
  %s5 = inlined_call_operand.hbm [shape: s8[32,128], index: 5, kind: output, shape index: {1}]
  %6 = xla_tuple %s4, %s5
  %s7 = sld [smem:[#allocation0]]
  $region42: #{tpu_custom_call.1} parent=0
    _
  %s9 = ssub.s32 1, %s7
  %s10 = scalar_select 0, %s9, %s7
  $region1: #{tpu_custom_call.1} parent=0
    #allocation2 [shape = 'u8[16384]{0}', space=vmem, size = 0x4000, scoped, tag = 'input window, operand 1, single buffered']
    #allocation3 [shape = 's32[1]{0}', space=sflag, size = 0x4, scoped, tag = 'scoped memory for tpu_custom_call.1']
    #allocation4 [shape = 's32[1]{0}', space=sflag, size = 0x4, scoped, tag = 'scoped memory for tpu_custom_call.1']
    #allocation5 [shape = 'u8[16384]{0}', space=vmem, size = 0x4000, scoped, tag = 'input window, operand 2, single buffered']
    #allocation6 [shape = 's32[1]{0}', space=sflag, size = 0x4, scoped, tag = 'scoped memory for tpu_custom_call.1']
    #allocation7 [shape = 'u8[16384]{0}', space=vmem, size = 0x4000, scoped, tag = 'output window, operand 0, single buffered']
    #allocation8 [shape = 'u8[4096]{0}', space=vmem, size = 0x1000, scoped, tag = 'output window, operand 1, single buffered']
    #allocation9 [shape = 's32[1]{0}', space=sflag, size = 0x4, scoped, tag = 'scoped memory for tpu_custom_call.1']
    %11 = vsyncpa [#allocation3], 0
    %12 = vsyncpa [#allocation6], 0
    %13 = vsyncpa [#allocation4], 0
    %14 = vsyncpa [#allocation9], 0
    // Predicated region
    $region2: #{tpu_custom_call.1} parent=1 // pred_check
      _
    $region3: #{tpu_custom_call.1} parent=1 // pred_check_branch
      %16 = sbr.rel (0) target = $region5
    $region4: #{tpu_custom_call.1} parent=1 // pred_region
      _
    $region5: #{tpu_custom_call.1} parent=1 // pred_fallthru
      _
    // Predicated region
    $region6: #{tpu_custom_call.1} parent=1 // pred_check
      _
    $region7: #{tpu_custom_call.1} parent=1 // pred_check_branch
      %18 = sbr.rel (0) target = $region9
    $region8: #{tpu_custom_call.1} parent=1 // pred_region
      %s20 = ssub.s32 512, 512
      %21 = vsyncadd [#allocation3], %s20
      %s22 = sshll.u32 [#allocation2], 4
      %s23 = int_to_ptr.vmem [resolvable:$true] %s22
      %28 = dma.hbm_to_vmem [thread:$0]  %s1, 512, %s23, [#allocation3], 128, 128, 8
    $region9: #{tpu_custom_call.1} parent=1 // pred_fallthru
      _
    // Predicated region
    $region10: #{tpu_custom_call.1} parent=1 // pred_check
      _
    $region11: #{tpu_custom_call.1} parent=1 // pred_check_branch
      %30 = sbr.rel (0) target = $region13
    $region12: #{tpu_custom_call.1} parent=1 // pred_region
      %s32 = ssub.s32 512, 512
      %33 = vsyncadd [#allocation6], %s32
      %s34 = sshll.u32 [#allocation5], 4
      %s35 = int_to_ptr.vmem [resolvable:$true] %s34
      %40 = dma.hbm_to_vmem [thread:$0]  %s2, 512, %s35, [#allocation6], 128, 128, 8
    $region13: #{tpu_custom_call.1} parent=1 // pred_fallthru
      _
    // Predicated region
    $region14: #{tpu_custom_call.1} parent=1 // pred_check
      _
    $region15: #{tpu_custom_call.1} parent=1 // pred_check_branch
      %42 = sbr.rel (0) target = $region17
    $region16: #{tpu_custom_call.1} parent=1 // pred_region
      _
    $region17: #{tpu_custom_call.1} parent=1 // pred_fallthru
      _
    // Predicated region
    $region18: #{tpu_custom_call.1} parent=1 // pred_check
      _
    $region19: #{tpu_custom_call.1} parent=1 // pred_check_branch
      %44 = sbr.rel (0) target = $region21
    $region20: #{tpu_custom_call.1} parent=1 // pred_region
      %45 = dma.done [#allocation3], 512
    $region21: #{tpu_custom_call.1} parent=1 // pred_fallthru
      _
    // Predicated region
    $region22: #{tpu_custom_call.1} parent=1 // pred_check
      _
    $region23: #{tpu_custom_call.1} parent=1 // pred_check_branch
      %47 = sbr.rel (0) target = $region25
    $region24: #{tpu_custom_call.1} parent=1 // pred_region
      %48 = dma.done [#allocation6], 512
    $region25: #{tpu_custom_call.1} parent=1 // pred_fallthru
      _
    %v51 = vld [vmem:[%s0] sm:$0xff]
    %v52 = vld [vmem:[%s0 + $0x8] sm:$0xff]
    %v53 = vld [vmem:[%s0 + $0x10] sm:$0xff]
    %v54 = vld [vmem:[%s0 + $0x18] sm:$0xff]
    %v55 = vld [vmem:[#allocation2] sm:$0xff]
    %v56 = vld [vmem:[#allocation2 + $0x8] sm:$0xff]
    %v57 = vld [vmem:[#allocation2 + $0x10] sm:$0xff]
    %v58 = vld [vmem:[#allocation2 + $0x18] sm:$0xff]
    %v59 = vld [vmem:[#allocation5] sm:$0xff]
    %v60 = vld [vmem:[#allocation5 + $0x8] sm:$0xff]
    %v61 = vld [vmem:[#allocation5 + $0x10] sm:$0xff]
    %v62 = vld [vmem:[#allocation5 + $0x18] sm:$0xff]
    %v63 = vld [vmem:[%s3] sm:$0xff]
    %v64 = vld [vmem:[%s3 + $0x8] sm:$0xff]
    %v65 = vld [vmem:[%s3 + $0x10] sm:$0xff]
    %v66 = vld [vmem:[%s3 + $0x18] sm:$0xff]
    %vm67 = vcmp.gt.f32.partialorder %v51, 0.0
    %vm68 = vcmp.gt.f32.partialorder %v52, 0.0
    %vm69 = vcmp.gt.f32.partialorder %v53, 0.0
    %vm70 = vcmp.gt.f32.partialorder %v54, 0.0
    %v71 = vmax.f32 %v55, 1e-07
    %v72 = vmax.f32 %v56, 1e-07
    %v73 = vmax.f32 %v57, 1e-07
    %v74 = vmax.f32 %v58, 1e-07
    %v75 = vmin.f32 %v71, 0.9999999
    %v76 = vmin.f32 %v72, 0.9999999
    %v77 = vmin.f32 %v73, 0.9999999
    %v78 = vmin.f32 %v74, 0.9999999
    %v79 = vlog2.pop %v75
    %v80 = vmul.f32 %v79, 0.6931472
    %v81 = vlog2.pop %v76
    %v82 = vmul.f32 %v81, 0.6931472
    %v83 = vlog2.pop %v77
    %v84 = vmul.f32 %v83, 0.6931472
    %v85 = vlog2.pop %v78
    %v86 = vmul.f32 %v85, 0.6931472
    %v87 = vmax.f32 %v51, 1e-30
    %v88 = vmax.f32 %v52, 1e-30
    %v89 = vmax.f32 %v53, 1e-30
    %v90 = vmax.f32 %v54, 1e-30
    %v91 = vrcp.pop %v87
    %v92 = vmul.f32 %v80, %v91
    %v93 = vrcp.pop %v88
    %v94 = vmul.f32 %v82, %v93
    %v95 = vrcp.pop %v89
    %v96 = vmul.f32 %v84, %v95
    %v97 = vrcp.pop %v90
    %v98 = vmul.f32 %v86, %v97
    %vm103 = vcmp.ge.s32.totalorder %v92, 0
    %vm104 = vcmp.ge.s32.totalorder %v94, 0
    %vm105 = vcmp.ge.s32.totalorder %v96, 0
    %vm106 = vcmp.ge.s32.totalorder %v98, 0
    %v107 = vxor.u32 %v92, 2147483647
    %v108 = vxor.u32 %v94, 2147483647
    %v109 = vxor.u32 %v96, 2147483647
    %v110 = vxor.u32 %v98, 2147483647
    %v111 = vsel %vm103, %v92, %v107
    %v112 = vsel %vm104, %v94, %v108
    %v113 = vsel %vm105, %v96, %v109
    %v114 = vsel %vm106, %v98, %v110
    %v115 = vsel %vm67, %v111, 2147483648
    %v116 = vsel %vm68, %v112, 2147483648
    %v117 = vsel %vm69, %v113, 2147483648
    %v118 = vsel %vm70, %v114, 2147483648
    %v119 = vsel %vm67, 1, 0
    %v120 = vsel %vm68, 1, 0
    %v121 = vsel %vm69, 1, 0
    %v122 = vsel %vm70, 1, 0
    %v123 = vand.u32 %v119, 65535
    %v124 = vshrl.u32 %v119, 16
    %v125 = vcvt.s32.f32 %v123
    %v126 = vcvt.s32.f32 %v124
    %127 = vadd.xlane.f32.xlu0 %v125
    %v128 = vpop.xlane.xlu0 %127
    %129 = vadd.xlane.f32.xlu0 %v126
    %v130 = vpop.xlane.xlu0 %129
    %v131 = vcvt.f32.s32 %v128
    %v132 = vcvt.f32.s32 %v130
    %v133 = vshll.u32 %v132, 16
    %v134 = vadd.s32 %v133, %v131
    %v135 = vand.u32 %v120, 65535
    %v136 = vshrl.u32 %v120, 16
    %v137 = vcvt.s32.f32 %v135
    %v138 = vcvt.s32.f32 %v136
    %139 = vadd.xlane.f32.xlu0 %v137
    %v140 = vpop.xlane.xlu0 %139
    %141 = vadd.xlane.f32.xlu0 %v138
    %v142 = vpop.xlane.xlu0 %141
    %v143 = vcvt.f32.s32 %v140
    %v144 = vcvt.f32.s32 %v142
    %v145 = vshll.u32 %v144, 16
    %v146 = vadd.s32 %v145, %v143
    %v147 = vand.u32 %v121, 65535
    %v148 = vshrl.u32 %v121, 16
    %v149 = vcvt.s32.f32 %v147
    %v150 = vcvt.s32.f32 %v148
    %151 = vadd.xlane.f32.xlu0 %v149
    %v152 = vpop.xlane.xlu0 %151
    %153 = vadd.xlane.f32.xlu0 %v150
    %v154 = vpop.xlane.xlu0 %153
    %v155 = vcvt.f32.s32 %v152
    %v156 = vcvt.f32.s32 %v154
    %v157 = vshll.u32 %v156, 16
    %v158 = vadd.s32 %v157, %v155
    %v159 = vand.u32 %v122, 65535
    %v160 = vshrl.u32 %v122, 16
    %v161 = vcvt.s32.f32 %v159
    %v162 = vcvt.s32.f32 %v160
    %163 = vadd.xlane.f32.xlu0 %v161
    %v164 = vpop.xlane.xlu0 %163
    %165 = vadd.xlane.f32.xlu0 %v162
    %v166 = vpop.xlane.xlu0 %165
    %v167 = vcvt.f32.s32 %v164
    %v168 = vcvt.f32.s32 %v166
    %v169 = vshll.u32 %v168, 16
    %v170 = vadd.s32 %v169, %v167
    %vm171 = vcmp.gt.s32.totalorder %v63, 0
    %v172 = vsel %vm171, %v63, 0
    %vm173 = vcmp.gt.s32.totalorder %v64, 0
    %v174 = vsel %vm173, %v64, 0
    %vm175 = vcmp.gt.s32.totalorder %v65, 0
    %v176 = vsel %vm175, %v65, 0
    %vm177 = vcmp.gt.s32.totalorder %v66, 0
    %v178 = vsel %vm177, %v66, 0
    %vm179 = vcmp.lt.s32.totalorder %v134, %v172
    %v180 = vsel %vm179, %v134, %v172
    %vm181 = vcmp.lt.s32.totalorder %v146, %v174
    %v182 = vsel %vm181, %v146, %v174
    %vm183 = vcmp.lt.s32.totalorder %v158, %v176
    %v184 = vsel %vm183, %v158, %v176
    %vm185 = vcmp.lt.s32.totalorder %v170, %v178
    %v186 = vsel %vm185, %v170, %v178
    %vm187 = vcmp.ge.s32.totalorder %v115, 0
    %vm188 = vcmp.ge.s32.totalorder %v116, 0
    %vm189 = vcmp.ge.s32.totalorder %v117, 0
    %vm190 = vcmp.ge.s32.totalorder %v118, 0
    %v191 = vsel %vm187, 1, 0
    %v192 = vsel %vm188, 1, 0
    %v193 = vsel %vm189, 1, 0
    %v194 = vsel %vm190, 1, 0
    %v195 = vand.u32 %v191, 65535
    %v196 = vshrl.u32 %v191, 16
    %v197 = vcvt.s32.f32 %v195
    %v198 = vcvt.s32.f32 %v196
    %199 = vadd.xlane.f32.xlu0 %v197
    %v200 = vpop.xlane.xlu0 %199
    %201 = vadd.xlane.f32.xlu0 %v198
    %v202 = vpop.xlane.xlu0 %201
    %v203 = vcvt.f32.s32 %v200
    %v204 = vcvt.f32.s32 %v202
    %v205 = vshll.u32 %v204, 16
    %v206 = vadd.s32 %v205, %v203
    %v207 = vand.u32 %v192, 65535
    %v208 = vshrl.u32 %v192, 16
    %v209 = vcvt.s32.f32 %v207
    %v210 = vcvt.s32.f32 %v208
    %211 = vadd.xlane.f32.xlu0 %v209
    %v212 = vpop.xlane.xlu0 %211
    %213 = vadd.xlane.f32.xlu0 %v210
    %v214 = vpop.xlane.xlu0 %213
    %v215 = vcvt.f32.s32 %v212
    %v216 = vcvt.f32.s32 %v214
    %v217 = vshll.u32 %v216, 16
    %v218 = vadd.s32 %v217, %v215
    %v219 = vand.u32 %v193, 65535
    %v220 = vshrl.u32 %v193, 16
    %v221 = vcvt.s32.f32 %v219
    %v222 = vcvt.s32.f32 %v220
    %223 = vadd.xlane.f32.xlu0 %v221
    %v224 = vpop.xlane.xlu0 %223
    %225 = vadd.xlane.f32.xlu0 %v222
    %v226 = vpop.xlane.xlu0 %225
    %v227 = vcvt.f32.s32 %v224
    %v228 = vcvt.f32.s32 %v226
    %v229 = vshll.u32 %v228, 16
    %v230 = vadd.s32 %v229, %v227
    %v231 = vand.u32 %v194, 65535
    %v232 = vshrl.u32 %v194, 16
    %v233 = vcvt.s32.f32 %v231
    %v234 = vcvt.s32.f32 %v232
    %235 = vadd.xlane.f32.xlu0 %v233
    %v236 = vpop.xlane.xlu0 %235
    %237 = vadd.xlane.f32.xlu0 %v234
    %v238 = vpop.xlane.xlu0 %237
    %v239 = vcvt.f32.s32 %v236
    %v240 = vcvt.f32.s32 %v238
    %v241 = vshll.u32 %v240, 16
    %v242 = vadd.s32 %v241, %v239
    %vm243 = vcmp.ge.s32.totalorder %v206, %v180
    %vm244 = vcmp.ge.s32.totalorder %v218, %v182
    %vm245 = vcmp.ge.s32.totalorder %v230, %v184
    %vm246 = vcmp.ge.s32.totalorder %v242, %v186
    %v247 = vsel %vm243, 0, 2147483648
    %v248 = vsel %vm244, 0, 2147483648
    %v249 = vsel %vm245, 0, 2147483648
    %v250 = vsel %vm246, 0, 2147483648
    %v251 = vor.u32 %v247, 1073741824
    %v252 = vor.u32 %v248, 1073741824
    %v253 = vor.u32 %v249, 1073741824
    %v254 = vor.u32 %v250, 1073741824
    %255 = vset.pattern.permute.xlu0 0
    %256 = vperm.xlu0 %255, %v251
    %v257 = vpop.permute.xlu0 %256
    %258 = vset.pattern.permute.xlu0 0
    %259 = vperm.xlu0 %258, %v252
    %v260 = vpop.permute.xlu0 %259
    %261 = vset.pattern.permute.xlu0 0
    %262 = vperm.xlu0 %261, %v253
    %v263 = vpop.permute.xlu0 %262
    %264 = vset.pattern.permute.xlu0 0
    %265 = vperm.xlu0 %264, %v254
    %v266 = vpop.permute.xlu0 %265
    %vm267 = vcmp.ge.s32.totalorder %v115, %v257
    %vm268 = vcmp.ge.s32.totalorder %v116, %v260
    %vm269 = vcmp.ge.s32.totalorder %v117, %v263
    %vm270 = vcmp.ge.s32.totalorder %v118, %v266
    %v271 = vsel %vm267, 1, 0
    %v272 = vsel %vm268, 1, 0
    %v273 = vsel %vm269, 1, 0
    %v274 = vsel %vm270, 1, 0
    %v275 = vand.u32 %v271, 65535
    %v276 = vshrl.u32 %v271, 16
    %v277 = vcvt.s32.f32 %v275
    %v278 = vcvt.s32.f32 %v276
    %279 = vadd.xlane.f32.xlu0 %v277
    %v280 = vpop.xlane.xlu0 %279
    %281 = vadd.xlane.f32.xlu0 %v278
    %v282 = vpop.xlane.xlu0 %281
    %v283 = vcvt.f32.s32 %v280
    %v284 = vcvt.f32.s32 %v282
    %v285 = vshll.u32 %v284, 16
    %v286 = vadd.s32 %v285, %v283
    %v287 = vand.u32 %v272, 65535
    %v288 = vshrl.u32 %v272, 16
    %v289 = vcvt.s32.f32 %v287
    %v290 = vcvt.s32.f32 %v288
    %291 = vadd.xlane.f32.xlu0 %v289
    %v292 = vpop.xlane.xlu0 %291
    %293 = vadd.xlane.f32.xlu0 %v290
    %v294 = vpop.xlane.xlu0 %293
    %v295 = vcvt.f32.s32 %v292
    %v296 = vcvt.f32.s32 %v294
    %v297 = vshll.u32 %v296, 16
    %v298 = vadd.s32 %v297, %v295
    %v299 = vand.u32 %v273, 65535
    %v300 = vshrl.u32 %v273, 16
    %v301 = vcvt.s32.f32 %v299
    %v302 = vcvt.s32.f32 %v300
    %303 = vadd.xlane.f32.xlu0 %v301
    %v304 = vpop.xlane.xlu0 %303
    %305 = vadd.xlane.f32.xlu0 %v302
    %v306 = vpop.xlane.xlu0 %305
    %v307 = vcvt.f32.s32 %v304
    %v308 = vcvt.f32.s32 %v306
    %v309 = vshll.u32 %v308, 16
    %v310 = vadd.s32 %v309, %v307
    %v311 = vand.u32 %v274, 65535
    %v312 = vshrl.u32 %v274, 16
    %v313 = vcvt.s32.f32 %v311
    %v314 = vcvt.s32.f32 %v312
    %315 = vadd.xlane.f32.xlu0 %v313
    %v316 = vpop.xlane.xlu0 %315
    %317 = vadd.xlane.f32.xlu0 %v314
    %v318 = vpop.xlane.xlu0 %317
    %v319 = vcvt.f32.s32 %v316
    %v320 = vcvt.f32.s32 %v318
    %v321 = vshll.u32 %v320, 16
    %v322 = vadd.s32 %v321, %v319
    %vm323 = vcmp.ge.s32.totalorder %v286, %v180
    %vm324 = vcmp.ge.s32.totalorder %v298, %v182
    %vm325 = vcmp.ge.s32.totalorder %v310, %v184
    %vm326 = vcmp.ge.s32.totalorder %v322, %v186
    %v327 = vsel %vm323, %v251, %v247
    %v328 = vsel %vm324, %v252, %v248
    %v329 = vsel %vm325, %v253, %v249
    %v330 = vsel %vm326, %v254, %v250
    %v331 = vor.u32 %v327, 536870912
    %v332 = vor.u32 %v328, 536870912
    %v333 = vor.u32 %v329, 536870912
    %v334 = vor.u32 %v330, 536870912
    %335 = vset.pattern.permute.xlu0 0
    %336 = vperm.xlu0 %335, %v331
    %v337 = vpop.permute.xlu0 %336
    %338 = vset.pattern.permute.xlu0 0
    %339 = vperm.xlu0 %338, %v332
    %v340 = vpop.permute.xlu0 %339
    %341 = vset.pattern.permute.xlu0 0
    %342 = vperm.xlu0 %341, %v333
    %v343 = vpop.permute.xlu0 %342
    %344 = vset.pattern.permute.xlu0 0
    %345 = vperm.xlu0 %344, %v334
    %v346 = vpop.permute.xlu0 %345
    %vm347 = vcmp.ge.s32.totalorder %v115, %v337
    %vm348 = vcmp.ge.s32.totalorder %v116, %v340
    %vm349 = vcmp.ge.s32.totalorder %v117, %v343
    %vm350 = vcmp.ge.s32.totalorder %v118, %v346
    %v351 = vsel %vm347, 1, 0
    %v352 = vsel %vm348, 1, 0
    %v353 = vsel %vm349, 1, 0
    %v354 = vsel %vm350, 1, 0
    %v355 = vand.u32 %v351, 65535
    %v356 = vshrl.u32 %v351, 16
    %v357 = vcvt.s32.f32 %v355
    %v358 = vcvt.s32.f32 %v356
    %359 = vadd.xlane.f32.xlu0 %v357
    %v360 = vpop.xlane.xlu0 %359
    %361 = vadd.xlane.f32.xlu0 %v358
    %v362 = vpop.xlane.xlu0 %361
    %v363 = vcvt.f32.s32 %v360
    %v364 = vcvt.f32.s32 %v362
    %v365 = vshll.u32 %v364, 16
    %v366 = vadd.s32 %v365, %v363
    %v367 = vand.u32 %v352, 65535
    %v368 = vshrl.u32 %v352, 16
    %v369 = vcvt.s32.f32 %v367
    %v370 = vcvt.s32.f32 %v368
    %371 = vadd.xlane.f32.xlu0 %v369
    %v372 = vpop.xlane.xlu0 %371
    %373 = vadd.xlane.f32.xlu0 %v370
    %v374 = vpop.xlane.xlu0 %373
    %v375 = vcvt.f32.s32 %v372
    %v376 = vcvt.f32.s32 %v374
    %v377 = vshll.u32 %v376, 16
    %v378 = vadd.s32 %v377, %v375
    %v379 = vand.u32 %v353, 65535
    %v380 = vshrl.u32 %v353, 16
    %v381 = vcvt.s32.f32 %v379
    %v382 = vcvt.s32.f32 %v380
    %383 = vadd.xlane.f32.xlu0 %v381
    %v384 = vpop.xlane.xlu0 %383
    %385 = vadd.xlane.f32.xlu0 %v382
    %v386 = vpop.xlane.xlu0 %385
    %v387 = vcvt.f32.s32 %v384
    %v388 = vcvt.f32.s32 %v386
    %v389 = vshll.u32 %v388, 16
    %v390 = vadd.s32 %v389, %v387
    %v391 = vand.u32 %v354, 65535
    %v392 = vshrl.u32 %v354, 16
    %v393 = vcvt.s32.f32 %v391
    %v394 = vcvt.s32.f32 %v392
    %395 = vadd.xlane.f32.xlu0 %v393
    %v396 = vpop.xlane.xlu0 %395
    %397 = vadd.xlane.f32.xlu0 %v394
    %v398 = vpop.xlane.xlu0 %397
    %v399 = vcvt.f32.s32 %v396
    %v400 = vcvt.f32.s32 %v398
    %v401 = vshll.u32 %v400, 16
    %v402 = vadd.s32 %v401, %v399
    %vm403 = vcmp.ge.s32.totalorder %v366, %v180
    %vm404 = vcmp.ge.s32.totalorder %v378, %v182
    %vm405 = vcmp.ge.s32.totalorder %v390, %v184
    %vm406 = vcmp.ge.s32.totalorder %v402, %v186
    %v407 = vsel %vm403, %v331, %v327
    %v408 = vsel %vm404, %v332, %v328
    %v409 = vsel %vm405, %v333, %v329
    %v410 = vsel %vm406, %v334, %v330
    %v411 = vor.u32 %v407, 268435456
    %v412 = vor.u32 %v408, 268435456
    %v413 = vor.u32 %v409, 268435456
    %v414 = vor.u32 %v410, 268435456
    %415 = vset.pattern.permute.xlu0 0
    %416 = vperm.xlu0 %415, %v411
    %v417 = vpop.permute.xlu0 %416
    %418 = vset.pattern.permute.xlu0 0
    %419 = vperm.xlu0 %418, %v412
    %v420 = vpop.permute.xlu0 %419
    %421 = vset.pattern.permute.xlu0 0
    %422 = vperm.xlu0 %421, %v413
    %v423 = vpop.permute.xlu0 %422
    %424 = vset.pattern.permute.xlu0 0
    %425 = vperm.xlu0 %424, %v414
    %v426 = vpop.permute.xlu0 %425
    %vm427 = vcmp.ge.s32.totalorder %v115, %v417
    %vm428 = vcmp.ge.s32.totalorder %v116, %v420
    %vm429 = vcmp.ge.s32.totalorder %v117, %v423
    %vm430 = vcmp.ge.s32.totalorder %v118, %v426
    %v431 = vsel %vm427, 1, 0
    %v432 = vsel %vm428, 1, 0
    %v433 = vsel %vm429, 1, 0
    %v434 = vsel %vm430, 1, 0
    %v435 = vand.u32 %v431, 65535
    %v436 = vshrl.u32 %v431, 16
    %v437 = vcvt.s32.f32 %v435
    %v438 = vcvt.s32.f32 %v436
    %439 = vadd.xlane.f32.xlu0 %v437
    %v440 = vpop.xlane.xlu0 %439
    %441 = vadd.xlane.f32.xlu0 %v438
    %v442 = vpop.xlane.xlu0 %441
    %v443 = vcvt.f32.s32 %v440
    %v444 = vcvt.f32.s32 %v442
    %v445 = vshll.u32 %v444, 16
    %v446 = vadd.s32 %v445, %v443
    %v447 = vand.u32 %v432, 65535
    %v448 = vshrl.u32 %v432, 16
    %v449 = vcvt.s32.f32 %v447
    %v450 = vcvt.s32.f32 %v448
    %451 = vadd.xlane.f32.xlu0 %v449
    %v452 = vpop.xlane.xlu0 %451
    %453 = vadd.xlane.f32.xlu0 %v450
    %v454 = vpop.xlane.xlu0 %453
    %v455 = vcvt.f32.s32 %v452
    %v456 = vcvt.f32.s32 %v454
    %v457 = vshll.u32 %v456, 16
    %v458 = vadd.s32 %v457, %v455
    %v459 = vand.u32 %v433, 65535
    %v460 = vshrl.u32 %v433, 16
    %v461 = vcvt.s32.f32 %v459
    %v462 = vcvt.s32.f32 %v460
    %463 = vadd.xlane.f32.xlu0 %v461
    %v464 = vpop.xlane.xlu0 %463
    %465 = vadd.xlane.f32.xlu0 %v462
    %v466 = vpop.xlane.xlu0 %465
    %v467 = vcvt.f32.s32 %v464
    %v468 = vcvt.f32.s32 %v466
    %v469 = vshll.u32 %v468, 16
    %v470 = vadd.s32 %v469, %v467
    %v471 = vand.u32 %v434, 65535
    %v472 = vshrl.u32 %v434, 16
    %v473 = vcvt.s32.f32 %v471
    %v474 = vcvt.s32.f32 %v472
    %475 = vadd.xlane.f32.xlu0 %v473
    %v476 = vpop.xlane.xlu0 %475
    %477 = vadd.xlane.f32.xlu0 %v474
    %v478 = vpop.xlane.xlu0 %477
    %v479 = vcvt.f32.s32 %v476
    %v480 = vcvt.f32.s32 %v478
    %v481 = vshll.u32 %v480, 16
    %v482 = vadd.s32 %v481, %v479
    %vm483 = vcmp.ge.s32.totalorder %v446, %v180
    %vm484 = vcmp.ge.s32.totalorder %v458, %v182
    %vm485 = vcmp.ge.s32.totalorder %v470, %v184
    %vm486 = vcmp.ge.s32.totalorder %v482, %v186
    %v487 = vsel %vm483, %v411, %v407
    %v488 = vsel %vm484, %v412, %v408
    %v489 = vsel %vm485, %v413, %v409
    %v490 = vsel %vm486, %v414, %v410
    %v491 = vor.u32 %v487, 134217728
    %v492 = vor.u32 %v488, 134217728
    %v493 = vor.u32 %v489, 134217728
    %v494 = vor.u32 %v490, 134217728
    %495 = vset.pattern.permute.xlu0 0
    %496 = vperm.xlu0 %495, %v491
    %v497 = vpop.permute.xlu0 %496
    %498 = vset.pattern.permute.xlu0 0
    %499 = vperm.xlu0 %498, %v492
    %v500 = vpop.permute.xlu0 %499
    %501 = vset.pattern.permute.xlu0 0
    %502 = vperm.xlu0 %501, %v493
    %v503 = vpop.permute.xlu0 %502
    %504 = vset.pattern.permute.xlu0 0
    %505 = vperm.xlu0 %504, %v494
    %v506 = vpop.permute.xlu0 %505
    %vm507 = vcmp.ge.s32.totalorder %v115, %v497
    %vm508 = vcmp.ge.s32.totalorder %v116, %v500
    %vm509 = vcmp.ge.s32.totalorder %v117, %v503
    %vm510 = vcmp.ge.s32.totalorder %v118, %v506
    %v511 = vsel %vm507, 1, 0
    %v512 = vsel %vm508, 1, 0
    %v513 = vsel %vm509, 1, 0
    %v514 = vsel %vm510, 1, 0
    %v515 = vand.u32 %v511, 65535
    %v516 = vshrl.u32 %v511, 16
    %v517 = vcvt.s32.f32 %v515
    %v518 = vcvt.s32.f32 %v516
    %519 = vadd.xlane.f32.xlu0 %v517
    %v520 = vpop.xlane.xlu0 %519
    %521 = vadd.xlane.f32.xlu0 %v518
    %v522 = vpop.xlane.xlu0 %521
    %v523 = vcvt.f32.s32 %v520
    %v524 = vcvt.f32.s32 %v522
    %v525 = vshll.u32 %v524, 16
    %v526 = vadd.s32 %v525, %v523
    %v527 = vand.u32 %v512, 65535
    %v528 = vshrl.u32 %v512, 16
    %v529 = vcvt.s32.f32 %v527
    %v530 = vcvt.s32.f32 %v528
    %531 = vadd.xlane.f32.xlu0 %v529
    %v532 = vpop.xlane.xlu0 %531
    %533 = vadd.xlane.f32.xlu0 %v530
    %v534 = vpop.xlane.xlu0 %533
    %v535 = vcvt.f32.s32 %v532
    %v536 = vcvt.f32.s32 %v534
    %v537 = vshll.u32 %v536, 16
    %v538 = vadd.s32 %v537, %v535
    %v539 = vand.u32 %v513, 65535
    %v540 = vshrl.u32 %v513, 16
    %v541 = vcvt.s32.f32 %v539
    %v542 = vcvt.s32.f32 %v540
    %543 = vadd.xlane.f32.xlu0 %v541
    %v544 = vpop.xlane.xlu0 %543
    %545 = vadd.xlane.f32.xlu0 %v542
    %v546 = vpop.xlane.xlu0 %545
    %v547 = vcvt.f32.s32 %v544
    %v548 = vcvt.f32.s32 %v546
    %v549 = vshll.u32 %v548, 16
    %v550 = vadd.s32 %v549, %v547
    %v551 = vand.u32 %v514, 65535
    %v552 = vshrl.u32 %v514, 16
    %v553 = vcvt.s32.f32 %v551
    %v554 = vcvt.s32.f32 %v552
    %555 = vadd.xlane.f32.xlu0 %v553
    %v556 = vpop.xlane.xlu0 %555
    %557 = vadd.xlane.f32.xlu0 %v554
    %v558 = vpop.xlane.xlu0 %557
    %v559 = vcvt.f32.s32 %v556
    %v560 = vcvt.f32.s32 %v558
    %v561 = vshll.u32 %v560, 16
    %v562 = vadd.s32 %v561, %v559
    %vm563 = vcmp.ge.s32.totalorder %v526, %v180
    %vm564 = vcmp.ge.s32.totalorder %v538, %v182
    %vm565 = vcmp.ge.s32.totalorder %v550, %v184
    %vm566 = vcmp.ge.s32.totalorder %v562, %v186
    %v567 = vsel %vm563, %v491, %v487
    %v568 = vsel %vm564, %v492, %v488
    %v569 = vsel %vm565, %v493, %v489
    %v570 = vsel %vm566, %v494, %v490
    %v571 = vor.u32 %v567, 67108864
    %v572 = vor.u32 %v568, 67108864
    %v573 = vor.u32 %v569, 67108864
    %v574 = vor.u32 %v570, 67108864
    %575 = vset.pattern.permute.xlu0 0
    %576 = vperm.xlu0 %575, %v571
    %v577 = vpop.permute.xlu0 %576
    %578 = vset.pattern.permute.xlu0 0
    %579 = vperm.xlu0 %578, %v572
    %v580 = vpop.permute.xlu0 %579
    %581 = vset.pattern.permute.xlu0 0
    %582 = vperm.xlu0 %581, %v573
    %v583 = vpop.permute.xlu0 %582
    %584 = vset.pattern.permute.xlu0 0
    %585 = vperm.xlu0 %584, %v574
    %v586 = vpop.permute.xlu0 %585
    %vm587 = vcmp.ge.s32.totalorder %v115, %v577
    %vm588 = vcmp.ge.s32.totalorder %v116, %v580
    %vm589 = vcmp.ge.s32.totalorder %v117, %v583
    %vm590 = vcmp.ge.s32.totalorder %v118, %v586
    %v591 = vsel %vm587, 1, 0
    %v592 = vsel %vm588, 1, 0
    %v593 = vsel %vm589, 1, 0
    %v594 = vsel %vm590, 1, 0
    %v595 = vand.u32 %v591, 65535
    %v596 = vshrl.u32 %v591, 16
    %v597 = vcvt.s32.f32 %v595
    %v598 = vcvt.s32.f32 %v596
    %599 = vadd.xlane.f32.xlu0 %v597
    %v600 = vpop.xlane.xlu0 %599
    %601 = vadd.xlane.f32.xlu0 %v598
    %v602 = vpop.xlane.xlu0 %601
    %v603 = vcvt.f32.s32 %v600
    %v604 = vcvt.f32.s32 %v602
    %v605 = vshll.u32 %v604, 16
    %v606 = vadd.s32 %v605, %v603
    %v607 = vand.u32 %v592, 65535
    %v608 = vshrl.u32 %v592, 16
    %v609 = vcvt.s32.f32 %v607
    %v610 = vcvt.s32.f32 %v608
    %611 = vadd.xlane.f32.xlu0 %v609
    %v612 = vpop.xlane.xlu0 %611
    %613 = vadd.xlane.f32.xlu0 %v610
    %v614 = vpop.xlane.xlu0 %613
    %v615 = vcvt.f32.s32 %v612
    %v616 = vcvt.f32.s32 %v614
    %v617 = vshll.u32 %v616, 16
    %v618 = vadd.s32 %v617, %v615
    %v619 = vand.u32 %v593, 65535
    %v620 = vshrl.u32 %v593, 16
    %v621 = vcvt.s32.f32 %v619
    %v622 = vcvt.s32.f32 %v620
    %623 = vadd.xlane.f32.xlu0 %v621
    %v624 = vpop.xlane.xlu0 %623
    %625 = vadd.xlane.f32.xlu0 %v622
    %v626 = vpop.xlane.xlu0 %625
    %v627 = vcvt.f32.s32 %v624
    %v628 = vcvt.f32.s32 %v626
    %v629 = vshll.u32 %v628, 16
    %v630 = vadd.s32 %v629, %v627
    %v631 = vand.u32 %v594, 65535
    %v632 = vshrl.u32 %v594, 16
    %v633 = vcvt.s32.f32 %v631
    %v634 = vcvt.s32.f32 %v632
    %635 = vadd.xlane.f32.xlu0 %v633
    %v636 = vpop.xlane.xlu0 %635
    %637 = vadd.xlane.f32.xlu0 %v634
    %v638 = vpop.xlane.xlu0 %637
    %v639 = vcvt.f32.s32 %v636
    %v640 = vcvt.f32.s32 %v638
    %v641 = vshll.u32 %v640, 16
    %v642 = vadd.s32 %v641, %v639
    %vm643 = vcmp.ge.s32.totalorder %v606, %v180
    %vm644 = vcmp.ge.s32.totalorder %v618, %v182
    %vm645 = vcmp.ge.s32.totalorder %v630, %v184
    %vm646 = vcmp.ge.s32.totalorder %v642, %v186
    %v647 = vsel %vm643, %v571, %v567
    %v648 = vsel %vm644, %v572, %v568
    %v649 = vsel %vm645, %v573, %v569
    %v650 = vsel %vm646, %v574, %v570
    %v651 = vor.u32 %v647, 33554432
    %v652 = vor.u32 %v648, 33554432
    %v653 = vor.u32 %v649, 33554432
    %v654 = vor.u32 %v650, 33554432
    %655 = vset.pattern.permute.xlu0 0
    %656 = vperm.xlu0 %655, %v651
    %v657 = vpop.permute.xlu0 %656
    %658 = vset.pattern.permute.xlu0 0
    %659 = vperm.xlu0 %658, %v652
    %v660 = vpop.permute.xlu0 %659
    %661 = vset.pattern.permute.xlu0 0
    %662 = vperm.xlu0 %661, %v653
    %v663 = vpop.permute.xlu0 %662
    %664 = vset.pattern.permute.xlu0 0
    %665 = vperm.xlu0 %664, %v654
    %v666 = vpop.permute.xlu0 %665
    %vm667 = vcmp.ge.s32.totalorder %v115, %v657
    %vm668 = vcmp.ge.s32.totalorder %v116, %v660
    %vm669 = vcmp.ge.s32.totalorder %v117, %v663
    %vm670 = vcmp.ge.s32.totalorder %v118, %v666
    %v671 = vsel %vm667, 1, 0
    %v672 = vsel %vm668, 1, 0
    %v673 = vsel %vm669, 1, 0
    %v674 = vsel %vm670, 1, 0
    %v675 = vand.u32 %v671, 65535
    %v676 = vshrl.u32 %v671, 16
    %v677 = vcvt.s32.f32 %v675
    %v678 = vcvt.s32.f32 %v676
    %679 = vadd.xlane.f32.xlu0 %v677
    %v680 = vpop.xlane.xlu0 %679
    %681 = vadd.xlane.f32.xlu0 %v678
    %v682 = vpop.xlane.xlu0 %681
    %v683 = vcvt.f32.s32 %v680
    %v684 = vcvt.f32.s32 %v682
    %v685 = vshll.u32 %v684, 16
    %v686 = vadd.s32 %v685, %v683
    %v687 = vand.u32 %v672, 65535
    %v688 = vshrl.u32 %v672, 16
    %v689 = vcvt.s32.f32 %v687
    %v690 = vcvt.s32.f32 %v688
    %691 = vadd.xlane.f32.xlu0 %v689
    %v692 = vpop.xlane.xlu0 %691
    %693 = vadd.xlane.f32.xlu0 %v690
    %v694 = vpop.xlane.xlu0 %693
    %v695 = vcvt.f32.s32 %v692
    %v696 = vcvt.f32.s32 %v694
    %v697 = vshll.u32 %v696, 16
    %v698 = vadd.s32 %v697, %v695
    %v699 = vand.u32 %v673, 65535
    %v700 = vshrl.u32 %v673, 16
    %v701 = vcvt.s32.f32 %v699
    %v702 = vcvt.s32.f32 %v700
    %703 = vadd.xlane.f32.xlu0 %v701
    %v704 = vpop.xlane.xlu0 %703
    %705 = vadd.xlane.f32.xlu0 %v702
    %v706 = vpop.xlane.xlu0 %705
    %v707 = vcvt.f32.s32 %v704
    %v708 = vcvt.f32.s32 %v706
    %v709 = vshll.u32 %v708, 16
    %v710 = vadd.s32 %v709, %v707
    %v711 = vand.u32 %v674, 65535
    %v712 = vshrl.u32 %v674, 16
    %v713 = vcvt.s32.f32 %v711
    %v714 = vcvt.s32.f32 %v712
    %715 = vadd.xlane.f32.xlu0 %v713
    %v716 = vpop.xlane.xlu0 %715
    %717 = vadd.xlane.f32.xlu0 %v714
    %v718 = vpop.xlane.xlu0 %717
    %v719 = vcvt.f32.s32 %v716
    %v720 = vcvt.f32.s32 %v718
    %v721 = vshll.u32 %v720, 16
    %v722 = vadd.s32 %v721, %v719
    %vm723 = vcmp.ge.s32.totalorder %v686, %v180
    %vm724 = vcmp.ge.s32.totalorder %v698, %v182
    %vm725 = vcmp.ge.s32.totalorder %v710, %v184
    %vm726 = vcmp.ge.s32.totalorder %v722, %v186
    %v727 = vsel %vm723, %v651, %v647
    %v728 = vsel %vm724, %v652, %v648
    %v729 = vsel %vm725, %v653, %v649
    %v730 = vsel %vm726, %v654, %v650
    %v731 = vor.u32 %v727, 16777216
    %v732 = vor.u32 %v728, 16777216
    %v733 = vor.u32 %v729, 16777216
    %v734 = vor.u32 %v730, 16777216
    %735 = vset.pattern.permute.xlu0 0
    %736 = vperm.xlu0 %735, %v731
    %v737 = vpop.permute.xlu0 %736
    %738 = vset.pattern.permute.xlu0 0
    %739 = vperm.xlu0 %738, %v732
    %v740 = vpop.permute.xlu0 %739
    %741 = vset.pattern.permute.xlu0 0
    %742 = vperm.xlu0 %741, %v733
    %v743 = vpop.permute.xlu0 %742
    %744 = vset.pattern.permute.xlu0 0
    %745 = vperm.xlu0 %744, %v734
    %v746 = vpop.permute.xlu0 %745
    %vm747 = vcmp.ge.s32.totalorder %v115, %v737
    %vm748 = vcmp.ge.s32.totalorder %v116, %v740
    %vm749 = vcmp.ge.s32.totalorder %v117, %v743
    %vm750 = vcmp.ge.s32.totalorder %v118, %v746
    %v751 = vsel %vm747, 1, 0
    %v752 = vsel %vm748, 1, 0
    %v753 = vsel %vm749, 1, 0
    %v754 = vsel %vm750, 1, 0
    %v755 = vand.u32 %v751, 65535
    %v756 = vshrl.u32 %v751, 16
    %v757 = vcvt.s32.f32 %v755
    %v758 = vcvt.s32.f32 %v756
    %759 = vadd.xlane.f32.xlu0 %v757
    %v760 = vpop.xlane.xlu0 %759
    %761 = vadd.xlane.f32.xlu0 %v758
    %v762 = vpop.xlane.xlu0 %761
    %v763 = vcvt.f32.s32 %v760
    %v764 = vcvt.f32.s32 %v762
    %v765 = vshll.u32 %v764, 16
    %v766 = vadd.s32 %v765, %v763
    %v767 = vand.u32 %v752, 65535
    %v768 = vshrl.u32 %v752, 16
    %v769 = vcvt.s32.f32 %v767
    %v770 = vcvt.s32.f32 %v768
    %771 = vadd.xlane.f32.xlu0 %v769
    %v772 = vpop.xlane.xlu0 %771
    %773 = vadd.xlane.f32.xlu0 %v770
    %v774 = vpop.xlane.xlu0 %773
    %v775 = vcvt.f32.s32 %v772
    %v776 = vcvt.f32.s32 %v774
    %v777 = vshll.u32 %v776, 16
    %v778 = vadd.s32 %v777, %v775
    %v779 = vand.u32 %v753, 65535
    %v780 = vshrl.u32 %v753, 16
    %v781 = vcvt.s32.f32 %v779
    %v782 = vcvt.s32.f32 %v780
    %783 = vadd.xlane.f32.xlu0 %v781
    %v784 = vpop.xlane.xlu0 %783
    %785 = vadd.xlane.f32.xlu0 %v782
    %v786 = vpop.xlane.xlu0 %785
    %v787 = vcvt.f32.s32 %v784
    %v788 = vcvt.f32.s32 %v786
    %v789 = vshll.u32 %v788, 16
    %v790 = vadd.s32 %v789, %v787
    %v791 = vand.u32 %v754, 65535
    %v792 = vshrl.u32 %v754, 16
    %v793 = vcvt.s32.f32 %v791
    %v794 = vcvt.s32.f32 %v792
    %795 = vadd.xlane.f32.xlu0 %v793
    %v796 = vpop.xlane.xlu0 %795
    %797 = vadd.xlane.f32.xlu0 %v794
    %v798 = vpop.xlane.xlu0 %797
    %v799 = vcvt.f32.s32 %v796
    %v800 = vcvt.f32.s32 %v798
    %v801 = vshll.u32 %v800, 16
    %v802 = vadd.s32 %v801, %v799
    %vm803 = vcmp.ge.s32.totalorder %v766, %v180
    %vm804 = vcmp.ge.s32.totalorder %v778, %v182
    %vm805 = vcmp.ge.s32.totalorder %v790, %v184
    %vm806 = vcmp.ge.s32.totalorder %v802, %v186
    %v807 = vsel %vm803, %v731, %v727
    %v808 = vsel %vm804, %v732, %v728
    %v809 = vsel %vm805, %v733, %v729
    %v810 = vsel %vm806, %v734, %v730
    %v811 = vor.u32 %v807, 8388608
    %v812 = vor.u32 %v808, 8388608
    %v813 = vor.u32 %v809, 8388608
    %v814 = vor.u32 %v810, 8388608
    %815 = vset.pattern.permute.xlu0 0
    %816 = vperm.xlu0 %815, %v811
    %v817 = vpop.permute.xlu0 %816
    %818 = vset.pattern.permute.xlu0 0
    %819 = vperm.xlu0 %818, %v812
    %v820 = vpop.permute.xlu0 %819
    %821 = vset.pattern.permute.xlu0 0
    %822 = vperm.xlu0 %821, %v813
    %v823 = vpop.permute.xlu0 %822
    %824 = vset.pattern.permute.xlu0 0
    %825 = vperm.xlu0 %824, %v814
    %v826 = vpop.permute.xlu0 %825
    %vm827 = vcmp.ge.s32.totalorder %v115, %v817
    %vm828 = vcmp.ge.s32.totalorder %v116, %v820
    %vm829 = vcmp.ge.s32.totalorder %v117, %v823
    %vm830 = vcmp.ge.s32.totalorder %v118, %v826
    %v831 = vsel %vm827, 1, 0
    %v832 = vsel %vm828, 1, 0
    %v833 = vsel %vm829, 1, 0
    %v834 = vsel %vm830, 1, 0
    %v835 = vand.u32 %v831, 65535
    %v836 = vshrl.u32 %v831, 16
    %v837 = vcvt.s32.f32 %v835
    %v838 = vcvt.s32.f32 %v836
    %839 = vadd.xlane.f32.xlu0 %v837
    %v840 = vpop.xlane.xlu0 %839
    %841 = vadd.xlane.f32.xlu0 %v838
    %v842 = vpop.xlane.xlu0 %841
    %v843 = vcvt.f32.s32 %v840
    %v844 = vcvt.f32.s32 %v842
    %v845 = vshll.u32 %v844, 16
    %v846 = vadd.s32 %v845, %v843
    %v847 = vand.u32 %v832, 65535
    %v848 = vshrl.u32 %v832, 16
    %v849 = vcvt.s32.f32 %v847
    %v850 = vcvt.s32.f32 %v848
    %851 = vadd.xlane.f32.xlu0 %v849
    %v852 = vpop.xlane.xlu0 %851
    %853 = vadd.xlane.f32.xlu0 %v850
    %v854 = vpop.xlane.xlu0 %853
    %v855 = vcvt.f32.s32 %v852
    %v856 = vcvt.f32.s32 %v854
    %v857 = vshll.u32 %v856, 16
    %v858 = vadd.s32 %v857, %v855
    %v859 = vand.u32 %v833, 65535
    %v860 = vshrl.u32 %v833, 16
    %v861 = vcvt.s32.f32 %v859
    %v862 = vcvt.s32.f32 %v860
    %863 = vadd.xlane.f32.xlu0 %v861
    %v864 = vpop.xlane.xlu0 %863
    %865 = vadd.xlane.f32.xlu0 %v862
    %v866 = vpop.xlane.xlu0 %865
    %v867 = vcvt.f32.s32 %v864
    %v868 = vcvt.f32.s32 %v866
    %v869 = vshll.u32 %v868, 16
    %v870 = vadd.s32 %v869, %v867
    %v871 = vand.u32 %v834, 65535
    %v872 = vshrl.u32 %v834, 16
    %v873 = vcvt.s32.f32 %v871
    %v874 = vcvt.s32.f32 %v872
    %875 = vadd.xlane.f32.xlu0 %v873
    %v876 = vpop.xlane.xlu0 %875
    %877 = vadd.xlane.f32.xlu0 %v874
    %v878 = vpop.xlane.xlu0 %877
    %v879 = vcvt.f32.s32 %v876
    %v880 = vcvt.f32.s32 %v878
    %v881 = vshll.u32 %v880, 16
    %v882 = vadd.s32 %v881, %v879
    %vm883 = vcmp.ge.s32.totalorder %v846, %v180
    %vm884 = vcmp.ge.s32.totalorder %v858, %v182
    %vm885 = vcmp.ge.s32.totalorder %v870, %v184
    %vm886 = vcmp.ge.s32.totalorder %v882, %v186
    %v887 = vsel %vm883, %v811, %v807
    %v888 = vsel %vm884, %v812, %v808
    %v889 = vsel %vm885, %v813, %v809
    %v890 = vsel %vm886, %v814, %v810
    %v891 = vor.u32 %v887, 4194304
    %v892 = vor.u32 %v888, 4194304
    %v893 = vor.u32 %v889, 4194304
    %v894 = vor.u32 %v890, 4194304
    %895 = vset.pattern.permute.xlu0 0
    %896 = vperm.xlu0 %895, %v891
    %v897 = vpop.permute.xlu0 %896
    %898 = vset.pattern.permute.xlu0 0
    %899 = vperm.xlu0 %898, %v892
    %v900 = vpop.permute.xlu0 %899
    %901 = vset.pattern.permute.xlu0 0
    %902 = vperm.xlu0 %901, %v893
    %v903 = vpop.permute.xlu0 %902
    %904 = vset.pattern.permute.xlu0 0
    %905 = vperm.xlu0 %904, %v894
    %v906 = vpop.permute.xlu0 %905
    %vm907 = vcmp.ge.s32.totalorder %v115, %v897
    %vm908 = vcmp.ge.s32.totalorder %v116, %v900
    %vm909 = vcmp.ge.s32.totalorder %v117, %v903
    %vm910 = vcmp.ge.s32.totalorder %v118, %v906
    %v911 = vsel %vm907, 1, 0
    %v912 = vsel %vm908, 1, 0
    %v913 = vsel %vm909, 1, 0
    %v914 = vsel %vm910, 1, 0
    %v915 = vand.u32 %v911, 65535
    %v916 = vshrl.u32 %v911, 16
    %v917 = vcvt.s32.f32 %v915
    %v918 = vcvt.s32.f32 %v916
    %919 = vadd.xlane.f32.xlu0 %v917
    %v920 = vpop.xlane.xlu0 %919
    %921 = vadd.xlane.f32.xlu0 %v918
    %v922 = vpop.xlane.xlu0 %921
    %v923 = vcvt.f32.s32 %v920
    %v924 = vcvt.f32.s32 %v922
    %v925 = vshll.u32 %v924, 16
    %v926 = vadd.s32 %v925, %v923
    %v927 = vand.u32 %v912, 65535
    %v928 = vshrl.u32 %v912, 16
    %v929 = vcvt.s32.f32 %v927
    %v930 = vcvt.s32.f32 %v928
    %931 = vadd.xlane.f32.xlu0 %v929
    %v932 = vpop.xlane.xlu0 %931
    %933 = vadd.xlane.f32.xlu0 %v930
    %v934 = vpop.xlane.xlu0 %933
    %v935 = vcvt.f32.s32 %v932
    %v936 = vcvt.f32.s32 %v934
    %v937 = vshll.u32 %v936, 16
    %v938 = vadd.s32 %v937, %v935
    %v939 = vand.u32 %v913, 65535
    %v940 = vshrl.u32 %v913, 16
    %v941 = vcvt.s32.f32 %v939
    %v942 = vcvt.s32.f32 %v940
    %943 = vadd.xlane.f32.xlu0 %v941
    %v944 = vpop.xlane.xlu0 %943
    %945 = vadd.xlane.f32.xlu0 %v942
    %v946 = vpop.xlane.xlu0 %945
    %v947 = vcvt.f32.s32 %v944
    %v948 = vcvt.f32.s32 %v946
    %v949 = vshll.u32 %v948, 16
    %v950 = vadd.s32 %v949, %v947
    %v951 = vand.u32 %v914, 65535
    %v952 = vshrl.u32 %v914, 16
    %v953 = vcvt.s32.f32 %v951
    %v954 = vcvt.s32.f32 %v952
    %955 = vadd.xlane.f32.xlu0 %v953
    %v956 = vpop.xlane.xlu0 %955
    %957 = vadd.xlane.f32.xlu0 %v954
    %v958 = vpop.xlane.xlu0 %957
    %v959 = vcvt.f32.s32 %v956
    %v960 = vcvt.f32.s32 %v958
    %v961 = vshll.u32 %v960, 16
    %v962 = vadd.s32 %v961, %v959
    %vm963 = vcmp.ge.s32.totalorder %v926, %v180
    %vm964 = vcmp.ge.s32.totalorder %v938, %v182
    %vm965 = vcmp.ge.s32.totalorder %v950, %v184
    %vm966 = vcmp.ge.s32.totalorder %v962, %v186
    %v967 = vsel %vm963, %v891, %v887
    %v968 = vsel %vm964, %v892, %v888
    %v969 = vsel %vm965, %v893, %v889
    %v970 = vsel %vm966, %v894, %v890
    %v971 = vor.u32 %v967, 2097152
    %v972 = vor.u32 %v968, 2097152
    %v973 = vor.u32 %v969, 2097152
    %v974 = vor.u32 %v970, 2097152
    %975 = vset.pattern.permute.xlu0 0
    %976 = vperm.xlu0 %975, %v971
    %v977 = vpop.permute.xlu0 %976
    %978 = vset.pattern.permute.xlu0 0
    %979 = vperm.xlu0 %978, %v972
    %v980 = vpop.permute.xlu0 %979
    %981 = vset.pattern.permute.xlu0 0
    %982 = vperm.xlu0 %981, %v973
    %v983 = vpop.permute.xlu0 %982
    %984 = vset.pattern.permute.xlu0 0
    %985 = vperm.xlu0 %984, %v974
    %v986 = vpop.permute.xlu0 %985
    %vm987 = vcmp.ge.s32.totalorder %v115, %v977
    %vm988 = vcmp.ge.s32.totalorder %v116, %v980
    %vm989 = vcmp.ge.s32.totalorder %v117, %v983
    %vm990 = vcmp.ge.s32.totalorder %v118, %v986
    %v991 = vsel %vm987, 1, 0
    %v992 = vsel %vm988, 1, 0
    %v993 = vsel %vm989, 1, 0
    %v994 = vsel %vm990, 1, 0
    %v995 = vand.u32 %v991, 65535
    %v996 = vshrl.u32 %v991, 16
    %v997 = vcvt.s32.f32 %v995
    %v998 = vcvt.s32.f32 %v996
    %999 = vadd.xlane.f32.xlu0 %v997
    %v1000 = vpop.xlane.xlu0 %999
    %1001 = vadd.xlane.f32.xlu0 %v998
    %v1002 = vpop.xlane.xlu0 %1001
    %v1003 = vcvt.f32.s32 %v1000
    %v1004 = vcvt.f32.s32 %v1002
    %v1005 = vshll.u32 %v1004, 16
    %v1006 = vadd.s32 %v1005, %v1003
    %v1007 = vand.u32 %v992, 65535
    %v1008 = vshrl.u32 %v992, 16
    %v1009 = vcvt.s32.f32 %v1007
    %v1010 = vcvt.s32.f32 %v1008
    %1011 = vadd.xlane.f32.xlu0 %v1009
    %v1012 = vpop.xlane.xlu0 %1011
    %1013 = vadd.xlane.f32.xlu0 %v1010
    %v1014 = vpop.xlane.xlu0 %1013
    %v1015 = vcvt.f32.s32 %v1012
    %v1016 = vcvt.f32.s32 %v1014
    %v1017 = vshll.u32 %v1016, 16
    %v1018 = vadd.s32 %v1017, %v1015
    %v1019 = vand.u32 %v993, 65535
    %v1020 = vshrl.u32 %v993, 16
    %v1021 = vcvt.s32.f32 %v1019
    %v1022 = vcvt.s32.f32 %v1020
    %1023 = vadd.xlane.f32.xlu0 %v1021
    %v1024 = vpop.xlane.xlu0 %1023
    %1025 = vadd.xlane.f32.xlu0 %v1022
    %v1026 = vpop.xlane.xlu0 %1025
    %v1027 = vcvt.f32.s32 %v1024
    %v1028 = vcvt.f32.s32 %v1026
    %v1029 = vshll.u32 %v1028, 16
    %v1030 = vadd.s32 %v1029, %v1027
    %v1031 = vand.u32 %v994, 65535
    %v1032 = vshrl.u32 %v994, 16
    %v1033 = vcvt.s32.f32 %v1031
    %v1034 = vcvt.s32.f32 %v1032
    %1035 = vadd.xlane.f32.xlu0 %v1033
    %v1036 = vpop.xlane.xlu0 %1035
    %1037 = vadd.xlane.f32.xlu0 %v1034
    %v1038 = vpop.xlane.xlu0 %1037
    %v1039 = vcvt.f32.s32 %v1036
    %v1040 = vcvt.f32.s32 %v1038
    %v1041 = vshll.u32 %v1040, 16
    %v1042 = vadd.s32 %v1041, %v1039
    %vm1043 = vcmp.ge.s32.totalorder %v1006, %v180
    %vm1044 = vcmp.ge.s32.totalorder %v1018, %v182
    %vm1045 = vcmp.ge.s32.totalorder %v1030, %v184
    %vm1046 = vcmp.ge.s32.totalorder %v1042, %v186
    %v1047 = vsel %vm1043, %v971, %v967
    %v1048 = vsel %vm1044, %v972, %v968
    %v1049 = vsel %vm1045, %v973, %v969
    %v1050 = vsel %vm1046, %v974, %v970
    %v1051 = vor.u32 %v1047, 1048576
    %v1052 = vor.u32 %v1048, 1048576
    %v1053 = vor.u32 %v1049, 1048576
    %v1054 = vor.u32 %v1050, 1048576
    %1055 = vset.pattern.permute.xlu0 0
    %1056 = vperm.xlu0 %1055, %v1051
    %v1057 = vpop.permute.xlu0 %1056
    %1058 = vset.pattern.permute.xlu0 0
    %1059 = vperm.xlu0 %1058, %v1052
    %v1060 = vpop.permute.xlu0 %1059
    %1061 = vset.pattern.permute.xlu0 0
    %1062 = vperm.xlu0 %1061, %v1053
    %v1063 = vpop.permute.xlu0 %1062
    %1064 = vset.pattern.permute.xlu0 0
    %1065 = vperm.xlu0 %1064, %v1054
    %v1066 = vpop.permute.xlu0 %1065
    %vm1067 = vcmp.ge.s32.totalorder %v115, %v1057
    %vm1068 = vcmp.ge.s32.totalorder %v116, %v1060
    %vm1069 = vcmp.ge.s32.totalorder %v117, %v1063
    %vm1070 = vcmp.ge.s32.totalorder %v118, %v1066
    %v1071 = vsel %vm1067, 1, 0
    %v1072 = vsel %vm1068, 1, 0
    %v1073 = vsel %vm1069, 1, 0
    %v1074 = vsel %vm1070, 1, 0
    %v1075 = vand.u32 %v1071, 65535
    %v1076 = vshrl.u32 %v1071, 16
    %v1077 = vcvt.s32.f32 %v1075
    %v1078 = vcvt.s32.f32 %v1076
    %1079 = vadd.xlane.f32.xlu0 %v1077
    %v1080 = vpop.xlane.xlu0 %1079
    %1081 = vadd.xlane.f32.xlu0 %v1078
    %v1082 = vpop.xlane.xlu0 %1081
    %v1083 = vcvt.f32.s32 %v1080
    %v1084 = vcvt.f32.s32 %v1082
    %v1085 = vshll.u32 %v1084, 16
    %v1086 = vadd.s32 %v1085, %v1083
    %v1087 = vand.u32 %v1072, 65535
    %v1088 = vshrl.u32 %v1072, 16
    %v1089 = vcvt.s32.f32 %v1087
    %v1090 = vcvt.s32.f32 %v1088
    %1091 = vadd.xlane.f32.xlu0 %v1089
    %v1092 = vpop.xlane.xlu0 %1091
    %1093 = vadd.xlane.f32.xlu0 %v1090
    %v1094 = vpop.xlane.xlu0 %1093
    %v1095 = vcvt.f32.s32 %v1092
    %v1096 = vcvt.f32.s32 %v1094
    %v1097 = vshll.u32 %v1096, 16
    %v1098 = vadd.s32 %v1097, %v1095
    %v1099 = vand.u32 %v1073, 65535
    %v1100 = vshrl.u32 %v1073, 16
    %v1101 = vcvt.s32.f32 %v1099
    %v1102 = vcvt.s32.f32 %v1100
    %1103 = vadd.xlane.f32.xlu0 %v1101
    %v1104 = vpop.xlane.xlu0 %1103
    %1105 = vadd.xlane.f32.xlu0 %v1102
    %v1106 = vpop.xlane.xlu0 %1105
    %v1107 = vcvt.f32.s32 %v1104
    %v1108 = vcvt.f32.s32 %v1106
    %v1109 = vshll.u32 %v1108, 16
    %v1110 = vadd.s32 %v1109, %v1107
    %v1111 = vand.u32 %v1074, 65535
    %v1112 = vshrl.u32 %v1074, 16
    %v1113 = vcvt.s32.f32 %v1111
    %v1114 = vcvt.s32.f32 %v1112
    %1115 = vadd.xlane.f32.xlu0 %v1113
    %v1116 = vpop.xlane.xlu0 %1115
    %1117 = vadd.xlane.f32.xlu0 %v1114
    %v1118 = vpop.xlane.xlu0 %1117
    %v1119 = vcvt.f32.s32 %v1116
    %v1120 = vcvt.f32.s32 %v1118
    %v1121 = vshll.u32 %v1120, 16
    %v1122 = vadd.s32 %v1121, %v1119
    %vm1123 = vcmp.ge.s32.totalorder %v1086, %v180
    %vm1124 = vcmp.ge.s32.totalorder %v1098, %v182
    %vm1125 = vcmp.ge.s32.totalorder %v1110, %v184
    %vm1126 = vcmp.ge.s32.totalorder %v1122, %v186
    %v1127 = vsel %vm1123, %v1051, %v1047
    %v1128 = vsel %vm1124, %v1052, %v1048
    %v1129 = vsel %vm1125, %v1053, %v1049
    %v1130 = vsel %vm1126, %v1054, %v1050
    %v1131 = vor.u32 %v1127, 524288
    %v1132 = vor.u32 %v1128, 524288
    %v1133 = vor.u32 %v1129, 524288
    %v1134 = vor.u32 %v1130, 524288
    %1135 = vset.pattern.permute.xlu0 0
    %1136 = vperm.xlu0 %1135, %v1131
    %v1137 = vpop.permute.xlu0 %1136
    %1138 = vset.pattern.permute.xlu0 0
    %1139 = vperm.xlu0 %1138, %v1132
    %v1140 = vpop.permute.xlu0 %1139
    %1141 = vset.pattern.permute.xlu0 0
    %1142 = vperm.xlu0 %1141, %v1133
    %v1143 = vpop.permute.xlu0 %1142
    %1144 = vset.pattern.permute.xlu0 0
    %1145 = vperm.xlu0 %1144, %v1134
    %v1146 = vpop.permute.xlu0 %1145
    %vm1147 = vcmp.ge.s32.totalorder %v115, %v1137
    %vm1148 = vcmp.ge.s32.totalorder %v116, %v1140
    %vm1149 = vcmp.ge.s32.totalorder %v117, %v1143
    %vm1150 = vcmp.ge.s32.totalorder %v118, %v1146
    %v1151 = vsel %vm1147, 1, 0
    %v1152 = vsel %vm1148, 1, 0
    %v1153 = vsel %vm1149, 1, 0
    %v1154 = vsel %vm1150, 1, 0
    %v1155 = vand.u32 %v1151, 65535
    %v1156 = vshrl.u32 %v1151, 16
    %v1157 = vcvt.s32.f32 %v1155
    %v1158 = vcvt.s32.f32 %v1156
    %1159 = vadd.xlane.f32.xlu0 %v1157
    %v1160 = vpop.xlane.xlu0 %1159
    %1161 = vadd.xlane.f32.xlu0 %v1158
    %v1162 = vpop.xlane.xlu0 %1161
    %v1163 = vcvt.f32.s32 %v1160
    %v1164 = vcvt.f32.s32 %v1162
    %v1165 = vshll.u32 %v1164, 16
    %v1166 = vadd.s32 %v1165, %v1163
    %v1167 = vand.u32 %v1152, 65535
    %v1168 = vshrl.u32 %v1152, 16
    %v1169 = vcvt.s32.f32 %v1167
    %v1170 = vcvt.s32.f32 %v1168
    %1171 = vadd.xlane.f32.xlu0 %v1169
    %v1172 = vpop.xlane.xlu0 %1171
    %1173 = vadd.xlane.f32.xlu0 %v1170
    %v1174 = vpop.xlane.xlu0 %1173
    %v1175 = vcvt.f32.s32 %v1172
    %v1176 = vcvt.f32.s32 %v1174
    %v1177 = vshll.u32 %v1176, 16
    %v1178 = vadd.s32 %v1177, %v1175
    %v1179 = vand.u32 %v1153, 65535
    %v1180 = vshrl.u32 %v1153, 16
    %v1181 = vcvt.s32.f32 %v1179
    %v1182 = vcvt.s32.f32 %v1180
    %1183 = vadd.xlane.f32.xlu0 %v1181
    %v1184 = vpop.xlane.xlu0 %1183
    %1185 = vadd.xlane.f32.xlu0 %v1182
    %v1186 = vpop.xlane.xlu0 %1185
    %v1187 = vcvt.f32.s32 %v1184
    %v1188 = vcvt.f32.s32 %v1186
    %v1189 = vshll.u32 %v1188, 16
    %v1190 = vadd.s32 %v1189, %v1187
    %v1191 = vand.u32 %v1154, 65535
    %v1192 = vshrl.u32 %v1154, 16
    %v1193 = vcvt.s32.f32 %v1191
    %v1194 = vcvt.s32.f32 %v1192
    %1195 = vadd.xlane.f32.xlu0 %v1193
    %v1196 = vpop.xlane.xlu0 %1195
    %1197 = vadd.xlane.f32.xlu0 %v1194
    %v1198 = vpop.xlane.xlu0 %1197
    %v1199 = vcvt.f32.s32 %v1196
    %v1200 = vcvt.f32.s32 %v1198
    %v1201 = vshll.u32 %v1200, 16
    %v1202 = vadd.s32 %v1201, %v1199
    %vm1203 = vcmp.ge.s32.totalorder %v1166, %v180
    %vm1204 = vcmp.ge.s32.totalorder %v1178, %v182
    %vm1205 = vcmp.ge.s32.totalorder %v1190, %v184
    %vm1206 = vcmp.ge.s32.totalorder %v1202, %v186
    %v1207 = vsel %vm1203, %v1131, %v1127
    %v1208 = vsel %vm1204, %v1132, %v1128
    %v1209 = vsel %vm1205, %v1133, %v1129
    %v1210 = vsel %vm1206, %v1134, %v1130
    %v1211 = vor.u32 %v1207, 262144
    %v1212 = vor.u32 %v1208, 262144
    %v1213 = vor.u32 %v1209, 262144
    %v1214 = vor.u32 %v1210, 262144
    %1215 = vset.pattern.permute.xlu0 0
    %1216 = vperm.xlu0 %1215, %v1211
    %v1217 = vpop.permute.xlu0 %1216
    %1218 = vset.pattern.permute.xlu0 0
    %1219 = vperm.xlu0 %1218, %v1212
    %v1220 = vpop.permute.xlu0 %1219
    %1221 = vset.pattern.permute.xlu0 0
    %1222 = vperm.xlu0 %1221, %v1213
    %v1223 = vpop.permute.xlu0 %1222
    %1224 = vset.pattern.permute.xlu0 0
    %1225 = vperm.xlu0 %1224, %v1214
    %v1226 = vpop.permute.xlu0 %1225
    %vm1227 = vcmp.ge.s32.totalorder %v115, %v1217
    %vm1228 = vcmp.ge.s32.totalorder %v116, %v1220
    %vm1229 = vcmp.ge.s32.totalorder %v117, %v1223
    %vm1230 = vcmp.ge.s32.totalorder %v118, %v1226
    %v1231 = vsel %vm1227, 1, 0
    %v1232 = vsel %vm1228, 1, 0
    %v1233 = vsel %vm1229, 1, 0
    %v1234 = vsel %vm1230, 1, 0
    %v1235 = vand.u32 %v1231, 65535
    %v1236 = vshrl.u32 %v1231, 16
    %v1237 = vcvt.s32.f32 %v1235
    %v1238 = vcvt.s32.f32 %v1236
    %1239 = vadd.xlane.f32.xlu0 %v1237
    %v1240 = vpop.xlane.xlu0 %1239
    %1241 = vadd.xlane.f32.xlu0 %v1238
    %v1242 = vpop.xlane.xlu0 %1241
    %v1243 = vcvt.f32.s32 %v1240
    %v1244 = vcvt.f32.s32 %v1242
    %v1245 = vshll.u32 %v1244, 16
    %v1246 = vadd.s32 %v1245, %v1243
    %v1247 = vand.u32 %v1232, 65535
    %v1248 = vshrl.u32 %v1232, 16
    %v1249 = vcvt.s32.f32 %v1247
    %v1250 = vcvt.s32.f32 %v1248
    %1251 = vadd.xlane.f32.xlu0 %v1249
    %v1252 = vpop.xlane.xlu0 %1251
    %1253 = vadd.xlane.f32.xlu0 %v1250
    %v1254 = vpop.xlane.xlu0 %1253
    %v1255 = vcvt.f32.s32 %v1252
    %v1256 = vcvt.f32.s32 %v1254
    %v1257 = vshll.u32 %v1256, 16
    %v1258 = vadd.s32 %v1257, %v1255
    %v1259 = vand.u32 %v1233, 65535
    %v1260 = vshrl.u32 %v1233, 16
    %v1261 = vcvt.s32.f32 %v1259
    %v1262 = vcvt.s32.f32 %v1260
    %1263 = vadd.xlane.f32.xlu0 %v1261
    %v1264 = vpop.xlane.xlu0 %1263
    %1265 = vadd.xlane.f32.xlu0 %v1262
    %v1266 = vpop.xlane.xlu0 %1265
    %v1267 = vcvt.f32.s32 %v1264
    %v1268 = vcvt.f32.s32 %v1266
    %v1269 = vshll.u32 %v1268, 16
    %v1270 = vadd.s32 %v1269, %v1267
    %v1271 = vand.u32 %v1234, 65535
    %v1272 = vshrl.u32 %v1234, 16
    %v1273 = vcvt.s32.f32 %v1271
    %v1274 = vcvt.s32.f32 %v1272
    %1275 = vadd.xlane.f32.xlu0 %v1273
    %v1276 = vpop.xlane.xlu0 %1275
    %1277 = vadd.xlane.f32.xlu0 %v1274
    %v1278 = vpop.xlane.xlu0 %1277
    %v1279 = vcvt.f32.s32 %v1276
    %v1280 = vcvt.f32.s32 %v1278
    %v1281 = vshll.u32 %v1280, 16
    %v1282 = vadd.s32 %v1281, %v1279
    %vm1283 = vcmp.ge.s32.totalorder %v1246, %v180
    %vm1284 = vcmp.ge.s32.totalorder %v1258, %v182
    %vm1285 = vcmp.ge.s32.totalorder %v1270, %v184
    %vm1286 = vcmp.ge.s32.totalorder %v1282, %v186
    %v1287 = vsel %vm1283, %v1211, %v1207
    %v1288 = vsel %vm1284, %v1212, %v1208
    %v1289 = vsel %vm1285, %v1213, %v1209
    %v1290 = vsel %vm1286, %v1214, %v1210
    %v1291 = vor.u32 %v1287, 131072
    %v1292 = vor.u32 %v1288, 131072
    %v1293 = vor.u32 %v1289, 131072
    %v1294 = vor.u32 %v1290, 131072
    %1295 = vset.pattern.permute.xlu0 0
    %1296 = vperm.xlu0 %1295, %v1291
    %v1297 = vpop.permute.xlu0 %1296
    %1298 = vset.pattern.permute.xlu0 0
    %1299 = vperm.xlu0 %1298, %v1292
    %v1300 = vpop.permute.xlu0 %1299
    %1301 = vset.pattern.permute.xlu0 0
    %1302 = vperm.xlu0 %1301, %v1293
    %v1303 = vpop.permute.xlu0 %1302
    %1304 = vset.pattern.permute.xlu0 0
    %1305 = vperm.xlu0 %1304, %v1294
    %v1306 = vpop.permute.xlu0 %1305
    %vm1307 = vcmp.ge.s32.totalorder %v115, %v1297
    %vm1308 = vcmp.ge.s32.totalorder %v116, %v1300
    %vm1309 = vcmp.ge.s32.totalorder %v117, %v1303
    %vm1310 = vcmp.ge.s32.totalorder %v118, %v1306
    %v1311 = vsel %vm1307, 1, 0
    %v1312 = vsel %vm1308, 1, 0
    %v1313 = vsel %vm1309, 1, 0
    %v1314 = vsel %vm1310, 1, 0
    %v1315 = vand.u32 %v1311, 65535
    %v1316 = vshrl.u32 %v1311, 16
    %v1317 = vcvt.s32.f32 %v1315
    %v1318 = vcvt.s32.f32 %v1316
    %1319 = vadd.xlane.f32.xlu0 %v1317
    %v1320 = vpop.xlane.xlu0 %1319
    %1321 = vadd.xlane.f32.xlu0 %v1318
    %v1322 = vpop.xlane.xlu0 %1321
    %v1323 = vcvt.f32.s32 %v1320
    %v1324 = vcvt.f32.s32 %v1322
    %v1325 = vshll.u32 %v1324, 16
    %v1326 = vadd.s32 %v1325, %v1323
    %v1327 = vand.u32 %v1312, 65535
    %v1328 = vshrl.u32 %v1312, 16
    %v1329 = vcvt.s32.f32 %v1327
    %v1330 = vcvt.s32.f32 %v1328
    %1331 = vadd.xlane.f32.xlu0 %v1329
    %v1332 = vpop.xlane.xlu0 %1331
    %1333 = vadd.xlane.f32.xlu0 %v1330
    %v1334 = vpop.xlane.xlu0 %1333
    %v1335 = vcvt.f32.s32 %v1332
    %v1336 = vcvt.f32.s32 %v1334
    %v1337 = vshll.u32 %v1336, 16
    %v1338 = vadd.s32 %v1337, %v1335
    %v1339 = vand.u32 %v1313, 65535
    %v1340 = vshrl.u32 %v1313, 16
    %v1341 = vcvt.s32.f32 %v1339
    %v1342 = vcvt.s32.f32 %v1340
    %1343 = vadd.xlane.f32.xlu0 %v1341
    %v1344 = vpop.xlane.xlu0 %1343
    %1345 = vadd.xlane.f32.xlu0 %v1342
    %v1346 = vpop.xlane.xlu0 %1345
    %v1347 = vcvt.f32.s32 %v1344
    %v1348 = vcvt.f32.s32 %v1346
    %v1349 = vshll.u32 %v1348, 16
    %v1350 = vadd.s32 %v1349, %v1347
    %v1351 = vand.u32 %v1314, 65535
    %v1352 = vshrl.u32 %v1314, 16
    %v1353 = vcvt.s32.f32 %v1351
    %v1354 = vcvt.s32.f32 %v1352
    %1355 = vadd.xlane.f32.xlu0 %v1353
    %v1356 = vpop.xlane.xlu0 %1355
    %1357 = vadd.xlane.f32.xlu0 %v1354
    %v1358 = vpop.xlane.xlu0 %1357
    %v1359 = vcvt.f32.s32 %v1356
    %v1360 = vcvt.f32.s32 %v1358
    %v1361 = vshll.u32 %v1360, 16
    %v1362 = vadd.s32 %v1361, %v1359
    %vm1363 = vcmp.ge.s32.totalorder %v1326, %v180
    %vm1364 = vcmp.ge.s32.totalorder %v1338, %v182
    %vm1365 = vcmp.ge.s32.totalorder %v1350, %v184
    %vm1366 = vcmp.ge.s32.totalorder %v1362, %v186
    %v1367 = vsel %vm1363, %v1291, %v1287
    %v1368 = vsel %vm1364, %v1292, %v1288
    %v1369 = vsel %vm1365, %v1293, %v1289
    %v1370 = vsel %vm1366, %v1294, %v1290
    %v1371 = vor.u32 %v1367, 65536
    %v1372 = vor.u32 %v1368, 65536
    %v1373 = vor.u32 %v1369, 65536
    %v1374 = vor.u32 %v1370, 65536
    %1375 = vset.pattern.permute.xlu0 0
    %1376 = vperm.xlu0 %1375, %v1371
    %v1377 = vpop.permute.xlu0 %1376
    %1378 = vset.pattern.permute.xlu0 0
    %1379 = vperm.xlu0 %1378, %v1372
    %v1380 = vpop.permute.xlu0 %1379
    %1381 = vset.pattern.permute.xlu0 0
    %1382 = vperm.xlu0 %1381, %v1373
    %v1383 = vpop.permute.xlu0 %1382
    %1384 = vset.pattern.permute.xlu0 0
    %1385 = vperm.xlu0 %1384, %v1374
    %v1386 = vpop.permute.xlu0 %1385
    %vm1387 = vcmp.ge.s32.totalorder %v115, %v1377
    %vm1388 = vcmp.ge.s32.totalorder %v116, %v1380
    %vm1389 = vcmp.ge.s32.totalorder %v117, %v1383
    %vm1390 = vcmp.ge.s32.totalorder %v118, %v1386
    %v1391 = vsel %vm1387, 1, 0
    %v1392 = vsel %vm1388, 1, 0
    %v1393 = vsel %vm1389, 1, 0
    %v1394 = vsel %vm1390, 1, 0
    %v1395 = vand.u32 %v1391, 65535
    %v1396 = vshrl.u32 %v1391, 16
    %v1397 = vcvt.s32.f32 %v1395
    %v1398 = vcvt.s32.f32 %v1396
    %1399 = vadd.xlane.f32.xlu0 %v1397
    %v1400 = vpop.xlane.xlu0 %1399
    %1401 = vadd.xlane.f32.xlu0 %v1398
    %v1402 = vpop.xlane.xlu0 %1401
    %v1403 = vcvt.f32.s32 %v1400
    %v1404 = vcvt.f32.s32 %v1402
    %v1405 = vshll.u32 %v1404, 16
    %v1406 = vadd.s32 %v1405, %v1403
    %v1407 = vand.u32 %v1392, 65535
    %v1408 = vshrl.u32 %v1392, 16
    %v1409 = vcvt.s32.f32 %v1407
    %v1410 = vcvt.s32.f32 %v1408
    %1411 = vadd.xlane.f32.xlu0 %v1409
    %v1412 = vpop.xlane.xlu0 %1411
    %1413 = vadd.xlane.f32.xlu0 %v1410
    %v1414 = vpop.xlane.xlu0 %1413
    %v1415 = vcvt.f32.s32 %v1412
    %v1416 = vcvt.f32.s32 %v1414
    %v1417 = vshll.u32 %v1416, 16
    %v1418 = vadd.s32 %v1417, %v1415
    %v1419 = vand.u32 %v1393, 65535
    %v1420 = vshrl.u32 %v1393, 16
    %v1421 = vcvt.s32.f32 %v1419
    %v1422 = vcvt.s32.f32 %v1420
    %1423 = vadd.xlane.f32.xlu0 %v1421
    %v1424 = vpop.xlane.xlu0 %1423
    %1425 = vadd.xlane.f32.xlu0 %v1422
    %v1426 = vpop.xlane.xlu0 %1425
    %v1427 = vcvt.f32.s32 %v1424
    %v1428 = vcvt.f32.s32 %v1426
    %v1429 = vshll.u32 %v1428, 16
    %v1430 = vadd.s32 %v1429, %v1427
    %v1431 = vand.u32 %v1394, 65535
    %v1432 = vshrl.u32 %v1394, 16
    %v1433 = vcvt.s32.f32 %v1431
    %v1434 = vcvt.s32.f32 %v1432
    %1435 = vadd.xlane.f32.xlu0 %v1433
    %v1436 = vpop.xlane.xlu0 %1435
    %1437 = vadd.xlane.f32.xlu0 %v1434
    %v1438 = vpop.xlane.xlu0 %1437
    %v1439 = vcvt.f32.s32 %v1436
    %v1440 = vcvt.f32.s32 %v1438
    %v1441 = vshll.u32 %v1440, 16
    %v1442 = vadd.s32 %v1441, %v1439
    %vm1443 = vcmp.ge.s32.totalorder %v1406, %v180
    %vm1444 = vcmp.ge.s32.totalorder %v1418, %v182
    %vm1445 = vcmp.ge.s32.totalorder %v1430, %v184
    %vm1446 = vcmp.ge.s32.totalorder %v1442, %v186
    %v1447 = vsel %vm1443, %v1371, %v1367
    %v1448 = vsel %vm1444, %v1372, %v1368
    %v1449 = vsel %vm1445, %v1373, %v1369
    %v1450 = vsel %vm1446, %v1374, %v1370
    %v1451 = vor.u32 %v1447, 32768
    %v1452 = vor.u32 %v1448, 32768
    %v1453 = vor.u32 %v1449, 32768
    %v1454 = vor.u32 %v1450, 32768
    %1455 = vset.pattern.permute.xlu0 0
    %1456 = vperm.xlu0 %1455, %v1451
    %v1457 = vpop.permute.xlu0 %1456
    %1458 = vset.pattern.permute.xlu0 0
    %1459 = vperm.xlu0 %1458, %v1452
    %v1460 = vpop.permute.xlu0 %1459
    %1461 = vset.pattern.permute.xlu0 0
    %1462 = vperm.xlu0 %1461, %v1453
    %v1463 = vpop.permute.xlu0 %1462
    %1464 = vset.pattern.permute.xlu0 0
    %1465 = vperm.xlu0 %1464, %v1454
    %v1466 = vpop.permute.xlu0 %1465
    %vm1467 = vcmp.ge.s32.totalorder %v115, %v1457
    %vm1468 = vcmp.ge.s32.totalorder %v116, %v1460
    %vm1469 = vcmp.ge.s32.totalorder %v117, %v1463
    %vm1470 = vcmp.ge.s32.totalorder %v118, %v1466
    %v1471 = vsel %vm1467, 1, 0
    %v1472 = vsel %vm1468, 1, 0
    %v1473 = vsel %vm1469, 1, 0
    %v1474 = vsel %vm1470, 1, 0
    %v1475 = vand.u32 %v1471, 65535
    %v1476 = vshrl.u32 %v1471, 16
    %v1477 = vcvt.s32.f32 %v1475
    %v1478 = vcvt.s32.f32 %v1476
    %1479 = vadd.xlane.f32.xlu0 %v1477
    %v1480 = vpop.xlane.xlu0 %1479
    %1481 = vadd.xlane.f32.xlu0 %v1478
    %v1482 = vpop.xlane.xlu0 %1481
    %v1483 = vcvt.f32.s32 %v1480
    %v1484 = vcvt.f32.s32 %v1482
    %v1485 = vshll.u32 %v1484, 16
    %v1486 = vadd.s32 %v1485, %v1483
    %v1487 = vand.u32 %v1472, 65535
    %v1488 = vshrl.u32 %v1472, 16
    %v1489 = vcvt.s32.f32 %v1487
    %v1490 = vcvt.s32.f32 %v1488
    %1491 = vadd.xlane.f32.xlu0 %v1489
    %v1492 = vpop.xlane.xlu0 %1491
    %1493 = vadd.xlane.f32.xlu0 %v1490
    %v1494 = vpop.xlane.xlu0 %1493
    %v1495 = vcvt.f32.s32 %v1492
    %v1496 = vcvt.f32.s32 %v1494
    %v1497 = vshll.u32 %v1496, 16
    %v1498 = vadd.s32 %v1497, %v1495
    %v1499 = vand.u32 %v1473, 65535
    %v1500 = vshrl.u32 %v1473, 16
    %v1501 = vcvt.s32.f32 %v1499
    %v1502 = vcvt.s32.f32 %v1500
    %1503 = vadd.xlane.f32.xlu0 %v1501
    %v1504 = vpop.xlane.xlu0 %1503
    %1505 = vadd.xlane.f32.xlu0 %v1502
    %v1506 = vpop.xlane.xlu0 %1505
    %v1507 = vcvt.f32.s32 %v1504
    %v1508 = vcvt.f32.s32 %v1506
    %v1509 = vshll.u32 %v1508, 16
    %v1510 = vadd.s32 %v1509, %v1507
    %v1511 = vand.u32 %v1474, 65535
    %v1512 = vshrl.u32 %v1474, 16
    %v1513 = vcvt.s32.f32 %v1511
    %v1514 = vcvt.s32.f32 %v1512
    %1515 = vadd.xlane.f32.xlu0 %v1513
    %v1516 = vpop.xlane.xlu0 %1515
    %1517 = vadd.xlane.f32.xlu0 %v1514
    %v1518 = vpop.xlane.xlu0 %1517
    %v1519 = vcvt.f32.s32 %v1516
    %v1520 = vcvt.f32.s32 %v1518
    %v1521 = vshll.u32 %v1520, 16
    %v1522 = vadd.s32 %v1521, %v1519
    %vm1523 = vcmp.ge.s32.totalorder %v1486, %v180
    %vm1524 = vcmp.ge.s32.totalorder %v1498, %v182
    %vm1525 = vcmp.ge.s32.totalorder %v1510, %v184
    %vm1526 = vcmp.ge.s32.totalorder %v1522, %v186
    %v1527 = vsel %vm1523, %v1451, %v1447
    %v1528 = vsel %vm1524, %v1452, %v1448
    %v1529 = vsel %vm1525, %v1453, %v1449
    %v1530 = vsel %vm1526, %v1454, %v1450
    %v1531 = vor.u32 %v1527, 16384
    %v1532 = vor.u32 %v1528, 16384
    %v1533 = vor.u32 %v1529, 16384
    %v1534 = vor.u32 %v1530, 16384
    %1535 = vset.pattern.permute.xlu0 0
    %1536 = vperm.xlu0 %1535, %v1531
    %v1537 = vpop.permute.xlu0 %1536
    %1538 = vset.pattern.permute.xlu0 0
    %1539 = vperm.xlu0 %1538, %v1532
    %v1540 = vpop.permute.xlu0 %1539
    %1541 = vset.pattern.permute.xlu0 0
    %1542 = vperm.xlu0 %1541, %v1533
    %v1543 = vpop.permute.xlu0 %1542
    %1544 = vset.pattern.permute.xlu0 0
    %1545 = vperm.xlu0 %1544, %v1534
    %v1546 = vpop.permute.xlu0 %1545
    %vm1547 = vcmp.ge.s32.totalorder %v115, %v1537
    %vm1548 = vcmp.ge.s32.totalorder %v116, %v1540
    %vm1549 = vcmp.ge.s32.totalorder %v117, %v1543
    %vm1550 = vcmp.ge.s32.totalorder %v118, %v1546
    %v1551 = vsel %vm1547, 1, 0
    %v1552 = vsel %vm1548, 1, 0
    %v1553 = vsel %vm1549, 1, 0
    %v1554 = vsel %vm1550, 1, 0
    %v1555 = vand.u32 %v1551, 65535
    %v1556 = vshrl.u32 %v1551, 16
    %v1557 = vcvt.s32.f32 %v1555
    %v1558 = vcvt.s32.f32 %v1556
    %1559 = vadd.xlane.f32.xlu0 %v1557
    %v1560 = vpop.xlane.xlu0 %1559
    %1561 = vadd.xlane.f32.xlu0 %v1558
    %v1562 = vpop.xlane.xlu0 %1561
    %v1563 = vcvt.f32.s32 %v1560
    %v1564 = vcvt.f32.s32 %v1562
    %v1565 = vshll.u32 %v1564, 16
    %v1566 = vadd.s32 %v1565, %v1563
    %v1567 = vand.u32 %v1552, 65535
    %v1568 = vshrl.u32 %v1552, 16
    %v1569 = vcvt.s32.f32 %v1567
    %v1570 = vcvt.s32.f32 %v1568
    %1571 = vadd.xlane.f32.xlu0 %v1569
    %v1572 = vpop.xlane.xlu0 %1571
    %1573 = vadd.xlane.f32.xlu0 %v1570
    %v1574 = vpop.xlane.xlu0 %1573
    %v1575 = vcvt.f32.s32 %v1572
    %v1576 = vcvt.f32.s32 %v1574
    %v1577 = vshll.u32 %v1576, 16
    %v1578 = vadd.s32 %v1577, %v1575
    %v1579 = vand.u32 %v1553, 65535
    %v1580 = vshrl.u32 %v1553, 16
    %v1581 = vcvt.s32.f32 %v1579
    %v1582 = vcvt.s32.f32 %v1580
    %1583 = vadd.xlane.f32.xlu0 %v1581
    %v1584 = vpop.xlane.xlu0 %1583
    %1585 = vadd.xlane.f32.xlu0 %v1582
    %v1586 = vpop.xlane.xlu0 %1585
    %v1587 = vcvt.f32.s32 %v1584
    %v1588 = vcvt.f32.s32 %v1586
    %v1589 = vshll.u32 %v1588, 16
    %v1590 = vadd.s32 %v1589, %v1587
    %v1591 = vand.u32 %v1554, 65535
    %v1592 = vshrl.u32 %v1554, 16
    %v1593 = vcvt.s32.f32 %v1591
    %v1594 = vcvt.s32.f32 %v1592
    %1595 = vadd.xlane.f32.xlu0 %v1593
    %v1596 = vpop.xlane.xlu0 %1595
    %1597 = vadd.xlane.f32.xlu0 %v1594
    %v1598 = vpop.xlane.xlu0 %1597
    %v1599 = vcvt.f32.s32 %v1596
    %v1600 = vcvt.f32.s32 %v1598
    %v1601 = vshll.u32 %v1600, 16
    %v1602 = vadd.s32 %v1601, %v1599
    %vm1603 = vcmp.ge.s32.totalorder %v1566, %v180
    %vm1604 = vcmp.ge.s32.totalorder %v1578, %v182
    %vm1605 = vcmp.ge.s32.totalorder %v1590, %v184
    %vm1606 = vcmp.ge.s32.totalorder %v1602, %v186
    %v1607 = vsel %vm1603, %v1531, %v1527
    %v1608 = vsel %vm1604, %v1532, %v1528
    %v1609 = vsel %vm1605, %v1533, %v1529
    %v1610 = vsel %vm1606, %v1534, %v1530
    %v1611 = vor.u32 %v1607, 8192
    %v1612 = vor.u32 %v1608, 8192
    %v1613 = vor.u32 %v1609, 8192
    %v1614 = vor.u32 %v1610, 8192
    %1615 = vset.pattern.permute.xlu0 0
    %1616 = vperm.xlu0 %1615, %v1611
    %v1617 = vpop.permute.xlu0 %1616
    %1618 = vset.pattern.permute.xlu0 0
    %1619 = vperm.xlu0 %1618, %v1612
    %v1620 = vpop.permute.xlu0 %1619
    %1621 = vset.pattern.permute.xlu0 0
    %1622 = vperm.xlu0 %1621, %v1613
    %v1623 = vpop.permute.xlu0 %1622
    %1624 = vset.pattern.permute.xlu0 0
    %1625 = vperm.xlu0 %1624, %v1614
    %v1626 = vpop.permute.xlu0 %1625
    %vm1627 = vcmp.ge.s32.totalorder %v115, %v1617
    %vm1628 = vcmp.ge.s32.totalorder %v116, %v1620
    %vm1629 = vcmp.ge.s32.totalorder %v117, %v1623
    %vm1630 = vcmp.ge.s32.totalorder %v118, %v1626
    %v1631 = vsel %vm1627, 1, 0
    %v1632 = vsel %vm1628, 1, 0
    %v1633 = vsel %vm1629, 1, 0
    %v1634 = vsel %vm1630, 1, 0
    %v1635 = vand.u32 %v1631, 65535
    %v1636 = vshrl.u32 %v1631, 16
    %v1637 = vcvt.s32.f32 %v1635
    %v1638 = vcvt.s32.f32 %v1636
    %1639 = vadd.xlane.f32.xlu0 %v1637
    %v1640 = vpop.xlane.xlu0 %1639
    %1641 = vadd.xlane.f32.xlu0 %v1638
    %v1642 = vpop.xlane.xlu0 %1641
    %v1643 = vcvt.f32.s32 %v1640
    %v1644 = vcvt.f32.s32 %v1642
    %v1645 = vshll.u32 %v1644, 16
    %v1646 = vadd.s32 %v1645, %v1643
    %v1647 = vand.u32 %v1632, 65535
    %v1648 = vshrl.u32 %v1632, 16
    %v1649 = vcvt.s32.f32 %v1647
    %v1650 = vcvt.s32.f32 %v1648
    %1651 = vadd.xlane.f32.xlu0 %v1649
    %v1652 = vpop.xlane.xlu0 %1651
    %1653 = vadd.xlane.f32.xlu0 %v1650
    %v1654 = vpop.xlane.xlu0 %1653
    %v1655 = vcvt.f32.s32 %v1652
    %v1656 = vcvt.f32.s32 %v1654
    %v1657 = vshll.u32 %v1656, 16
    %v1658 = vadd.s32 %v1657, %v1655
    %v1659 = vand.u32 %v1633, 65535
    %v1660 = vshrl.u32 %v1633, 16
    %v1661 = vcvt.s32.f32 %v1659
    %v1662 = vcvt.s32.f32 %v1660
    %1663 = vadd.xlane.f32.xlu0 %v1661
    %v1664 = vpop.xlane.xlu0 %1663
    %1665 = vadd.xlane.f32.xlu0 %v1662
    %v1666 = vpop.xlane.xlu0 %1665
    %v1667 = vcvt.f32.s32 %v1664
    %v1668 = vcvt.f32.s32 %v1666
    %v1669 = vshll.u32 %v1668, 16
    %v1670 = vadd.s32 %v1669, %v1667
    %v1671 = vand.u32 %v1634, 65535
    %v1672 = vshrl.u32 %v1634, 16
    %v1673 = vcvt.s32.f32 %v1671
    %v1674 = vcvt.s32.f32 %v1672
    %1675 = vadd.xlane.f32.xlu0 %v1673
    %v1676 = vpop.xlane.xlu0 %1675
    %1677 = vadd.xlane.f32.xlu0 %v1674
    %v1678 = vpop.xlane.xlu0 %1677
    %v1679 = vcvt.f32.s32 %v1676
    %v1680 = vcvt.f32.s32 %v1678
    %v1681 = vshll.u32 %v1680, 16
    %v1682 = vadd.s32 %v1681, %v1679
    %vm1683 = vcmp.ge.s32.totalorder %v1646, %v180
    %vm1684 = vcmp.ge.s32.totalorder %v1658, %v182
    %vm1685 = vcmp.ge.s32.totalorder %v1670, %v184
    %vm1686 = vcmp.ge.s32.totalorder %v1682, %v186
    %v1687 = vsel %vm1683, %v1611, %v1607
    %v1688 = vsel %vm1684, %v1612, %v1608
    %v1689 = vsel %vm1685, %v1613, %v1609
    %v1690 = vsel %vm1686, %v1614, %v1610
    %v1691 = vor.u32 %v1687, 4096
    %v1692 = vor.u32 %v1688, 4096
    %v1693 = vor.u32 %v1689, 4096
    %v1694 = vor.u32 %v1690, 4096
    %1695 = vset.pattern.permute.xlu0 0
    %1696 = vperm.xlu0 %1695, %v1691
    %v1697 = vpop.permute.xlu0 %1696
    %1698 = vset.pattern.permute.xlu0 0
    %1699 = vperm.xlu0 %1698, %v1692
    %v1700 = vpop.permute.xlu0 %1699
    %1701 = vset.pattern.permute.xlu0 0
    %1702 = vperm.xlu0 %1701, %v1693
    %v1703 = vpop.permute.xlu0 %1702
    %1704 = vset.pattern.permute.xlu0 0
    %1705 = vperm.xlu0 %1704, %v1694
    %v1706 = vpop.permute.xlu0 %1705
    %vm1707 = vcmp.ge.s32.totalorder %v115, %v1697
    %vm1708 = vcmp.ge.s32.totalorder %v116, %v1700
    %vm1709 = vcmp.ge.s32.totalorder %v117, %v1703
    %vm1710 = vcmp.ge.s32.totalorder %v118, %v1706
    %v1711 = vsel %vm1707, 1, 0
    %v1712 = vsel %vm1708, 1, 0
    %v1713 = vsel %vm1709, 1, 0
    %v1714 = vsel %vm1710, 1, 0
    %v1715 = vand.u32 %v1711, 65535
    %v1716 = vshrl.u32 %v1711, 16
    %v1717 = vcvt.s32.f32 %v1715
    %v1718 = vcvt.s32.f32 %v1716
    %1719 = vadd.xlane.f32.xlu0 %v1717
    %v1720 = vpop.xlane.xlu0 %1719
    %1721 = vadd.xlane.f32.xlu0 %v1718
    %v1722 = vpop.xlane.xlu0 %1721
    %v1723 = vcvt.f32.s32 %v1720
    %v1724 = vcvt.f32.s32 %v1722
    %v1725 = vshll.u32 %v1724, 16
    %v1726 = vadd.s32 %v1725, %v1723
    %v1727 = vand.u32 %v1712, 65535
    %v1728 = vshrl.u32 %v1712, 16
    %v1729 = vcvt.s32.f32 %v1727
    %v1730 = vcvt.s32.f32 %v1728
    %1731 = vadd.xlane.f32.xlu0 %v1729
    %v1732 = vpop.xlane.xlu0 %1731
    %1733 = vadd.xlane.f32.xlu0 %v1730
    %v1734 = vpop.xlane.xlu0 %1733
    %v1735 = vcvt.f32.s32 %v1732
    %v1736 = vcvt.f32.s32 %v1734
    %v1737 = vshll.u32 %v1736, 16
    %v1738 = vadd.s32 %v1737, %v1735
    %v1739 = vand.u32 %v1713, 65535
    %v1740 = vshrl.u32 %v1713, 16
    %v1741 = vcvt.s32.f32 %v1739
    %v1742 = vcvt.s32.f32 %v1740
    %1743 = vadd.xlane.f32.xlu0 %v1741
    %v1744 = vpop.xlane.xlu0 %1743
    %1745 = vadd.xlane.f32.xlu0 %v1742
    %v1746 = vpop.xlane.xlu0 %1745
    %v1747 = vcvt.f32.s32 %v1744
    %v1748 = vcvt.f32.s32 %v1746
    %v1749 = vshll.u32 %v1748, 16
    %v1750 = vadd.s32 %v1749, %v1747
    %v1751 = vand.u32 %v1714, 65535
    %v1752 = vshrl.u32 %v1714, 16
    %v1753 = vcvt.s32.f32 %v1751
    %v1754 = vcvt.s32.f32 %v1752
    %1755 = vadd.xlane.f32.xlu0 %v1753
    %v1756 = vpop.xlane.xlu0 %1755
    %1757 = vadd.xlane.f32.xlu0 %v1754
    %v1758 = vpop.xlane.xlu0 %1757
    %v1759 = vcvt.f32.s32 %v1756
    %v1760 = vcvt.f32.s32 %v1758
    %v1761 = vshll.u32 %v1760, 16
    %v1762 = vadd.s32 %v1761, %v1759
    %vm1763 = vcmp.ge.s32.totalorder %v1726, %v180
    %vm1764 = vcmp.ge.s32.totalorder %v1738, %v182
    %vm1765 = vcmp.ge.s32.totalorder %v1750, %v184
    %vm1766 = vcmp.ge.s32.totalorder %v1762, %v186
    %v1767 = vsel %vm1763, %v1691, %v1687
    %v1768 = vsel %vm1764, %v1692, %v1688
    %v1769 = vsel %vm1765, %v1693, %v1689
    %v1770 = vsel %vm1766, %v1694, %v1690
    %v1771 = vor.u32 %v1767, 2048
    %v1772 = vor.u32 %v1768, 2048
    %v1773 = vor.u32 %v1769, 2048
    %v1774 = vor.u32 %v1770, 2048
    %1775 = vset.pattern.permute.xlu0 0
    %1776 = vperm.xlu0 %1775, %v1771
    %v1777 = vpop.permute.xlu0 %1776
    %1778 = vset.pattern.permute.xlu0 0
    %1779 = vperm.xlu0 %1778, %v1772
    %v1780 = vpop.permute.xlu0 %1779
    %1781 = vset.pattern.permute.xlu0 0
    %1782 = vperm.xlu0 %1781, %v1773
    %v1783 = vpop.permute.xlu0 %1782
    %1784 = vset.pattern.permute.xlu0 0
    %1785 = vperm.xlu0 %1784, %v1774
    %v1786 = vpop.permute.xlu0 %1785
    %vm1787 = vcmp.ge.s32.totalorder %v115, %v1777
    %vm1788 = vcmp.ge.s32.totalorder %v116, %v1780
    %vm1789 = vcmp.ge.s32.totalorder %v117, %v1783
    %vm1790 = vcmp.ge.s32.totalorder %v118, %v1786
    %v1791 = vsel %vm1787, 1, 0
    %v1792 = vsel %vm1788, 1, 0
    %v1793 = vsel %vm1789, 1, 0
    %v1794 = vsel %vm1790, 1, 0
    %v1795 = vand.u32 %v1791, 65535
    %v1796 = vshrl.u32 %v1791, 16
    %v1797 = vcvt.s32.f32 %v1795
    %v1798 = vcvt.s32.f32 %v1796
    %1799 = vadd.xlane.f32.xlu0 %v1797
    %v1800 = vpop.xlane.xlu0 %1799
    %1801 = vadd.xlane.f32.xlu0 %v1798
    %v1802 = vpop.xlane.xlu0 %1801
    %v1803 = vcvt.f32.s32 %v1800
    %v1804 = vcvt.f32.s32 %v1802
    %v1805 = vshll.u32 %v1804, 16
    %v1806 = vadd.s32 %v1805, %v1803
    %v1807 = vand.u32 %v1792, 65535
    %v1808 = vshrl.u32 %v1792, 16
    %v1809 = vcvt.s32.f32 %v1807
    %v1810 = vcvt.s32.f32 %v1808
    %1811 = vadd.xlane.f32.xlu0 %v1809
    %v1812 = vpop.xlane.xlu0 %1811
    %1813 = vadd.xlane.f32.xlu0 %v1810
    %v1814 = vpop.xlane.xlu0 %1813
    %v1815 = vcvt.f32.s32 %v1812
    %v1816 = vcvt.f32.s32 %v1814
    %v1817 = vshll.u32 %v1816, 16
    %v1818 = vadd.s32 %v1817, %v1815
    %v1819 = vand.u32 %v1793, 65535
    %v1820 = vshrl.u32 %v1793, 16
    %v1821 = vcvt.s32.f32 %v1819
    %v1822 = vcvt.s32.f32 %v1820
    %1823 = vadd.xlane.f32.xlu0 %v1821
    %v1824 = vpop.xlane.xlu0 %1823
    %1825 = vadd.xlane.f32.xlu0 %v1822
    %v1826 = vpop.xlane.xlu0 %1825
    %v1827 = vcvt.f32.s32 %v1824
    %v1828 = vcvt.f32.s32 %v1826
    %v1829 = vshll.u32 %v1828, 16
    %v1830 = vadd.s32 %v1829, %v1827
    %v1831 = vand.u32 %v1794, 65535
    %v1832 = vshrl.u32 %v1794, 16
    %v1833 = vcvt.s32.f32 %v1831
    %v1834 = vcvt.s32.f32 %v1832
    %1835 = vadd.xlane.f32.xlu0 %v1833
    %v1836 = vpop.xlane.xlu0 %1835
    %1837 = vadd.xlane.f32.xlu0 %v1834
    %v1838 = vpop.xlane.xlu0 %1837
    %v1839 = vcvt.f32.s32 %v1836
    %v1840 = vcvt.f32.s32 %v1838
    %v1841 = vshll.u32 %v1840, 16
    %v1842 = vadd.s32 %v1841, %v1839
    %vm1843 = vcmp.ge.s32.totalorder %v1806, %v180
    %vm1844 = vcmp.ge.s32.totalorder %v1818, %v182
    %vm1845 = vcmp.ge.s32.totalorder %v1830, %v184
    %vm1846 = vcmp.ge.s32.totalorder %v1842, %v186
    %v1847 = vsel %vm1843, %v1771, %v1767
    %v1848 = vsel %vm1844, %v1772, %v1768
    %v1849 = vsel %vm1845, %v1773, %v1769
    %v1850 = vsel %vm1846, %v1774, %v1770
    %v1851 = vor.u32 %v1847, 1024
    %v1852 = vor.u32 %v1848, 1024
    %v1853 = vor.u32 %v1849, 1024
    %v1854 = vor.u32 %v1850, 1024
    %1855 = vset.pattern.permute.xlu0 0
    %1856 = vperm.xlu0 %1855, %v1851
    %v1857 = vpop.permute.xlu0 %1856
    %1858 = vset.pattern.permute.xlu0 0
    %1859 = vperm.xlu0 %1858, %v1852
    %v1860 = vpop.permute.xlu0 %1859
    %1861 = vset.pattern.permute.xlu0 0
    %1862 = vperm.xlu0 %1861, %v1853
    %v1863 = vpop.permute.xlu0 %1862
    %1864 = vset.pattern.permute.xlu0 0
    %1865 = vperm.xlu0 %1864, %v1854
    %v1866 = vpop.permute.xlu0 %1865
    %vm1867 = vcmp.ge.s32.totalorder %v115, %v1857
    %vm1868 = vcmp.ge.s32.totalorder %v116, %v1860
    %vm1869 = vcmp.ge.s32.totalorder %v117, %v1863
    %vm1870 = vcmp.ge.s32.totalorder %v118, %v1866
    %v1871 = vsel %vm1867, 1, 0
    %v1872 = vsel %vm1868, 1, 0
    %v1873 = vsel %vm1869, 1, 0
    %v1874 = vsel %vm1870, 1, 0
    %v1875 = vand.u32 %v1871, 65535
    %v1876 = vshrl.u32 %v1871, 16
    %v1877 = vcvt.s32.f32 %v1875
    %v1878 = vcvt.s32.f32 %v1876
    %1879 = vadd.xlane.f32.xlu0 %v1877
    %v1880 = vpop.xlane.xlu0 %1879
    %1881 = vadd.xlane.f32.xlu0 %v1878
    %v1882 = vpop.xlane.xlu0 %1881
    %v1883 = vcvt.f32.s32 %v1880
    %v1884 = vcvt.f32.s32 %v1882
    %v1885 = vshll.u32 %v1884, 16
    %v1886 = vadd.s32 %v1885, %v1883
    %v1887 = vand.u32 %v1872, 65535
    %v1888 = vshrl.u32 %v1872, 16
    %v1889 = vcvt.s32.f32 %v1887
    %v1890 = vcvt.s32.f32 %v1888
    %1891 = vadd.xlane.f32.xlu0 %v1889
    %v1892 = vpop.xlane.xlu0 %1891
    %1893 = vadd.xlane.f32.xlu0 %v1890
    %v1894 = vpop.xlane.xlu0 %1893
    %v1895 = vcvt.f32.s32 %v1892
    %v1896 = vcvt.f32.s32 %v1894
    %v1897 = vshll.u32 %v1896, 16
    %v1898 = vadd.s32 %v1897, %v1895
    %v1899 = vand.u32 %v1873, 65535
    %v1900 = vshrl.u32 %v1873, 16
    %v1901 = vcvt.s32.f32 %v1899
    %v1902 = vcvt.s32.f32 %v1900
    %1903 = vadd.xlane.f32.xlu0 %v1901
    %v1904 = vpop.xlane.xlu0 %1903
    %1905 = vadd.xlane.f32.xlu0 %v1902
    %v1906 = vpop.xlane.xlu0 %1905
    %v1907 = vcvt.f32.s32 %v1904
    %v1908 = vcvt.f32.s32 %v1906
    %v1909 = vshll.u32 %v1908, 16
    %v1910 = vadd.s32 %v1909, %v1907
    %v1911 = vand.u32 %v1874, 65535
    %v1912 = vshrl.u32 %v1874, 16
    %v1913 = vcvt.s32.f32 %v1911
    %v1914 = vcvt.s32.f32 %v1912
    %1915 = vadd.xlane.f32.xlu0 %v1913
    %v1916 = vpop.xlane.xlu0 %1915
    %1917 = vadd.xlane.f32.xlu0 %v1914
    %v1918 = vpop.xlane.xlu0 %1917
    %v1919 = vcvt.f32.s32 %v1916
    %v1920 = vcvt.f32.s32 %v1918
    %v1921 = vshll.u32 %v1920, 16
    %v1922 = vadd.s32 %v1921, %v1919
    %vm1923 = vcmp.ge.s32.totalorder %v1886, %v180
    %vm1924 = vcmp.ge.s32.totalorder %v1898, %v182
    %vm1925 = vcmp.ge.s32.totalorder %v1910, %v184
    %vm1926 = vcmp.ge.s32.totalorder %v1922, %v186
    %v1927 = vsel %vm1923, %v1851, %v1847
    %v1928 = vsel %vm1924, %v1852, %v1848
    %v1929 = vsel %vm1925, %v1853, %v1849
    %v1930 = vsel %vm1926, %v1854, %v1850
    %v1931 = vor.u32 %v1927, 512
    %v1932 = vor.u32 %v1928, 512
    %v1933 = vor.u32 %v1929, 512
    %v1934 = vor.u32 %v1930, 512
    %1935 = vset.pattern.permute.xlu0 0
    %1936 = vperm.xlu0 %1935, %v1931
    %v1937 = vpop.permute.xlu0 %1936
    %1938 = vset.pattern.permute.xlu0 0
    %1939 = vperm.xlu0 %1938, %v1932
    %v1940 = vpop.permute.xlu0 %1939
    %1941 = vset.pattern.permute.xlu0 0
    %1942 = vperm.xlu0 %1941, %v1933
    %v1943 = vpop.permute.xlu0 %1942
    %1944 = vset.pattern.permute.xlu0 0
    %1945 = vperm.xlu0 %1944, %v1934
    %v1946 = vpop.permute.xlu0 %1945
    %vm1947 = vcmp.ge.s32.totalorder %v115, %v1937
    %vm1948 = vcmp.ge.s32.totalorder %v116, %v1940
    %vm1949 = vcmp.ge.s32.totalorder %v117, %v1943
    %vm1950 = vcmp.ge.s32.totalorder %v118, %v1946
    %v1951 = vsel %vm1947, 1, 0
    %v1952 = vsel %vm1948, 1, 0
    %v1953 = vsel %vm1949, 1, 0
    %v1954 = vsel %vm1950, 1, 0
    %v1955 = vand.u32 %v1951, 65535
    %v1956 = vshrl.u32 %v1951, 16
    %v1957 = vcvt.s32.f32 %v1955
    %v1958 = vcvt.s32.f32 %v1956
    %1959 = vadd.xlane.f32.xlu0 %v1957
    %v1960 = vpop.xlane.xlu0 %1959
    %1961 = vadd.xlane.f32.xlu0 %v1958
    %v1962 = vpop.xlane.xlu0 %1961
    %v1963 = vcvt.f32.s32 %v1960
    %v1964 = vcvt.f32.s32 %v1962
    %v1965 = vshll.u32 %v1964, 16
    %v1966 = vadd.s32 %v1965, %v1963
    %v1967 = vand.u32 %v1952, 65535
    %v1968 = vshrl.u32 %v1952, 16
    %v1969 = vcvt.s32.f32 %v1967
    %v1970 = vcvt.s32.f32 %v1968
    %1971 = vadd.xlane.f32.xlu0 %v1969
    %v1972 = vpop.xlane.xlu0 %1971
    %1973 = vadd.xlane.f32.xlu0 %v1970
    %v1974 = vpop.xlane.xlu0 %1973
    %v1975 = vcvt.f32.s32 %v1972
    %v1976 = vcvt.f32.s32 %v1974
    %v1977 = vshll.u32 %v1976, 16
    %v1978 = vadd.s32 %v1977, %v1975
    %v1979 = vand.u32 %v1953, 65535
    %v1980 = vshrl.u32 %v1953, 16
    %v1981 = vcvt.s32.f32 %v1979
    %v1982 = vcvt.s32.f32 %v1980
    %1983 = vadd.xlane.f32.xlu0 %v1981
    %v1984 = vpop.xlane.xlu0 %1983
    %1985 = vadd.xlane.f32.xlu0 %v1982
    %v1986 = vpop.xlane.xlu0 %1985
    %v1987 = vcvt.f32.s32 %v1984
    %v1988 = vcvt.f32.s32 %v1986
    %v1989 = vshll.u32 %v1988, 16
    %v1990 = vadd.s32 %v1989, %v1987
    %v1991 = vand.u32 %v1954, 65535
    %v1992 = vshrl.u32 %v1954, 16
    %v1993 = vcvt.s32.f32 %v1991
    %v1994 = vcvt.s32.f32 %v1992
    %1995 = vadd.xlane.f32.xlu0 %v1993
    %v1996 = vpop.xlane.xlu0 %1995
    %1997 = vadd.xlane.f32.xlu0 %v1994
    %v1998 = vpop.xlane.xlu0 %1997
    %v1999 = vcvt.f32.s32 %v1996
    %v2000 = vcvt.f32.s32 %v1998
    %v2001 = vshll.u32 %v2000, 16
    %v2002 = vadd.s32 %v2001, %v1999
    %vm2003 = vcmp.ge.s32.totalorder %v1966, %v180
    %vm2004 = vcmp.ge.s32.totalorder %v1978, %v182
    %vm2005 = vcmp.ge.s32.totalorder %v1990, %v184
    %vm2006 = vcmp.ge.s32.totalorder %v2002, %v186
    %v2007 = vsel %vm2003, %v1931, %v1927
    %v2008 = vsel %vm2004, %v1932, %v1928
    %v2009 = vsel %vm2005, %v1933, %v1929
    %v2010 = vsel %vm2006, %v1934, %v1930
    %v2011 = vor.u32 %v2007, 256
    %v2012 = vor.u32 %v2008, 256
    %v2013 = vor.u32 %v2009, 256
    %v2014 = vor.u32 %v2010, 256
    %2015 = vset.pattern.permute.xlu0 0
    %2016 = vperm.xlu0 %2015, %v2011
    %v2017 = vpop.permute.xlu0 %2016
    %2018 = vset.pattern.permute.xlu0 0
    %2019 = vperm.xlu0 %2018, %v2012
    %v2020 = vpop.permute.xlu0 %2019
    %2021 = vset.pattern.permute.xlu0 0
    %2022 = vperm.xlu0 %2021, %v2013
    %v2023 = vpop.permute.xlu0 %2022
    %2024 = vset.pattern.permute.xlu0 0
    %2025 = vperm.xlu0 %2024, %v2014
    %v2026 = vpop.permute.xlu0 %2025
    %vm2027 = vcmp.ge.s32.totalorder %v115, %v2017
    %vm2028 = vcmp.ge.s32.totalorder %v116, %v2020
    %vm2029 = vcmp.ge.s32.totalorder %v117, %v2023
    %vm2030 = vcmp.ge.s32.totalorder %v118, %v2026
    %v2031 = vsel %vm2027, 1, 0
    %v2032 = vsel %vm2028, 1, 0
    %v2033 = vsel %vm2029, 1, 0
    %v2034 = vsel %vm2030, 1, 0
    %v2035 = vand.u32 %v2031, 65535
    %v2036 = vshrl.u32 %v2031, 16
    %v2037 = vcvt.s32.f32 %v2035
    %v2038 = vcvt.s32.f32 %v2036
    %2039 = vadd.xlane.f32.xlu0 %v2037
    %v2040 = vpop.xlane.xlu0 %2039
    %2041 = vadd.xlane.f32.xlu0 %v2038
    %v2042 = vpop.xlane.xlu0 %2041
    %v2043 = vcvt.f32.s32 %v2040
    %v2044 = vcvt.f32.s32 %v2042
    %v2045 = vshll.u32 %v2044, 16
    %v2046 = vadd.s32 %v2045, %v2043
    %v2047 = vand.u32 %v2032, 65535
    %v2048 = vshrl.u32 %v2032, 16
    %v2049 = vcvt.s32.f32 %v2047
    %v2050 = vcvt.s32.f32 %v2048
    %2051 = vadd.xlane.f32.xlu0 %v2049
    %v2052 = vpop.xlane.xlu0 %2051
    %2053 = vadd.xlane.f32.xlu0 %v2050
    %v2054 = vpop.xlane.xlu0 %2053
    %v2055 = vcvt.f32.s32 %v2052
    %v2056 = vcvt.f32.s32 %v2054
    %v2057 = vshll.u32 %v2056, 16
    %v2058 = vadd.s32 %v2057, %v2055
    %v2059 = vand.u32 %v2033, 65535
    %v2060 = vshrl.u32 %v2033, 16
    %v2061 = vcvt.s32.f32 %v2059
    %v2062 = vcvt.s32.f32 %v2060
    %2063 = vadd.xlane.f32.xlu0 %v2061
    %v2064 = vpop.xlane.xlu0 %2063
    %2065 = vadd.xlane.f32.xlu0 %v2062
    %v2066 = vpop.xlane.xlu0 %2065
    %v2067 = vcvt.f32.s32 %v2064
    %v2068 = vcvt.f32.s32 %v2066
    %v2069 = vshll.u32 %v2068, 16
    %v2070 = vadd.s32 %v2069, %v2067
    %v2071 = vand.u32 %v2034, 65535
    %v2072 = vshrl.u32 %v2034, 16
    %v2073 = vcvt.s32.f32 %v2071
    %v2074 = vcvt.s32.f32 %v2072
    %2075 = vadd.xlane.f32.xlu0 %v2073
    %v2076 = vpop.xlane.xlu0 %2075
    %2077 = vadd.xlane.f32.xlu0 %v2074
    %v2078 = vpop.xlane.xlu0 %2077
    %v2079 = vcvt.f32.s32 %v2076
    %v2080 = vcvt.f32.s32 %v2078
    %v2081 = vshll.u32 %v2080, 16
    %v2082 = vadd.s32 %v2081, %v2079
    %vm2083 = vcmp.ge.s32.totalorder %v2046, %v180
    %vm2084 = vcmp.ge.s32.totalorder %v2058, %v182
    %vm2085 = vcmp.ge.s32.totalorder %v2070, %v184
    %vm2086 = vcmp.ge.s32.totalorder %v2082, %v186
    %v2087 = vsel %vm2083, %v2011, %v2007
    %v2088 = vsel %vm2084, %v2012, %v2008
    %v2089 = vsel %vm2085, %v2013, %v2009
    %v2090 = vsel %vm2086, %v2014, %v2010
    %v2091 = vor.u32 %v2087, 128
    %v2092 = vor.u32 %v2088, 128
    %v2093 = vor.u32 %v2089, 128
    %v2094 = vor.u32 %v2090, 128
    %2095 = vset.pattern.permute.xlu0 0
    %2096 = vperm.xlu0 %2095, %v2091
    %v2097 = vpop.permute.xlu0 %2096
    %2098 = vset.pattern.permute.xlu0 0
    %2099 = vperm.xlu0 %2098, %v2092
    %v2100 = vpop.permute.xlu0 %2099
    %2101 = vset.pattern.permute.xlu0 0
    %2102 = vperm.xlu0 %2101, %v2093
    %v2103 = vpop.permute.xlu0 %2102
    %2104 = vset.pattern.permute.xlu0 0
    %2105 = vperm.xlu0 %2104, %v2094
    %v2106 = vpop.permute.xlu0 %2105
    %vm2107 = vcmp.ge.s32.totalorder %v115, %v2097
    %vm2108 = vcmp.ge.s32.totalorder %v116, %v2100
    %vm2109 = vcmp.ge.s32.totalorder %v117, %v2103
    %vm2110 = vcmp.ge.s32.totalorder %v118, %v2106
    %v2111 = vsel %vm2107, 1, 0
    %v2112 = vsel %vm2108, 1, 0
    %v2113 = vsel %vm2109, 1, 0
    %v2114 = vsel %vm2110, 1, 0
    %v2115 = vand.u32 %v2111, 65535
    %v2116 = vshrl.u32 %v2111, 16
    %v2117 = vcvt.s32.f32 %v2115
    %v2118 = vcvt.s32.f32 %v2116
    %2119 = vadd.xlane.f32.xlu0 %v2117
    %v2120 = vpop.xlane.xlu0 %2119
    %2121 = vadd.xlane.f32.xlu0 %v2118
    %v2122 = vpop.xlane.xlu0 %2121
    %v2123 = vcvt.f32.s32 %v2120
    %v2124 = vcvt.f32.s32 %v2122
    %v2125 = vshll.u32 %v2124, 16
    %v2126 = vadd.s32 %v2125, %v2123
    %v2127 = vand.u32 %v2112, 65535
    %v2128 = vshrl.u32 %v2112, 16
    %v2129 = vcvt.s32.f32 %v2127
    %v2130 = vcvt.s32.f32 %v2128
    %2131 = vadd.xlane.f32.xlu0 %v2129
    %v2132 = vpop.xlane.xlu0 %2131
    %2133 = vadd.xlane.f32.xlu0 %v2130
    %v2134 = vpop.xlane.xlu0 %2133
    %v2135 = vcvt.f32.s32 %v2132
    %v2136 = vcvt.f32.s32 %v2134
    %v2137 = vshll.u32 %v2136, 16
    %v2138 = vadd.s32 %v2137, %v2135
    %v2139 = vand.u32 %v2113, 65535
    %v2140 = vshrl.u32 %v2113, 16
    %v2141 = vcvt.s32.f32 %v2139
    %v2142 = vcvt.s32.f32 %v2140
    %2143 = vadd.xlane.f32.xlu0 %v2141
    %v2144 = vpop.xlane.xlu0 %2143
    %2145 = vadd.xlane.f32.xlu0 %v2142
    %v2146 = vpop.xlane.xlu0 %2145
    %v2147 = vcvt.f32.s32 %v2144
    %v2148 = vcvt.f32.s32 %v2146
    %v2149 = vshll.u32 %v2148, 16
    %v2150 = vadd.s32 %v2149, %v2147
    %v2151 = vand.u32 %v2114, 65535
    %v2152 = vshrl.u32 %v2114, 16
    %v2153 = vcvt.s32.f32 %v2151
    %v2154 = vcvt.s32.f32 %v2152
    %2155 = vadd.xlane.f32.xlu0 %v2153
    %v2156 = vpop.xlane.xlu0 %2155
    %2157 = vadd.xlane.f32.xlu0 %v2154
    %v2158 = vpop.xlane.xlu0 %2157
    %v2159 = vcvt.f32.s32 %v2156
    %v2160 = vcvt.f32.s32 %v2158
    %v2161 = vshll.u32 %v2160, 16
    %v2162 = vadd.s32 %v2161, %v2159
    %vm2163 = vcmp.ge.s32.totalorder %v2126, %v180
    %vm2164 = vcmp.ge.s32.totalorder %v2138, %v182
    %vm2165 = vcmp.ge.s32.totalorder %v2150, %v184
    %vm2166 = vcmp.ge.s32.totalorder %v2162, %v186
    %v2167 = vsel %vm2163, %v2091, %v2087
    %v2168 = vsel %vm2164, %v2092, %v2088
    %v2169 = vsel %vm2165, %v2093, %v2089
    %v2170 = vsel %vm2166, %v2094, %v2090
    %v2171 = vor.u32 %v2167, 64
    %v2172 = vor.u32 %v2168, 64
    %v2173 = vor.u32 %v2169, 64
    %v2174 = vor.u32 %v2170, 64
    %2175 = vset.pattern.permute.xlu0 0
    %2176 = vperm.xlu0 %2175, %v2171
    %v2177 = vpop.permute.xlu0 %2176
    %2178 = vset.pattern.permute.xlu0 0
    %2179 = vperm.xlu0 %2178, %v2172
    %v2180 = vpop.permute.xlu0 %2179
    %2181 = vset.pattern.permute.xlu0 0
    %2182 = vperm.xlu0 %2181, %v2173
    %v2183 = vpop.permute.xlu0 %2182
    %2184 = vset.pattern.permute.xlu0 0
    %2185 = vperm.xlu0 %2184, %v2174
    %v2186 = vpop.permute.xlu0 %2185
    %vm2187 = vcmp.ge.s32.totalorder %v115, %v2177
    %vm2188 = vcmp.ge.s32.totalorder %v116, %v2180
    %vm2189 = vcmp.ge.s32.totalorder %v117, %v2183
    %vm2190 = vcmp.ge.s32.totalorder %v118, %v2186
    %v2191 = vsel %vm2187, 1, 0
    %v2192 = vsel %vm2188, 1, 0
    %v2193 = vsel %vm2189, 1, 0
    %v2194 = vsel %vm2190, 1, 0
    %v2195 = vand.u32 %v2191, 65535
    %v2196 = vshrl.u32 %v2191, 16
    %v2197 = vcvt.s32.f32 %v2195
    %v2198 = vcvt.s32.f32 %v2196
    %2199 = vadd.xlane.f32.xlu0 %v2197
    %v2200 = vpop.xlane.xlu0 %2199
    %2201 = vadd.xlane.f32.xlu0 %v2198
    %v2202 = vpop.xlane.xlu0 %2201
    %v2203 = vcvt.f32.s32 %v2200
    %v2204 = vcvt.f32.s32 %v2202
    %v2205 = vshll.u32 %v2204, 16
    %v2206 = vadd.s32 %v2205, %v2203
    %v2207 = vand.u32 %v2192, 65535
    %v2208 = vshrl.u32 %v2192, 16
    %v2209 = vcvt.s32.f32 %v2207
    %v2210 = vcvt.s32.f32 %v2208
    %2211 = vadd.xlane.f32.xlu0 %v2209
    %v2212 = vpop.xlane.xlu0 %2211
    %2213 = vadd.xlane.f32.xlu0 %v2210
    %v2214 = vpop.xlane.xlu0 %2213
    %v2215 = vcvt.f32.s32 %v2212
    %v2216 = vcvt.f32.s32 %v2214
    %v2217 = vshll.u32 %v2216, 16
    %v2218 = vadd.s32 %v2217, %v2215
    %v2219 = vand.u32 %v2193, 65535
    %v2220 = vshrl.u32 %v2193, 16
    %v2221 = vcvt.s32.f32 %v2219
    %v2222 = vcvt.s32.f32 %v2220
    %2223 = vadd.xlane.f32.xlu0 %v2221
    %v2224 = vpop.xlane.xlu0 %2223
    %2225 = vadd.xlane.f32.xlu0 %v2222
    %v2226 = vpop.xlane.xlu0 %2225
    %v2227 = vcvt.f32.s32 %v2224
    %v2228 = vcvt.f32.s32 %v2226
    %v2229 = vshll.u32 %v2228, 16
    %v2230 = vadd.s32 %v2229, %v2227
    %v2231 = vand.u32 %v2194, 65535
    %v2232 = vshrl.u32 %v2194, 16
    %v2233 = vcvt.s32.f32 %v2231
    %v2234 = vcvt.s32.f32 %v2232
    %2235 = vadd.xlane.f32.xlu0 %v2233
    %v2236 = vpop.xlane.xlu0 %2235
    %2237 = vadd.xlane.f32.xlu0 %v2234
    %v2238 = vpop.xlane.xlu0 %2237
    %v2239 = vcvt.f32.s32 %v2236
    %v2240 = vcvt.f32.s32 %v2238
    %v2241 = vshll.u32 %v2240, 16
    %v2242 = vadd.s32 %v2241, %v2239
    %vm2243 = vcmp.ge.s32.totalorder %v2206, %v180
    %vm2244 = vcmp.ge.s32.totalorder %v2218, %v182
    %vm2245 = vcmp.ge.s32.totalorder %v2230, %v184
    %vm2246 = vcmp.ge.s32.totalorder %v2242, %v186
    %v2247 = vsel %vm2243, %v2171, %v2167
    %v2248 = vsel %vm2244, %v2172, %v2168
    %v2249 = vsel %vm2245, %v2173, %v2169
    %v2250 = vsel %vm2246, %v2174, %v2170
    %v2251 = vor.u32 %v2247, 32
    %v2252 = vor.u32 %v2248, 32
    %v2253 = vor.u32 %v2249, 32
    %v2254 = vor.u32 %v2250, 32
    %2255 = vset.pattern.permute.xlu0 0
    %2256 = vperm.xlu0 %2255, %v2251
    %v2257 = vpop.permute.xlu0 %2256
    %2258 = vset.pattern.permute.xlu0 0
    %2259 = vperm.xlu0 %2258, %v2252
    %v2260 = vpop.permute.xlu0 %2259
    %2261 = vset.pattern.permute.xlu0 0
    %2262 = vperm.xlu0 %2261, %v2253
    %v2263 = vpop.permute.xlu0 %2262
    %2264 = vset.pattern.permute.xlu0 0
    %2265 = vperm.xlu0 %2264, %v2254
    %v2266 = vpop.permute.xlu0 %2265
    %vm2267 = vcmp.ge.s32.totalorder %v115, %v2257
    %vm2268 = vcmp.ge.s32.totalorder %v116, %v2260
    %vm2269 = vcmp.ge.s32.totalorder %v117, %v2263
    %vm2270 = vcmp.ge.s32.totalorder %v118, %v2266
    %v2271 = vsel %vm2267, 1, 0
    %v2272 = vsel %vm2268, 1, 0
    %v2273 = vsel %vm2269, 1, 0
    %v2274 = vsel %vm2270, 1, 0
    %v2275 = vand.u32 %v2271, 65535
    %v2276 = vshrl.u32 %v2271, 16
    %v2277 = vcvt.s32.f32 %v2275
    %v2278 = vcvt.s32.f32 %v2276
    %2279 = vadd.xlane.f32.xlu0 %v2277
    %v2280 = vpop.xlane.xlu0 %2279
    %2281 = vadd.xlane.f32.xlu0 %v2278
    %v2282 = vpop.xlane.xlu0 %2281
    %v2283 = vcvt.f32.s32 %v2280
    %v2284 = vcvt.f32.s32 %v2282
    %v2285 = vshll.u32 %v2284, 16
    %v2286 = vadd.s32 %v2285, %v2283
    %v2287 = vand.u32 %v2272, 65535
    %v2288 = vshrl.u32 %v2272, 16
    %v2289 = vcvt.s32.f32 %v2287
    %v2290 = vcvt.s32.f32 %v2288
    %2291 = vadd.xlane.f32.xlu0 %v2289
    %v2292 = vpop.xlane.xlu0 %2291
    %2293 = vadd.xlane.f32.xlu0 %v2290
    %v2294 = vpop.xlane.xlu0 %2293
    %v2295 = vcvt.f32.s32 %v2292
    %v2296 = vcvt.f32.s32 %v2294
    %v2297 = vshll.u32 %v2296, 16
    %v2298 = vadd.s32 %v2297, %v2295
    %v2299 = vand.u32 %v2273, 65535
    %v2300 = vshrl.u32 %v2273, 16
    %v2301 = vcvt.s32.f32 %v2299
    %v2302 = vcvt.s32.f32 %v2300
    %2303 = vadd.xlane.f32.xlu0 %v2301
    %v2304 = vpop.xlane.xlu0 %2303
    %2305 = vadd.xlane.f32.xlu0 %v2302
    %v2306 = vpop.xlane.xlu0 %2305
    %v2307 = vcvt.f32.s32 %v2304
    %v2308 = vcvt.f32.s32 %v2306
    %v2309 = vshll.u32 %v2308, 16
    %v2310 = vadd.s32 %v2309, %v2307
    %v2311 = vand.u32 %v2274, 65535
    %v2312 = vshrl.u32 %v2274, 16
    %v2313 = vcvt.s32.f32 %v2311
    %v2314 = vcvt.s32.f32 %v2312
    %2315 = vadd.xlane.f32.xlu0 %v2313
    %v2316 = vpop.xlane.xlu0 %2315
    %2317 = vadd.xlane.f32.xlu0 %v2314
    %v2318 = vpop.xlane.xlu0 %2317
    %v2319 = vcvt.f32.s32 %v2316
    %v2320 = vcvt.f32.s32 %v2318
    %v2321 = vshll.u32 %v2320, 16
    %v2322 = vadd.s32 %v2321, %v2319
    %vm2323 = vcmp.ge.s32.totalorder %v2286, %v180
    %vm2324 = vcmp.ge.s32.totalorder %v2298, %v182
    %vm2325 = vcmp.ge.s32.totalorder %v2310, %v184
    %vm2326 = vcmp.ge.s32.totalorder %v2322, %v186
    %v2327 = vsel %vm2323, %v2251, %v2247
    %v2328 = vsel %vm2324, %v2252, %v2248
    %v2329 = vsel %vm2325, %v2253, %v2249
    %v2330 = vsel %vm2326, %v2254, %v2250
    %v2331 = vor.u32 %v2327, 16
    %v2332 = vor.u32 %v2328, 16
    %v2333 = vor.u32 %v2329, 16
    %v2334 = vor.u32 %v2330, 16
    %2335 = vset.pattern.permute.xlu0 0
    %2336 = vperm.xlu0 %2335, %v2331
    %v2337 = vpop.permute.xlu0 %2336
    %2338 = vset.pattern.permute.xlu0 0
    %2339 = vperm.xlu0 %2338, %v2332
    %v2340 = vpop.permute.xlu0 %2339
    %2341 = vset.pattern.permute.xlu0 0
    %2342 = vperm.xlu0 %2341, %v2333
    %v2343 = vpop.permute.xlu0 %2342
    %2344 = vset.pattern.permute.xlu0 0
    %2345 = vperm.xlu0 %2344, %v2334
    %v2346 = vpop.permute.xlu0 %2345
    %vm2347 = vcmp.ge.s32.totalorder %v115, %v2337
    %vm2348 = vcmp.ge.s32.totalorder %v116, %v2340
    %vm2349 = vcmp.ge.s32.totalorder %v117, %v2343
    %vm2350 = vcmp.ge.s32.totalorder %v118, %v2346
    %v2351 = vsel %vm2347, 1, 0
    %v2352 = vsel %vm2348, 1, 0
    %v2353 = vsel %vm2349, 1, 0
    %v2354 = vsel %vm2350, 1, 0
    %v2355 = vand.u32 %v2351, 65535
    %v2356 = vshrl.u32 %v2351, 16
    %v2357 = vcvt.s32.f32 %v2355
    %v2358 = vcvt.s32.f32 %v2356
    %2359 = vadd.xlane.f32.xlu0 %v2357
    %v2360 = vpop.xlane.xlu0 %2359
    %2361 = vadd.xlane.f32.xlu0 %v2358
    %v2362 = vpop.xlane.xlu0 %2361
    %v2363 = vcvt.f32.s32 %v2360
    %v2364 = vcvt.f32.s32 %v2362
    %v2365 = vshll.u32 %v2364, 16
    %v2366 = vadd.s32 %v2365, %v2363
    %v2367 = vand.u32 %v2352, 65535
    %v2368 = vshrl.u32 %v2352, 16
    %v2369 = vcvt.s32.f32 %v2367
    %v2370 = vcvt.s32.f32 %v2368
    %2371 = vadd.xlane.f32.xlu0 %v2369
    %v2372 = vpop.xlane.xlu0 %2371
    %2373 = vadd.xlane.f32.xlu0 %v2370
    %v2374 = vpop.xlane.xlu0 %2373
    %v2375 = vcvt.f32.s32 %v2372
    %v2376 = vcvt.f32.s32 %v2374
    %v2377 = vshll.u32 %v2376, 16
    %v2378 = vadd.s32 %v2377, %v2375
    %v2379 = vand.u32 %v2353, 65535
    %v2380 = vshrl.u32 %v2353, 16
    %v2381 = vcvt.s32.f32 %v2379
    %v2382 = vcvt.s32.f32 %v2380
    %2383 = vadd.xlane.f32.xlu0 %v2381
    %v2384 = vpop.xlane.xlu0 %2383
    %2385 = vadd.xlane.f32.xlu0 %v2382
    %v2386 = vpop.xlane.xlu0 %2385
    %v2387 = vcvt.f32.s32 %v2384
    %v2388 = vcvt.f32.s32 %v2386
    %v2389 = vshll.u32 %v2388, 16
    %v2390 = vadd.s32 %v2389, %v2387
    %v2391 = vand.u32 %v2354, 65535
    %v2392 = vshrl.u32 %v2354, 16
    %v2393 = vcvt.s32.f32 %v2391
    %v2394 = vcvt.s32.f32 %v2392
    %2395 = vadd.xlane.f32.xlu0 %v2393
    %v2396 = vpop.xlane.xlu0 %2395
    %2397 = vadd.xlane.f32.xlu0 %v2394
    %v2398 = vpop.xlane.xlu0 %2397
    %v2399 = vcvt.f32.s32 %v2396
    %v2400 = vcvt.f32.s32 %v2398
    %v2401 = vshll.u32 %v2400, 16
    %v2402 = vadd.s32 %v2401, %v2399
    %vm2403 = vcmp.ge.s32.totalorder %v2366, %v180
    %vm2404 = vcmp.ge.s32.totalorder %v2378, %v182
    %vm2405 = vcmp.ge.s32.totalorder %v2390, %v184
    %vm2406 = vcmp.ge.s32.totalorder %v2402, %v186
    %v2407 = vsel %vm2403, %v2331, %v2327
    %v2408 = vsel %vm2404, %v2332, %v2328
    %v2409 = vsel %vm2405, %v2333, %v2329
    %v2410 = vsel %vm2406, %v2334, %v2330
    %v2411 = vor.u32 %v2407, 8
    %v2412 = vor.u32 %v2408, 8
    %v2413 = vor.u32 %v2409, 8
    %v2414 = vor.u32 %v2410, 8
    %2415 = vset.pattern.permute.xlu0 0
    %2416 = vperm.xlu0 %2415, %v2411
    %v2417 = vpop.permute.xlu0 %2416
    %2418 = vset.pattern.permute.xlu0 0
    %2419 = vperm.xlu0 %2418, %v2412
    %v2420 = vpop.permute.xlu0 %2419
    %2421 = vset.pattern.permute.xlu0 0
    %2422 = vperm.xlu0 %2421, %v2413
    %v2423 = vpop.permute.xlu0 %2422
    %2424 = vset.pattern.permute.xlu0 0
    %2425 = vperm.xlu0 %2424, %v2414
    %v2426 = vpop.permute.xlu0 %2425
    %vm2427 = vcmp.ge.s32.totalorder %v115, %v2417
    %vm2428 = vcmp.ge.s32.totalorder %v116, %v2420
    %vm2429 = vcmp.ge.s32.totalorder %v117, %v2423
    %vm2430 = vcmp.ge.s32.totalorder %v118, %v2426
    %v2431 = vsel %vm2427, 1, 0
    %v2432 = vsel %vm2428, 1, 0
    %v2433 = vsel %vm2429, 1, 0
    %v2434 = vsel %vm2430, 1, 0
    %v2435 = vand.u32 %v2431, 65535
    %v2436 = vshrl.u32 %v2431, 16
    %v2437 = vcvt.s32.f32 %v2435
    %v2438 = vcvt.s32.f32 %v2436
    %2439 = vadd.xlane.f32.xlu0 %v2437
    %v2440 = vpop.xlane.xlu0 %2439
    %2441 = vadd.xlane.f32.xlu0 %v2438
    %v2442 = vpop.xlane.xlu0 %2441
    %v2443 = vcvt.f32.s32 %v2440
    %v2444 = vcvt.f32.s32 %v2442
    %v2445 = vshll.u32 %v2444, 16
    %v2446 = vadd.s32 %v2445, %v2443
    %v2447 = vand.u32 %v2432, 65535
    %v2448 = vshrl.u32 %v2432, 16
    %v2449 = vcvt.s32.f32 %v2447
    %v2450 = vcvt.s32.f32 %v2448
    %2451 = vadd.xlane.f32.xlu0 %v2449
    %v2452 = vpop.xlane.xlu0 %2451
    %2453 = vadd.xlane.f32.xlu0 %v2450
    %v2454 = vpop.xlane.xlu0 %2453
    %v2455 = vcvt.f32.s32 %v2452
    %v2456 = vcvt.f32.s32 %v2454
    %v2457 = vshll.u32 %v2456, 16
    %v2458 = vadd.s32 %v2457, %v2455
    %v2459 = vand.u32 %v2433, 65535
    %v2460 = vshrl.u32 %v2433, 16
    %v2461 = vcvt.s32.f32 %v2459
    %v2462 = vcvt.s32.f32 %v2460
    %2463 = vadd.xlane.f32.xlu0 %v2461
    %v2464 = vpop.xlane.xlu0 %2463
    %2465 = vadd.xlane.f32.xlu0 %v2462
    %v2466 = vpop.xlane.xlu0 %2465
    %v2467 = vcvt.f32.s32 %v2464
    %v2468 = vcvt.f32.s32 %v2466
    %v2469 = vshll.u32 %v2468, 16
    %v2470 = vadd.s32 %v2469, %v2467
    %v2471 = vand.u32 %v2434, 65535
    %v2472 = vshrl.u32 %v2434, 16
    %v2473 = vcvt.s32.f32 %v2471
    %v2474 = vcvt.s32.f32 %v2472
    %2475 = vadd.xlane.f32.xlu0 %v2473
    %v2476 = vpop.xlane.xlu0 %2475
    %2477 = vadd.xlane.f32.xlu0 %v2474
    %v2478 = vpop.xlane.xlu0 %2477
    %v2479 = vcvt.f32.s32 %v2476
    %v2480 = vcvt.f32.s32 %v2478
    %v2481 = vshll.u32 %v2480, 16
    %v2482 = vadd.s32 %v2481, %v2479
    %vm2483 = vcmp.ge.s32.totalorder %v2446, %v180
    %vm2484 = vcmp.ge.s32.totalorder %v2458, %v182
    %vm2485 = vcmp.ge.s32.totalorder %v2470, %v184
    %vm2486 = vcmp.ge.s32.totalorder %v2482, %v186
    %v2487 = vsel %vm2483, %v2411, %v2407
    %v2488 = vsel %vm2484, %v2412, %v2408
    %v2489 = vsel %vm2485, %v2413, %v2409
    %v2490 = vsel %vm2486, %v2414, %v2410
    %v2491 = vor.u32 %v2487, 4
    %v2492 = vor.u32 %v2488, 4
    %v2493 = vor.u32 %v2489, 4
    %v2494 = vor.u32 %v2490, 4
    %2495 = vset.pattern.permute.xlu0 0
    %2496 = vperm.xlu0 %2495, %v2491
    %v2497 = vpop.permute.xlu0 %2496
    %2498 = vset.pattern.permute.xlu0 0
    %2499 = vperm.xlu0 %2498, %v2492
    %v2500 = vpop.permute.xlu0 %2499
    %2501 = vset.pattern.permute.xlu0 0
    %2502 = vperm.xlu0 %2501, %v2493
    %v2503 = vpop.permute.xlu0 %2502
    %2504 = vset.pattern.permute.xlu0 0
    %2505 = vperm.xlu0 %2504, %v2494
    %v2506 = vpop.permute.xlu0 %2505
    %vm2507 = vcmp.ge.s32.totalorder %v115, %v2497
    %vm2508 = vcmp.ge.s32.totalorder %v116, %v2500
    %vm2509 = vcmp.ge.s32.totalorder %v117, %v2503
    %vm2510 = vcmp.ge.s32.totalorder %v118, %v2506
    %v2511 = vsel %vm2507, 1, 0
    %v2512 = vsel %vm2508, 1, 0
    %v2513 = vsel %vm2509, 1, 0
    %v2514 = vsel %vm2510, 1, 0
    %v2515 = vand.u32 %v2511, 65535
    %v2516 = vshrl.u32 %v2511, 16
    %v2517 = vcvt.s32.f32 %v2515
    %v2518 = vcvt.s32.f32 %v2516
    %2519 = vadd.xlane.f32.xlu0 %v2517
    %v2520 = vpop.xlane.xlu0 %2519
    %2521 = vadd.xlane.f32.xlu0 %v2518
    %v2522 = vpop.xlane.xlu0 %2521
    %v2523 = vcvt.f32.s32 %v2520
    %v2524 = vcvt.f32.s32 %v2522
    %v2525 = vshll.u32 %v2524, 16
    %v2526 = vadd.s32 %v2525, %v2523
    %v2527 = vand.u32 %v2512, 65535
    %v2528 = vshrl.u32 %v2512, 16
    %v2529 = vcvt.s32.f32 %v2527
    %v2530 = vcvt.s32.f32 %v2528
    %2531 = vadd.xlane.f32.xlu0 %v2529
    %v2532 = vpop.xlane.xlu0 %2531
    %2533 = vadd.xlane.f32.xlu0 %v2530
    %v2534 = vpop.xlane.xlu0 %2533
    %v2535 = vcvt.f32.s32 %v2532
    %v2536 = vcvt.f32.s32 %v2534
    %v2537 = vshll.u32 %v2536, 16
    %v2538 = vadd.s32 %v2537, %v2535
    %v2539 = vand.u32 %v2513, 65535
    %v2540 = vshrl.u32 %v2513, 16
    %v2541 = vcvt.s32.f32 %v2539
    %v2542 = vcvt.s32.f32 %v2540
    %2543 = vadd.xlane.f32.xlu0 %v2541
    %v2544 = vpop.xlane.xlu0 %2543
    %2545 = vadd.xlane.f32.xlu0 %v2542
    %v2546 = vpop.xlane.xlu0 %2545
    %v2547 = vcvt.f32.s32 %v2544
    %v2548 = vcvt.f32.s32 %v2546
    %v2549 = vshll.u32 %v2548, 16
    %v2550 = vadd.s32 %v2549, %v2547
    %v2551 = vand.u32 %v2514, 65535
    %v2552 = vshrl.u32 %v2514, 16
    %v2553 = vcvt.s32.f32 %v2551
    %v2554 = vcvt.s32.f32 %v2552
    %2555 = vadd.xlane.f32.xlu0 %v2553
    %v2556 = vpop.xlane.xlu0 %2555
    %2557 = vadd.xlane.f32.xlu0 %v2554
    %v2558 = vpop.xlane.xlu0 %2557
    %v2559 = vcvt.f32.s32 %v2556
    %v2560 = vcvt.f32.s32 %v2558
    %v2561 = vshll.u32 %v2560, 16
    %v2562 = vadd.s32 %v2561, %v2559
    %vm2563 = vcmp.ge.s32.totalorder %v2526, %v180
    %vm2564 = vcmp.ge.s32.totalorder %v2538, %v182
    %vm2565 = vcmp.ge.s32.totalorder %v2550, %v184
    %vm2566 = vcmp.ge.s32.totalorder %v2562, %v186
    %v2567 = vsel %vm2563, %v2491, %v2487
    %v2568 = vsel %vm2564, %v2492, %v2488
    %v2569 = vsel %vm2565, %v2493, %v2489
    %v2570 = vsel %vm2566, %v2494, %v2490
    %v2571 = vor.u32 %v2567, 2
    %v2572 = vor.u32 %v2568, 2
    %v2573 = vor.u32 %v2569, 2
    %v2574 = vor.u32 %v2570, 2
    %2575 = vset.pattern.permute.xlu0 0
    %2576 = vperm.xlu0 %2575, %v2571
    %v2577 = vpop.permute.xlu0 %2576
    %2578 = vset.pattern.permute.xlu0 0
    %2579 = vperm.xlu0 %2578, %v2572
    %v2580 = vpop.permute.xlu0 %2579
    %2581 = vset.pattern.permute.xlu0 0
    %2582 = vperm.xlu0 %2581, %v2573
    %v2583 = vpop.permute.xlu0 %2582
    %2584 = vset.pattern.permute.xlu0 0
    %2585 = vperm.xlu0 %2584, %v2574
    %v2586 = vpop.permute.xlu0 %2585
    %vm2587 = vcmp.ge.s32.totalorder %v115, %v2577
    %vm2588 = vcmp.ge.s32.totalorder %v116, %v2580
    %vm2589 = vcmp.ge.s32.totalorder %v117, %v2583
    %vm2590 = vcmp.ge.s32.totalorder %v118, %v2586
    %v2591 = vsel %vm2587, 1, 0
    %v2592 = vsel %vm2588, 1, 0
    %v2593 = vsel %vm2589, 1, 0
    %v2594 = vsel %vm2590, 1, 0
    %v2595 = vand.u32 %v2591, 65535
    %v2596 = vshrl.u32 %v2591, 16
    %v2597 = vcvt.s32.f32 %v2595
    %v2598 = vcvt.s32.f32 %v2596
    %2599 = vadd.xlane.f32.xlu0 %v2597
    %v2600 = vpop.xlane.xlu0 %2599
    %2601 = vadd.xlane.f32.xlu0 %v2598
    %v2602 = vpop.xlane.xlu0 %2601
    %v2603 = vcvt.f32.s32 %v2600
    %v2604 = vcvt.f32.s32 %v2602
    %v2605 = vshll.u32 %v2604, 16
    %v2606 = vadd.s32 %v2605, %v2603
    %v2607 = vand.u32 %v2592, 65535
    %v2608 = vshrl.u32 %v2592, 16
    %v2609 = vcvt.s32.f32 %v2607
    %v2610 = vcvt.s32.f32 %v2608
    %2611 = vadd.xlane.f32.xlu0 %v2609
    %v2612 = vpop.xlane.xlu0 %2611
    %2613 = vadd.xlane.f32.xlu0 %v2610
    %v2614 = vpop.xlane.xlu0 %2613
    %v2615 = vcvt.f32.s32 %v2612
    %v2616 = vcvt.f32.s32 %v2614
    %v2617 = vshll.u32 %v2616, 16
    %v2618 = vadd.s32 %v2617, %v2615
    %v2619 = vand.u32 %v2593, 65535
    %v2620 = vshrl.u32 %v2593, 16
    %v2621 = vcvt.s32.f32 %v2619
    %v2622 = vcvt.s32.f32 %v2620
    %2623 = vadd.xlane.f32.xlu0 %v2621
    %v2624 = vpop.xlane.xlu0 %2623
    %2625 = vadd.xlane.f32.xlu0 %v2622
    %v2626 = vpop.xlane.xlu0 %2625
    %v2627 = vcvt.f32.s32 %v2624
    %v2628 = vcvt.f32.s32 %v2626
    %v2629 = vshll.u32 %v2628, 16
    %v2630 = vadd.s32 %v2629, %v2627
    %v2631 = vand.u32 %v2594, 65535
    %v2632 = vshrl.u32 %v2594, 16
    %v2633 = vcvt.s32.f32 %v2631
    %v2634 = vcvt.s32.f32 %v2632
    %2635 = vadd.xlane.f32.xlu0 %v2633
    %v2636 = vpop.xlane.xlu0 %2635
    %2637 = vadd.xlane.f32.xlu0 %v2634
    %v2638 = vpop.xlane.xlu0 %2637
    %v2639 = vcvt.f32.s32 %v2636
    %v2640 = vcvt.f32.s32 %v2638
    %v2641 = vshll.u32 %v2640, 16
    %v2642 = vadd.s32 %v2641, %v2639
    %vm2643 = vcmp.ge.s32.totalorder %v2606, %v180
    %vm2644 = vcmp.ge.s32.totalorder %v2618, %v182
    %vm2645 = vcmp.ge.s32.totalorder %v2630, %v184
    %vm2646 = vcmp.ge.s32.totalorder %v2642, %v186
    %v2647 = vsel %vm2643, %v2571, %v2567
    %v2648 = vsel %vm2644, %v2572, %v2568
    %v2649 = vsel %vm2645, %v2573, %v2569
    %v2650 = vsel %vm2646, %v2574, %v2570
    %v2651 = vor.u32 %v2647, 1
    %v2652 = vor.u32 %v2648, 1
    %v2653 = vor.u32 %v2649, 1
    %v2654 = vor.u32 %v2650, 1
    %2655 = vset.pattern.permute.xlu0 0
    %2656 = vperm.xlu0 %2655, %v2651
    %v2657 = vpop.permute.xlu0 %2656
    %2658 = vset.pattern.permute.xlu0 0
    %2659 = vperm.xlu0 %2658, %v2652
    %v2660 = vpop.permute.xlu0 %2659
    %2661 = vset.pattern.permute.xlu0 0
    %2662 = vperm.xlu0 %2661, %v2653
    %v2663 = vpop.permute.xlu0 %2662
    %2664 = vset.pattern.permute.xlu0 0
    %2665 = vperm.xlu0 %2664, %v2654
    %v2666 = vpop.permute.xlu0 %2665
    %vm2667 = vcmp.ge.s32.totalorder %v115, %v2657
    %vm2668 = vcmp.ge.s32.totalorder %v116, %v2660
    %vm2669 = vcmp.ge.s32.totalorder %v117, %v2663
    %vm2670 = vcmp.ge.s32.totalorder %v118, %v2666
    %v2671 = vsel %vm2667, 1, 0
    %v2672 = vsel %vm2668, 1, 0
    %v2673 = vsel %vm2669, 1, 0
    %v2674 = vsel %vm2670, 1, 0
    %v2675 = vand.u32 %v2671, 65535
    %v2676 = vshrl.u32 %v2671, 16
    %v2677 = vcvt.s32.f32 %v2675
    %v2678 = vcvt.s32.f32 %v2676
    %2679 = vadd.xlane.f32.xlu0 %v2677
    %v2680 = vpop.xlane.xlu0 %2679
    %2681 = vadd.xlane.f32.xlu0 %v2678
    %v2682 = vpop.xlane.xlu0 %2681
    %v2683 = vcvt.f32.s32 %v2680
    %v2684 = vcvt.f32.s32 %v2682
    %v2685 = vshll.u32 %v2684, 16
    %v2686 = vadd.s32 %v2685, %v2683
    %v2687 = vand.u32 %v2672, 65535
    %v2688 = vshrl.u32 %v2672, 16
    %v2689 = vcvt.s32.f32 %v2687
    %v2690 = vcvt.s32.f32 %v2688
    %2691 = vadd.xlane.f32.xlu0 %v2689
    %v2692 = vpop.xlane.xlu0 %2691
    %2693 = vadd.xlane.f32.xlu0 %v2690
    %v2694 = vpop.xlane.xlu0 %2693
    %v2695 = vcvt.f32.s32 %v2692
    %v2696 = vcvt.f32.s32 %v2694
    %v2697 = vshll.u32 %v2696, 16
    %v2698 = vadd.s32 %v2697, %v2695
    %v2699 = vand.u32 %v2673, 65535
    %v2700 = vshrl.u32 %v2673, 16
    %v2701 = vcvt.s32.f32 %v2699
    %v2702 = vcvt.s32.f32 %v2700
    %2703 = vadd.xlane.f32.xlu0 %v2701
    %v2704 = vpop.xlane.xlu0 %2703
    %2705 = vadd.xlane.f32.xlu0 %v2702
    %v2706 = vpop.xlane.xlu0 %2705
    %v2707 = vcvt.f32.s32 %v2704
    %v2708 = vcvt.f32.s32 %v2706
    %v2709 = vshll.u32 %v2708, 16
    %v2710 = vadd.s32 %v2709, %v2707
    %v2711 = vand.u32 %v2674, 65535
    %v2712 = vshrl.u32 %v2674, 16
    %v2713 = vcvt.s32.f32 %v2711
    %v2714 = vcvt.s32.f32 %v2712
    %2715 = vadd.xlane.f32.xlu0 %v2713
    %v2716 = vpop.xlane.xlu0 %2715
    %2717 = vadd.xlane.f32.xlu0 %v2714
    %v2718 = vpop.xlane.xlu0 %2717
    %v2719 = vcvt.f32.s32 %v2716
    %v2720 = vcvt.f32.s32 %v2718
    %v2721 = vshll.u32 %v2720, 16
    %v2722 = vadd.s32 %v2721, %v2719
    %vm2723 = vcmp.ge.s32.totalorder %v2686, %v180
    %vm2724 = vcmp.ge.s32.totalorder %v2698, %v182
    %vm2725 = vcmp.ge.s32.totalorder %v2710, %v184
    %vm2726 = vcmp.ge.s32.totalorder %v2722, %v186
    %v2727 = vsel %vm2723, %v2651, %v2647
    %v2728 = vsel %vm2724, %v2652, %v2648
    %v2729 = vsel %vm2725, %v2653, %v2649
    %v2730 = vsel %vm2726, %v2654, %v2650
    %2731 = vset.pattern.permute.xlu0 0
    %2732 = vperm.xlu0 %2731, %v2727
    %v2733 = vpop.permute.xlu0 %2732
    %2734 = vset.pattern.permute.xlu0 0
    %2735 = vperm.xlu0 %2734, %v2728
    %v2736 = vpop.permute.xlu0 %2735
    %2737 = vset.pattern.permute.xlu0 0
    %2738 = vperm.xlu0 %2737, %v2729
    %v2739 = vpop.permute.xlu0 %2738
    %2740 = vset.pattern.permute.xlu0 0
    %2741 = vperm.xlu0 %2740, %v2730
    %v2742 = vpop.permute.xlu0 %2741
    %vm2743 = vcmp.ge.s32.totalorder %v115, %v2733
    %vm2744 = vcmp.ge.s32.totalorder %v116, %v2736
    %vm2745 = vcmp.ge.s32.totalorder %v117, %v2739
    %vm2746 = vcmp.ge.s32.totalorder %v118, %v2742
    %vm2747 = vmand %vm2743, %vm67
    %vm2748 = vmand %vm2744, %vm68
    %vm2749 = vmand %vm2745, %vm69
    %vm2750 = vmand %vm2746, %vm70
    %vm2751 = vcmp.gt.s32.totalorder %v180, 0
    %vm2752 = vcmp.gt.s32.totalorder %v182, 0
    %vm2753 = vcmp.gt.s32.totalorder %v184, 0
    %vm2754 = vcmp.gt.s32.totalorder %v186, 0
    %v2755 = vsel %vm2751, 1, 0
    %v2756 = vsel %vm2752, 1, 0
    %v2757 = vsel %vm2753, 1, 0
    %v2758 = vsel %vm2754, 1, 0
    %2759 = vset.pattern.permute.xlu0 0
    %2760 = vperm.xlu0 %2759, %v2755
    %v2761 = vpop.permute.xlu0 %2760
    %2762 = vset.pattern.permute.xlu0 0
    %2763 = vperm.xlu0 %2762, %v2756
    %v2764 = vpop.permute.xlu0 %2763
    %2765 = vset.pattern.permute.xlu0 0
    %2766 = vperm.xlu0 %2765, %v2757
    %v2767 = vpop.permute.xlu0 %2766
    %2768 = vset.pattern.permute.xlu0 0
    %2769 = vperm.xlu0 %2768, %v2758
    %v2770 = vpop.permute.xlu0 %2769
    %vm2771 = vcmp.eq.s32.totalorder %v2761, 1
    %vm2772 = vcmp.eq.s32.totalorder %v2764, 1
    %vm2773 = vcmp.eq.s32.totalorder %v2767, 1
    %vm2774 = vcmp.eq.s32.totalorder %v2770, 1
    %vm2775 = vmand %vm2747, %vm2771
    %vm2776 = vmand %vm2748, %vm2772
    %vm2777 = vmand %vm2749, %vm2773
    %vm2778 = vmand %vm2750, %vm2774
    %v2779 = vsel %vm2775, 103, %v59
    %v2780 = vsel %vm2776, 103, %v60
    %v2781 = vsel %vm2777, 103, %v61
    %v2782 = vsel %vm2778, 103, %v62
    %2783 = vst [vmem:[#allocation7] sm:$0xff] %v2779
    %2784 = vst [vmem:[#allocation7 + $0x8] sm:$0xff] %v2780
    %2785 = vst [vmem:[#allocation7 + $0x10] sm:$0xff] %v2781
    %2786 = vst [vmem:[#allocation7 + $0x18] sm:$0xff] %v2782
    %vm2787 = vmpackc.low %vm2776, %vm2775
    %vm2788 = vmpackc.low %vm2778, %vm2777
    %vm2789 = vmpackc.even %vm2788, %vm2787
    %v2790 = vsel %vm2789, 16843009, 0
    %2791 = vst [vmem:[#allocation8] sm:$0xff] %v2790
    // Predicated region
    $region26: #{tpu_custom_call.1} parent=1 // pred_check
      _
    $region27: #{tpu_custom_call.1} parent=1 // pred_check_branch
      %2793 = sbr.rel (0) target = $region29
    $region28: #{tpu_custom_call.1} parent=1 // pred_region
      %s2795 = ssub.s32 512, 512
      %2796 = vsyncadd [#allocation4], %s2795
      %s2797 = sshll.u32 [#allocation7], 4
      %s2798 = int_to_ptr.vmem [resolvable:$true] %s2797
      %2803 = dma.vmem_to_hbm [thread:$0]  %s2798, 512, %s4, [#allocation4], 128, 128, 8
    $region29: #{tpu_custom_call.1} parent=1 // pred_fallthru
      _
    // Predicated region
    $region30: #{tpu_custom_call.1} parent=1 // pred_check
      _
    $region31: #{tpu_custom_call.1} parent=1 // pred_check_branch
      %2805 = sbr.rel (0) target = $region33
    $region32: #{tpu_custom_call.1} parent=1 // pred_region
      %s2807 = ssub.s32 128, 128
      %2808 = vsyncadd [#allocation9], %s2807
      %s2810 = sshll.u32 [#allocation8], 4
      %s2811 = int_to_ptr.vmem [resolvable:$true] %s2810
      %2813 = dma.vmem_to_hbm [thread:$0]  %s2811, 128, %s5, [#allocation9]
    $region33: #{tpu_custom_call.1} parent=1 // pred_fallthru
      _
    // Predicated region
    $region34: #{tpu_custom_call.1} parent=1 // pred_check
      _
    $region35: #{tpu_custom_call.1} parent=1 // pred_check_branch
      %2815 = sbr.rel (0) target = $region37
    $region36: #{tpu_custom_call.1} parent=1 // pred_region
      %2816 = dma.done [#allocation4], 512
    $region37: #{tpu_custom_call.1} parent=1 // pred_fallthru
      _
    // Predicated region
    $region38: #{tpu_custom_call.1} parent=1 // pred_check
      _
    $region39: #{tpu_custom_call.1} parent=1 // pred_check_branch
      %2818 = sbr.rel (0) target = $region41
    $region40: #{tpu_custom_call.1} parent=1 // pred_region
      %2819 = dma.done [#allocation9], 128
    $region41: #{tpu_custom_call.1} parent=1 // pred_fallthru
      _
    %2820 = vsyncpa [#allocation3], 1
    %2821 = vsyncpa [#allocation6], 1
    %2822 = vsyncpa [#allocation4], 1
    %2823 = vsyncpa [#allocation9], 1

</llo_original>
